<compile_context>
chip_gen: v6e
topology: v6e:2x2x1
jax: 0.10.0
libtpu: 0.0.40
codegen_flags: <defaults>
</compile_context>

<pallas_src>
import math
import functools

import jax
import jax.numpy as jnp
from jax.experimental import pallas as pl
from jax.experimental.pallas import tpu as pltpu


ACT_DTYPE = jnp.bfloat16           # storage dtype for activations / big weights
_LN_EPS = 1e-6                     # torchvision ViT uses LayerNorm(eps=1e-6)


def _round_up(x, m):
    return -(-x // m) * m


# ----------------------------------------------------------------------------
# One-time hardware / feature probes (cached)
# ----------------------------------------------------------------------------
def _tpu_vmem_capacity_bytes():
    try:
        info = pltpu.get_tpu_info()
        for name in ("vmem_capacity_bytes", "vmem_size_bytes", "vmem_bytes"):
            v = getattr(info, name, None)
            if isinstance(v, (int, float)) and v > 0:
                return int(v)
    except Exception:
        pass
    return 64 * 1024 * 1024        # conservative (v7x-sized) fallback


@functools.lru_cache(maxsize=None)
def _buffered_one_supported():
    """Single-buffering for never-refetched resident weights (VMEM saver on v7x)."""
    if not hasattr(pl, "Buffered"):
        return False

    def _copy(x_ref, o_ref):
        o_ref[...] = x_ref[...]

    try:
        fn = pl.pallas_call(
            _copy,
            out_shape=jax.ShapeDtypeStruct((8, 128), jnp.float32),
            grid=(1,),
            in_specs=[pl.BlockSpec((8, 128), lambda i: (0, 0),
                                   pipeline_mode=pl.Buffered(1))],
            out_specs=pl.BlockSpec((8, 128), lambda i: (0, 0)),
        )
        jax.block_until_ready(fn(jnp.zeros((8, 128), jnp.float32)))
        return True
    except Exception:
        return False


@functools.lru_cache(maxsize=None)
def _erf_gelu_supported():
    """Exact-erf GELU (torch nn.GELU parity); erf lowers to the EUP slot on Mosaic."""
    def _k(x_ref, o_ref):
        o_ref[...] = jax.nn.gelu(x_ref[...], approximate=False)

    try:
        fn = pl.pallas_call(_k, out_shape=jax.ShapeDtypeStruct((8, 128), jnp.float32))
        jax.block_until_ready(fn(jnp.zeros((8, 128), jnp.float32)))
        return True
    except Exception:
        return False


def _resident_spec(block_shape, index_map):
    """BlockSpec for a constant-index (never refetched) resident weight block."""
    if _buffered_one_supported():
        return pl.BlockSpec(block_shape, index_map, pipeline_mode=pl.Buffered(1))
    return pl.BlockSpec(block_shape, index_map)


def _cparams(semantics, vmem_limit):
    return pltpu.CompilerParams(
        dimension_semantics=semantics, vmem_limit_bytes=int(vmem_limit))


def _gelu(x):
    if _erf_gelu_supported():
        return jax.nn.gelu(x, approximate=False)      # exact erf == torch nn.GELU()
    # TODO(synk): erf not lowered by this Mosaic build; tanh approximation fallback.
    c = math.sqrt(2.0 / math.pi)
    return 0.5 * x * (1.0 + jnp.tanh(c * (x + 0.044715 * x * x * x)))


def _layernorm_f32(x, g, b):
    mean = jnp.mean(x, axis=-1, keepdims=True)
    var = jnp.mean((x - mean) ** 2, axis=-1, keepdims=True)
    return (x - mean) * jax.lax.rsqrt(var + _LN_EPS) * g + b


# ----------------------------------------------------------------------------
# Pallas kernels
# ----------------------------------------------------------------------------
def _embed_kernel(p_ref, wt_ref, bias_ref, o_ref):
    # patches (rows shifted by one, row 0 / pad rows are zero) -> tokens
    bt, Sp, K = p_ref.shape
    D = wt_ref.shape[-1]
    x = p_ref[...].reshape(bt * Sp, K)                 # Sp % 8 == 0 -> aligned merge
    y = jnp.dot(x, wt_ref[...], preferred_element_type=jnp.float32)
    y = y.reshape(bt, Sp, D) + bias_ref[...]           # cls+pos / pos+patch_bias / 0
    o_ref[...] = y.astype(o_ref.dtype)


def embed_tokens(patches, patch_wt, tok_bias, *, bt, vmem_limit):
    Bp, Sp, K = patches.shape
    D = patch_wt.shape[-1]
    return pl.pallas_call(
        _embed_kernel,
        out_shape=jax.ShapeDtypeStruct((Bp, Sp, D), ACT_DTYPE),
        grid=(Bp // bt,),
        in_specs=[
            pl.BlockSpec((bt, Sp, K), lambda i: (i, 0, 0)),
            _resident_spec((K, D), lambda i: (0, 0)),
            pl.BlockSpec((Sp, D), lambda i: (0, 0)),
        ],
        out_specs=pl.BlockSpec((bt, Sp, D), lambda i: (i, 0, 0)),
        compiler_params=_cparams(("parallel",), vmem_limit),
    )(patches, patch_wt, tok_bias)


def _attn_block_kernel(x_ref, g1_ref, b1_ref, wqkv_ref, bqkv_ref, wo_ref, bo_ref,
                       o_ref, qkv_vmem, attn_vmem, *, n_heads, s_real, member_in):
    # Fused: LN1 -> qkv projection -> multi-head attention -> out-proj -> +residual.
    if member_in:
        _, bt, Sp, D = x_ref.shape
        xin = x_ref[0]
    else:
        bt, Sp, D = x_ref.shape
        xin = x_ref[...]
    hd = D // n_heads

    # LayerNorm1 + fused qkv projection (single wide MXU matmul).
    xf = xin.reshape(bt * Sp, D).astype(jnp.float32)   # Sp % 8 == 0 -> aligned
    h = _layernorm_f32(xf, g1_ref[...], b1_ref[...])
    qkv = jnp.dot(h.astype(wqkv_ref.dtype), wqkv_ref[0],
                  preferred_element_type=jnp.float32) + bqkv_ref[...]
    qkv_vmem[...] = qkv.reshape(bt, Sp, 3 * D).astype(qkv_vmem.dtype)

    # Key-padding bias for the padded tail of the token axis (hoisted out of loops).
    if Sp > s_real:
        kbias = jnp.where(
            jax.lax.broadcasted_iota(jnp.int32, (1, Sp), 1) < s_real,
            0.0, -1e30).astype(jnp.float32)
    else:
        kbias = None

    # Multi-head attention; per-head results streamed into VMEM scratch (no concat).
    for b in range(bt):
        for hh in range(n_heads):
            lo = hh * hd
            qh = qkv_vmem[b, :, lo:lo + hd]            # 1/sqrt(hd) folded into Wq
            kh = qkv_vmem[b, :, D + lo:D + lo + hd]
            vh = qkv_vmem[b, :, 2 * D + lo:2 * D + lo + hd]
            s = jax.lax.dot_general(qh, kh, (((1,), (1,)), ((), ())),
                                    preferred_element_type=jnp.float32)    # (Sp, Sp)
            if kbias is not None:
                s = s + kbias
            s = s - jnp.max(s, axis=-1, keepdims=True)
            p = jnp.exp(s)
            p = p * pl.reciprocal(jnp.sum(p, axis=-1, keepdims=True), approx=True)
            oh = jnp.dot(p.astype(vh.dtype), vh, preferred_element_type=jnp.float32)
            attn_vmem[b, :, lo:lo + hd] = oh.astype(attn_vmem.dtype)

    # Output projection + residual (pre-LN input re-read from VMEM).
    a = attn_vmem[...].reshape(bt * Sp, D)
    y = jnp.dot(a, wo_ref[0], preferred_element_type=jnp.float32)
    res = (x_ref[0] if member_in else x_ref[...]).reshape(bt * Sp, D)
    y = y + bo_ref[...] + res.astype(jnp.float32)
    o_ref[0] = y.reshape(bt, Sp, D).astype(o_ref.dtype)


def attn_block(x, lp, *, n_heads, s_real, bt, n_members, member_in, vmem_limit):
    if member_in:
        _, Bp, Sp, D = x.shape
        x_spec = pl.BlockSpec((1, bt, Sp, D), lambda m, i: (m, i, 0, 0))
    else:
        Bp, Sp, D = x.shape
        # first layer: member-independent tokens, replication for free via DMA
        x_spec = pl.BlockSpec((bt, Sp, D), lambda m, i: (i, 0, 0))
    D3 = 3 * D
    kernel = functools.partial(_attn_block_kernel, n_heads=n_heads,
                               s_real=s_real, member_in=member_in)
    return pl.pallas_call(
        kernel,
        out_shape=jax.ShapeDtypeStruct((n_members, Bp, Sp, D), ACT_DTYPE),
        grid=(n_members, Bp // bt),
        in_specs=[
            x_spec,
            pl.BlockSpec((1, D), lambda m, i: (0, 0)),
            pl.BlockSpec((1, D), lambda m, i: (0, 0)),
            pl.BlockSpec((1, D, D3), lambda m, i: (m, 0, 0)),   # per-member folded W
            pl.BlockSpec((1, D3), lambda m, i: (0, 0)),
            pl.BlockSpec((1, D, D), lambda m, i: (m, 0, 0)),
            pl.BlockSpec((1, D), lambda m, i: (0, 0)),
        ],
        out_specs=pl.BlockSpec((1, bt, Sp, D), lambda m, i: (m, i, 0, 0)),
        scratch_shapes=[
            pltpu.VMEM((bt, Sp, D3), ACT_DTYPE),   # qkv block (never hits HBM)
            pltpu.VMEM((bt, Sp, D), ACT_DTYPE),    # attention output block
        ],
        compiler_params=_cparams(("parallel", "parallel"), vmem_limit),
    )(x, lp["ln1_g"], lp["ln1_b"], lp["wqkv_t"], lp["bqkv"], lp["wo_t"], lp["bo"])


def _mlp_block_kernel(x_ref, g_ref, b_ref, w1_ref, b1_ref, w2_ref, b2_ref, o_ref):
    _, bt, Sp, D = x_ref.shape
    xf = x_ref[0].reshape(bt * Sp, D).astype(jnp.float32)
    h = _layernorm_f32(xf, g_ref[...], b_ref[...])
    h1 = jnp.dot(h.astype(w1_ref.dtype), w1_ref[...],
                 preferred_element_type=jnp.float32) + b1_ref[...]
    h1 = _gelu(h1)
    y = jnp.dot(h1.astype(w2_ref.dtype), w2_ref[...],
                preferred_element_type=jnp.float32) + b2_ref[...]
    o_ref[0] = (y + xf).reshape(bt, Sp, D).astype(o_ref.dtype)


def mlp_block(x, lp, *, bt, vmem_limit):
    M, Bp, Sp, D = x.shape
    F = lp["w1_t"].shape[-1]
    return pl.pallas_call(
        _mlp_block_kernel,
        out_shape=jax.ShapeDtypeStruct((M, Bp, Sp, D), ACT_DTYPE),
        grid=(M, Bp // bt),
        in_specs=[
            pl.BlockSpec((1, bt, Sp, D), lambda m, i: (m, i, 0, 0)),
            pl.BlockSpec((1, D), lambda m, i: (0, 0)),
            pl.BlockSpec((1, D), lambda m, i: (0, 0)),
            _resident_spec((D, F), lambda m, i: (0, 0)),   # frozen MLP weights resident
            pl.BlockSpec((1, F), lambda m, i: (0, 0)),
            _resident_spec((F, D), lambda m, i: (0, 0)),
            pl.BlockSpec((1, D), lambda m, i: (0, 0)),
        ],
        out_specs=pl.BlockSpec((1, bt, Sp, D), lambda m, i: (m, i, 0, 0)),
        compiler_params=_cparams(("parallel", "parallel"), vmem_limit),
    )(x, lp["ln2_g"], lp["ln2_b"], lp["w1_t"], lp["b1"], lp["w2_t"], lp["b2"])


def _head_kernel(x_ref, g_ref, b_ref, wt_ref, bias_ref, o_ref):
    x = x_ref[0].astype(jnp.float32)                       # (B, D)
    h = _layernorm_f32(x, g_ref[...], b_ref[...])
    y = jnp.dot(h.astype(wt_ref.dtype), wt_ref[0], preferred_element_type=jnp.float32)
    o_ref[0] = (y + bias_ref[0]).astype(o_ref.dtype)


def ensemble_head(cls_tok, g, b, w_t, bias, *, vmem_limit):
    M, B, D = cls_tok.shape
    C = w_t.shape[-1]
    return pl.pallas_call(
        _head_kernel,
        out_shape=jax.ShapeDtypeStruct((M, B, C), jnp.float32),
        grid=(M,),
        in_specs=[
            pl.BlockSpec((1, B, D), lambda m: (m, 0, 0)),
            pl.BlockSpec((1, D), lambda m: (0, 0)),
            pl.BlockSpec((1, D), lambda m: (0, 0)),
            pl.BlockSpec((1, D, C), lambda m: (m, 0, 0)),
            pl.BlockSpec((1, 1, C), lambda m: (m, 0, 0)),
        ],
        out_specs=pl.BlockSpec((1, B, C), lambda m: (m, 0, 0)),
        compiler_params=_cparams(("parallel",), vmem_limit),
    )(cls_tok, g, b, w_t, bias)


# ----------------------------------------------------------------------------
# One-time weight preparation (hoisted out of the forward hot path)
# ----------------------------------------------------------------------------
def _fold_lora(w, a, bmat):
    # y = x @ W^T + b + B(A(x))  ==>  W_eff = W + B @ A ; return W_eff^T (M, Din, Dout)
    w_eff = w[None] + jnp.einsum("mor,mri->moi", bmat, a)
    return jnp.swapaxes(w_eff, 1, 2)


def _prepare_layer(lp, *, n_heads):
    D = lp["wq"].shape[0]
    scale = 1.0 / math.sqrt(D // n_heads)
    wq_t = _fold_lora(lp["wq"], lp["aq"], lp["Bq"]) * scale    # softmax scale folded in
    wk_t = _fold_lora(lp["wk"], lp["ak"], lp["Bk"])
    wv_t = _fold_lora(lp["wv"], lp["av"], lp["Bv"])
    wqkv_t = jnp.concatenate([wq_t, wk_t, wv_t], axis=-1).astype(ACT_DTYPE)  # (M,D,3D)
    bqkv = jnp.concatenate([lp["bq"] * scale, lp["bk"], lp["bv"]], axis=-1)  # (1,3D)
    wo_t = _fold_lora(lp["wo"], lp["ao"], lp["Bo"]).astype(ACT_DTYPE)        # (M,D,D)
    return dict(
        ln1_g=lp["ln1_g"], ln1_b=lp["ln1_b"], ln2_g=lp["ln2_g"], ln2_b=lp["ln2_b"],
        wqkv_t=wqkv_t, bqkv=bqkv, wo_t=wo_t, bo=lp["bo"],
        w1_t=lp["w1"].T.astype(ACT_DTYPE), b1=lp["b1"],
        w2_t=lp["w2"].T.astype(ACT_DTYPE), b2=lp["b2"],
    )


def prepare_lora_ensemble_params(params, *, n_heads):
    """Fold LoRA / scales / layouts once; reuse across every forward call."""
    D = params["patch_w"].shape[0]
    P = params["pos"].shape[1] - 1
    Sp = _round_up(P + 1, 8)       # token axis padded to a multiple of 8 sublanes

    # Combined token bias: row 0 = cls + pos[0]; rows 1..P = pos + patch bias; rest 0.
    tok_bias = jnp.zeros((Sp, D), jnp.float32)
    tok_bias = tok_bias.at[0].set(params["cls"][0, 0] + params["pos"][0, 0])
    tok_bias = tok_bias.at[1:P + 1].set(params["pos"][0, 1:] + params["patch_b"][0])

    return dict(
        patch_wt=params["patch_w"].T.astype(ACT_DTYPE),            # (K, D)
        tok_bias=tok_bias,                                          # (Sp, D)
        ln_g=params["ln_g"], ln_b=params["ln_b"],
        head_wt=jnp.swapaxes(params["head_w"], 1, 2).astype(ACT_DTYPE),  # (M, D, C)
        head_b=params["head_b"],
        layers=[_prepare_layer(lp, n_heads=n_heads) for lp in params["layers"]],
    )


# ----------------------------------------------------------------------------
# Forward pass (LoRAEnsemble.forward with BatchMode.REPEAT)
# ----------------------------------------------------------------------------
def lora_ensemble_forward(x, prep, *, n_members, patch_size, n_heads):
    M = n_members
    B, C, H, W = x.shape
    ps = patch_size
    Hp, Wp = H // ps, W // ps
    P = Hp * Wp
    s_real = P + 1
    Sp = prep["tok_bias"].shape[0]
    K, D = prep["patch_wt"].shape
    assert Sp == _round_up(s_real, 8) and K == C * ps * ps and D % n_heads == 0

    # Generation-dependent tiling / VMEM budget.
    vmem_cap = _tpu_vmem_capacity_bytes()
    vmem_limit = min(100 * 1024 * 1024, (vmem_cap * 3) // 4)
    rows_target = 512 if vmem_cap >= 96 * 1024 * 1024 else 256
    bt = max(1, min(B, rows_target // Sp, 8))
    B_pad = _round_up(B, bt)
    if B_pad != B:
        x = jnp.pad(x, ((0, B_pad - B), (0, 0), (0, 0), (0, 0)))

    # Patch extraction (Conv2d with kernel=stride=patch == unfold + matmul).
    # Rows shifted by one so row 0 (cls slot) and padded tail rows stay zero.
    patches = (
        x.reshape(B_pad, C, Hp, ps, Wp, ps)
        .transpose(0, 2, 4, 1, 3, 5)
        .reshape(B_pad, P, K)
        .astype(ACT_DTYPE)
    )
    patches = jnp.pad(patches, ((0, 0), (1, Sp - 1 - P), (0, 0)))

    # Member-independent: patch embed + cls + pos, computed once per sample.
    tok = embed_tokens(patches, prep["patch_wt"], prep["tok_bias"],
                       bt=bt, vmem_limit=vmem_limit)          # (B_pad, Sp, D)

    xm = None
    for lp in prep["layers"]:
        if xm is None:
            # first layer reads member-independent tokens (no materialized broadcast)
            xm = attn_block(tok, lp, n_heads=n_heads, s_real=s_real, bt=bt,
                            n_members=M, member_in=False, vmem_limit=vmem_limit)
        else:
            xm = attn_block(xm, lp, n_heads=n_heads, s_real=s_real, bt=bt,
                            n_members=M, member_in=True, vmem_limit=vmem_limit)
        xm = mlp_block(xm, lp, bt=bt, vmem_limit=vmem_limit)

    # Final LayerNorm is row-wise, so applying it only to the CLS rows is exact.
    cls_tok = xm[:, :B, 0, :]                                     # (M, B, D)
    out = ensemble_head(cls_tok, prep["ln_g"], prep["ln_b"],
                        prep["head_wt"], prep["head_b"], vmem_limit=vmem_limit)
    return out                                                    # (M, B, n_classes)


# ----------------------------------------------------------------------------
# Deterministic parameter initialization (synthetic "checkpoint")
# ----------------------------------------------------------------------------
def init_params(key, *, n_members, n_layers, c_in, ps, d, mlp_dim, rank,
                n_classes, n_patches):
    keys = iter(jax.random.split(key, 512))

    def nrm(shape, std=0.02):
        return jax.random.normal(next(keys), shape, jnp.float32) * std

    params = dict(
        patch_w=nrm((d, c_in * ps * ps)),
        patch_b=jnp.zeros((1, d), jnp.float32),
        cls=nrm((1, 1, d)),
        pos=nrm((1, n_patches + 1, d)),
        ln_g=jnp.ones((1, d), jnp.float32),
        ln_b=jnp.zeros((1, d), jnp.float32),
        head_w=nrm((n_members, n_classes, d)),
        head_b=jnp.zeros((n_members, 1, n_classes), jnp.float32),
        layers=[],
    )
    for _ in range(n_layers):
        lp = dict(
            ln1_g=jnp.ones((1, d), jnp.float32), ln1_b=jnp.zeros((1, d), jnp.float32),
            ln2_g=jnp.ones((1, d), jnp.float32), ln2_b=jnp.zeros((1, d), jnp.float32),
            wq=nrm((d, d)), bq=jnp.zeros((1, d), jnp.float32),
            wk=nrm((d, d)), bk=jnp.zeros((1, d), jnp.float32),
            wv=nrm((d, d)), bv=jnp.zeros((1, d), jnp.float32),
            wo=nrm((d, d)), bo=jnp.zeros((1, d), jnp.float32),
            # per-member LoRA factors (non-zero B so the LoRA path is exercised)
            aq=nrm((n_members, rank, d)), Bq=nrm((n_members, d, rank)),
            ak=nrm((n_members, rank, d)), Bk=nrm((n_members, d, rank)),
            av=nrm((n_members, rank, d)), Bv=nrm((n_members, d, rank)),
            ao=nrm((n_members, rank, d)), Bo=nrm((n_members, d, rank)),
            w1=nrm((mlp_dim, d)), b1=jnp.zeros((1, mlp_dim), jnp.float32),
            w2=nrm((d, mlp_dim)), b2=jnp.zeros((1, d), jnp.float32),
        )
        params["layers"].append(lp)
    return params


# ----------------------------------------------------------------------------
if __name__ == "__main__":
    B, C_IN, H, W = 2, 3, 16, 16
    PS, D, N_HEADS, MLP = 8, 32, 4, 64
    N_LAYERS, RANK, N_MEMBERS, N_CLASSES = 2, 4, 2, 10
    N_PATCHES = (H // PS) * (W // PS)

    # Run the feature probes once, eagerly (results are cached for the traced forward).
    _buffered_one_supported()
    _erf_gelu_supported()

    key = jax.random.PRNGKey(0)
    pkey, xkey = jax.random.split(key)
    params = init_params(
        pkey, n_members=N_MEMBERS, n_layers=N_LAYERS, c_in=C_IN, ps=PS, d=D,
        mlp_dim=MLP, rank=RANK, n_classes=N_CLASSES, n_patches=N_PATCHES,
    )
    # One-time weight prep (LoRA folding etc.) -- hoisted out of the forward hot path.
    prep = prepare_lora_ensemble_params(params, n_heads=N_HEADS)

    x = jax.random.normal(xkey, (B, C_IN, H, W), jnp.float32)

    fwd = jax.jit(
        functools.partial(
            lora_ensemble_forward,
            n_members=N_MEMBERS,
            patch_size=PS,
            n_heads=N_HEADS,
        )
    )
    out = jax.block_until_ready(fwd(x, prep))
    assert out.shape == (N_MEMBERS, B, N_CLASSES), out.shape
    assert bool(jnp.all(jnp.isfinite(out)))
    print("KERNEL_OK")
</pallas_src>

<mosaic_0001>
module attributes {stable_mosaic.version = 11 : i64} {
  func.func @_copy(%arg0: i32, %arg1: memref<8x128xf32, #tpu.memory_space<vmem>>, %arg2: memref<8x128xf32, #tpu.memory_space<vmem>>) attributes {dimension_semantics = [#tpu.dimension_semantics<arbitrary>], iteration_bounds = array<i64: 1>, scalar_prefetch = 0 : i64, scratch_operands = 0 : i64, tpu.core_type = #tpu.core_type<tc>, window_params = [{pipeline_mode = #tpu.pipeline_mode<synchronous>, transform_indices = @transform_0, window_bounds = array<i64: 8, 128>}, {pipeline_mode = #tpu.pipeline_mode<synchronous>, transform_indices = @transform_1, window_bounds = array<i64: 8, 128>}]} {
    %c0 = arith.constant 0 : index
    %c0_0 = arith.constant 0 : index
    %0 = vector.load %arg1[%c0, %c0_0] : memref<8x128xf32, #tpu.memory_space<vmem>>, vector<8x128xf32>
    %c0_1 = arith.constant 0 : index
    %c0_2 = arith.constant 0 : index
    %1 = vector.load %arg2[%c0_1, %c0_2] : memref<8x128xf32, #tpu.memory_space<vmem>>, vector<8x128xf32>
    tpu.vector_store %arg2[%c0_1, %c0_2], %0 {strides = array<i32>} : memref<8x128xf32, #tpu.memory_space<vmem>>, vector<8x128xf32>,
    return
  }
  func.func @transform_0(%arg0: i32) -> (i32, i32) {
    %c0_i32 = arith.constant 0 : i32
    %c0_i32_0 = arith.constant 0 : i32
    %c0_i32_1 = arith.constant 0 : i32
    return %c0_i32, %c0_i32_0 : i32, i32
  }
  func.func @transform_1(%arg0: i32) -> (i32, i32) {
    %c0_i32 = arith.constant 0 : i32
    %c0_i32_0 = arith.constant 0 : i32
    %c0_i32_1 = arith.constant 0 : i32
    return %c0_i32, %c0_i32_0 : i32, i32
  }
}

module attributes {stable_mosaic.version = 11 : i64} {
  func.func @_embed_kernel(%arg0: i32, %arg1: memref<2x8x192xbf16, #tpu.memory_space<vmem>>, %arg2: memref<192x32xbf16, #tpu.memory_space<vmem>>, %arg3: memref<8x32xf32, #tpu.memory_space<vmem>>, %arg4: memref<2x8x32xbf16, #tpu.memory_space<vmem>>) attributes {dimension_semantics = [#tpu.dimension_semantics<parallel>], iteration_bounds = array<i64: 1>, scalar_prefetch = 0 : i64, scratch_operands = 0 : i64, tpu.core_type = #tpu.core_type<tc>, window_params = [{transform_indices = @transform_0, window_bounds = array<i64: 2, 8, 192>}, {pipeline_mode = #tpu.pipeline_mode<synchronous>, transform_indices = @transform_1, window_bounds = array<i64: 192, 32>}, {pipeline_mode = #tpu.pipeline_mode<synchronous>, transform_indices = @transform_2, window_bounds = array<i64: 8, 32>}, {transform_indices = @transform_3, window_bounds = array<i64: 2, 8, 32>}]} {
    %c0 = arith.constant 0 : index
    %c0_0 = arith.constant 0 : index
    %c0_1 = arith.constant 0 : index
    %0 = vector.load %arg1[%c0, %c0_0, %c0_1] : memref<2x8x192xbf16, #tpu.memory_space<vmem>>, vector<2x8x192xbf16>
    %1 = vector.shape_cast %0 : vector<2x8x192xbf16> to vector<16x192xbf16>
    %c0_2 = arith.constant 0 : index
    %c0_3 = arith.constant 0 : index
    %2 = vector.load %arg2[%c0_2, %c0_3] : memref<192x32xbf16, #tpu.memory_space<vmem>>, vector<192x32xbf16>
    %cst = arith.constant dense<0.000000e+00> : vector<16x32xf32>
    %3 = tpu.matmul %1, %2, %cst {dimension_numbers = #tpu.dot_dimension_numbers<[1], [0], [0], [1], [0, 0, 1, 1], [], []>} : vector<16x192xbf16>, vector<192x32xbf16>, vector<16x32xf32> -> vector<16x32xf32>
    %4 = vector.shape_cast %3 : vector<16x32xf32> to vector<2x8x32xf32>
    %c0_4 = arith.constant 0 : index
    %c0_5 = arith.constant 0 : index
    %5 = vector.load %arg3[%c0_4, %c0_5] : memref<8x32xf32, #tpu.memory_space<vmem>>, vector<8x32xf32>
    %6 = vector.shape_cast %5 : vector<8x32xf32> to vector<1x8x32xf32>
    %7 = vector.broadcast %6 : vector<1x8x32xf32> to vector<2x8x32xf32>
    %8 = arith.addf %4, %7 : vector<2x8x32xf32>
    %9 = arith.truncf %8 : vector<2x8x32xf32> to vector<2x8x32xbf16>
    %c0_6 = arith.constant 0 : index
    %c0_7 = arith.constant 0 : index
    %c0_8 = arith.constant 0 : index
    %10 = vector.load %arg4[%c0_6, %c0_7, %c0_8] : memref<2x8x32xbf16, #tpu.memory_space<vmem>>, vector<2x8x32xbf16>
    tpu.vector_store %arg4[%c0_6, %c0_7, %c0_8], %9 {strides = array<i32>} : memref<2x8x32xbf16, #tpu.memory_space<vmem>>, vector<2x8x32xbf16>,
    return
  }
  func.func @transform_0(%arg0: i32) -> (i32, i32, i32) {
    %c0_i32 = arith.constant 0 : i32
    %c0_i32_0 = arith.constant 0 : i32
    %c0_i32_1 = arith.constant 0 : i32
    return %arg0, %c0_i32, %c0_i32_0 : i32, i32, i32
  }
  func.func @transform_1(%arg0: i32) -> (i32, i32) {
    %c0_i32 = arith.constant 0 : i32
    %c0_i32_0 = arith.constant 0 : i32
    %c0_i32_1 = arith.constant 0 : i32
    return %c0_i32, %c0_i32_0 : i32, i32
  }
  func.func @transform_2(%arg0: i32) -> (i32, i32) {
    %c0_i32 = arith.constant 0 : i32
    %c0_i32_0 = arith.constant 0 : i32
    %c0_i32_1 = arith.constant 0 : i32
    return %c0_i32, %c0_i32_0 : i32, i32
  }
  func.func @transform_3(%arg0: i32) -> (i32, i32, i32) {
    %c0_i32 = arith.constant 0 : i32
    %c0_i32_0 = arith.constant 0 : i32
    %c0_i32_1 = arith.constant 0 : i32
    return %arg0, %c0_i32, %c0_i32_0 : i32, i32, i32
  }
}

module attributes {stable_mosaic.version = 11 : i64} {
  func.func @_attn_block_kernel(%arg0: i32, %arg1: i32, %arg2: memref<2x8x32xbf16, #tpu.memory_space<vmem>>, %arg3: memref<1x32xf32, #tpu.memory_space<vmem>>, %arg4: memref<1x32xf32, #tpu.memory_space<vmem>>, %arg5: memref<1x32x96xbf16, #tpu.memory_space<vmem>>, %arg6: memref<1x96xf32, #tpu.memory_space<vmem>>, %arg7: memref<1x32x32xbf16, #tpu.memory_space<vmem>>, %arg8: memref<1x32xf32, #tpu.memory_space<vmem>>, %arg9: memref<1x2x8x32xbf16, #tpu.memory_space<vmem>>, %arg10: memref<2x8x96xbf16, #tpu.memory_space<vmem>>, %arg11: memref<2x8x32xbf16, #tpu.memory_space<vmem>>) attributes {dimension_semantics = [#tpu.dimension_semantics<parallel>, #tpu.dimension_semantics<parallel>], iteration_bounds = array<i64: 2, 1>, scalar_prefetch = 0 : i64, scratch_operands = 2 : i64, tpu.core_type = #tpu.core_type<tc>, window_params = [{transform_indices = @transform_0, window_bounds = array<i64: 2, 8, 32>}, {pipeline_mode = #tpu.pipeline_mode<synchronous>, transform_indices = @transform_1, window_bounds = array<i64: 1, 32>}, {pipeline_mode = #tpu.pipeline_mode<synchronous>, transform_indices = @transform_2, window_bounds = array<i64: 1, 32>}, {transform_indices = @transform_3, window_bounds = array<i64: 1, 32, 96>}, {pipeline_mode = #tpu.pipeline_mode<synchronous>, transform_indices = @transform_4, window_bounds = array<i64: 1, 96>}, {transform_indices = @transform_5, window_bounds = array<i64: 1, 32, 32>}, {pipeline_mode = #tpu.pipeline_mode<synchronous>, transform_indices = @transform_6, window_bounds = array<i64: 1, 32>}, {transform_indices = @transform_7, window_bounds = array<i64: 1, 2, 8, 32>}]} {
    %c0 = arith.constant 0 : index
    %c0_0 = arith.constant 0 : index
    %c0_1 = arith.constant 0 : index
    %0 = vector.load %arg2[%c0, %c0_0, %c0_1] : memref<2x8x32xbf16, #tpu.memory_space<vmem>>, vector<2x8x32xbf16>
    %1 = vector.shape_cast %0 : vector<2x8x32xbf16> to vector<16x32xbf16>
    %2 = arith.extf %1 : vector<16x32xbf16> to vector<16x32xf32>
    %c0_2 = arith.constant 0 : index
    %c0_3 = arith.constant 0 : index
    %3 = vector.load %arg3[%c0_2, %c0_3] : memref<1x32xf32, #tpu.memory_space<vmem>>, vector<1x32xf32>
    %c0_4 = arith.constant 0 : index
    %c0_5 = arith.constant 0 : index
    %4 = vector.load %arg4[%c0_4, %c0_5] : memref<1x32xf32, #tpu.memory_space<vmem>>, vector<1x32xf32>
    %cst = arith.constant dense<0.000000e+00> : vector<16xf32>
    %5 = vector.multi_reduction <add>, %2, %cst [1] : vector<16x32xf32> to vector<16xf32>
    %6 = vector.shape_cast %5 : vector<16xf32> to vector<16x1xf32>
    %cst_6 = arith.constant 3.200000e+01 : f32
    %7 = vector.broadcast %cst_6 : f32 to vector<16x1xf32>
    %8 = arith.divf %6, %7 : vector<16x1xf32>
    %9 = vector.broadcast %8 : vector<16x1xf32> to vector<16x32xf32>
    %10 = arith.subf %2, %9 : vector<16x32xf32>
    %11 = arith.mulf %10, %10 : vector<16x32xf32>
    %cst_7 = arith.constant dense<0.000000e+00> : vector<16xf32>
    %12 = vector.multi_reduction <add>, %11, %cst_7 [1] : vector<16x32xf32> to vector<16xf32>
    %13 = vector.shape_cast %12 : vector<16xf32> to vector<16x1xf32>
    %cst_8 = arith.constant 3.200000e+01 : f32
    %14 = vector.broadcast %cst_8 : f32 to vector<16x1xf32>
    %15 = arith.divf %13, %14 : vector<16x1xf32>
    %16 = vector.broadcast %8 : vector<16x1xf32> to vector<16x32xf32>
    %17 = arith.subf %2, %16 : vector<16x32xf32>
    %cst_9 = arith.constant 9.99999997E-7 : f32
    %18 = vector.broadcast %cst_9 : f32 to vector<16x1xf32>
    %19 = arith.addf %15, %18 : vector<16x1xf32>
    %20 = math.rsqrt %19 : vector<16x1xf32>
    %21 = vector.broadcast %20 : vector<16x1xf32> to vector<16x32xf32>
    %22 = arith.mulf %17, %21 : vector<16x32xf32>
    %23 = vector.broadcast %3 : vector<1x32xf32> to vector<16x32xf32>
    %24 = arith.mulf %22, %23 : vector<16x32xf32>
    %25 = vector.broadcast %4 : vector<1x32xf32> to vector<16x32xf32>
    %26 = arith.addf %24, %25 : vector<16x32xf32>
    %27 = arith.truncf %26 : vector<16x32xf32> to vector<16x32xbf16>
    %c0_10 = arith.constant 0 : index
    %c0_11 = arith.constant 0 : index
    %c0_12 = arith.constant 0 : index
    %28 = vector.load %arg5[%c0_10, %c0_11, %c0_12] : memref<1x32x96xbf16, #tpu.memory_space<vmem>>, vector<1x32x96xbf16>
    %29 = vector.shape_cast %28 : vector<1x32x96xbf16> to vector<32x96xbf16>
    %cst_13 = arith.constant dense<0.000000e+00> : vector<16x96xf32>
    %30 = tpu.matmul %27, %29, %cst_13 {dimension_numbers = #tpu.dot_dimension_numbers<[1], [0], [0], [1], [0, 0, 1, 1], [], []>} : vector<16x32xbf16>, vector<32x96xbf16>, vector<16x96xf32> -> vector<16x96xf32>
    %c0_14 = arith.constant 0 : index
    %c0_15 = arith.constant 0 : index
    %31 = vector.load %arg6[%c0_14, %c0_15] : memref<1x96xf32, #tpu.memory_space<vmem>>, vector<1x96xf32>
    %32 = vector.broadcast %31 : vector<1x96xf32> to vector<16x96xf32>
    %33 = arith.addf %30, %32 : vector<16x96xf32>
    %34 = vector.shape_cast %33 : vector<16x96xf32> to vector<2x8x96xf32>
    %35 = arith.truncf %34 : vector<2x8x96xf32> to vector<2x8x96xbf16>
    %c0_16 = arith.constant 0 : index
    %c0_17 = arith.constant 0 : index
    %c0_18 = arith.constant 0 : index
    %36 = vector.load %arg10[%c0_16, %c0_17, %c0_18] : memref<2x8x96xbf16, #tpu.memory_space<vmem>>, vector<2x8x96xbf16>
    tpu.vector_store %arg10[%c0_16, %c0_17, %c0_18], %35 {strides = array<i32>} : memref<2x8x96xbf16, #tpu.memory_space<vmem>>, vector<2x8x96xbf16>,
    %37 = tpu.iota {dimensions = array<i32: 1>} : vector<1x8xi32>
    %c5_i32 = arith.constant 5 : i32
    %38 = vector.broadcast %c5_i32 : i32 to vector<1x8xi32>
    %39 = arith.cmpi slt, %37, %38 : vector<1x8xi32>
    %cst_19 = arith.constant 0.000000e+00 : f32
    %cst_20 = arith.constant -1.000000e+30 : f32
    %40 = vector.broadcast %cst_19 : f32 to vector<1x8xf32>
    %41 = vector.broadcast %cst_20 : f32 to vector<1x8xf32>
    %42 = arith.select %39, %40, %41 : vector<1x8xi1>, vector<1x8xf32>
    %c0_21 = arith.constant 0 : index
    %c0_22 = arith.constant 0 : index
    %c0_23 = arith.constant 0 : index
    %43 = vector.load %arg10[%c0_21, %c0_22, %c0_23] : memref<2x8x96xbf16, #tpu.memory_space<vmem>>, vector<1x8x8xbf16>
    %44 = vector.shape_cast %43 : vector<1x8x8xbf16> to vector<8x8xbf16>
    %c0_24 = arith.constant 0 : index
    %c0_25 = arith.constant 0 : index
    %c32 = arith.constant 32 : index
    %45 = vector.load %arg10[%c0_24, %c0_25, %c32] : memref<2x8x96xbf16, #tpu.memory_space<vmem>>, vector<1x8x8xbf16>
    %46 = vector.shape_cast %45 : vector<1x8x8xbf16> to vector<8x8xbf16>
    %c0_26 = arith.constant 0 : index
    %c0_27 = arith.constant 0 : index
    %c64 = arith.constant 64 : index
    %47 = vector.load %arg10[%c0_26, %c0_27, %c64] : memref<2x8x96xbf16, #tpu.memory_space<vmem>>, vector<1x8x8xbf16>
    %48 = vector.shape_cast %47 : vector<1x8x8xbf16> to vector<8x8xbf16>
    %cst_28 = arith.constant dense<0.000000e+00> : vector<8x8xf32>
    %49 = tpu.matmul %44, %46, %cst_28 {dimension_numbers = #tpu.dot_dimension_numbers<[1], [1], [0], [0], [0, 0, 1, 0], [], []>} : vector<8x8xbf16>, vector<8x8xbf16>, vector<8x8xf32> -> vector<8x8xf32>
    %50 = vector.broadcast %42 : vector<1x8xf32> to vector<8x8xf32>
    %51 = arith.addf %49, %50 : vector<8x8xf32>
    %cst_29 = arith.constant dense<0xFF800000> : vector<8xf32>
    %52 = vector.multi_reduction <maximumf>, %51, %cst_29 [1] : vector<8x8xf32> to vector<8xf32>
    %53 = vector.shape_cast %52 : vector<8xf32> to vector<8x1xf32>
    %54 = vector.broadcast %53 : vector<8x1xf32> to vector<8x8xf32>
    %55 = arith.subf %51, %54 : vector<8x8xf32>
    %56 = math.exp %55 : vector<8x8xf32>
    %cst_30 = arith.constant dense<0.000000e+00> : vector<8xf32>
    %57 = vector.multi_reduction <add>, %56, %cst_30 [1] : vector<8x8xf32> to vector<8xf32>
    %58 = vector.shape_cast %57 : vector<8xf32> to vector<8x1xf32>
    %59 = tpu.reciprocal %58 {approx = true} : vector<8x1xf32> -> vector<8x1xf32>
    %60 = vector.broadcast %59 : vector<8x1xf32> to vector<8x8xf32>
    %61 = arith.mulf %56, %60 : vector<8x8xf32>
    %62 = arith.truncf %61 : vector<8x8xf32> to vector<8x8xbf16>
    %cst_31 = arith.constant dense<0.000000e+00> : vector<8x8xf32>
    %63 = tpu.matmul %62, %48, %cst_31 {dimension_numbers = #tpu.dot_dimension_numbers<[1], [0], [0], [1], [0, 0, 1, 1], [], []>} : vector<8x8xbf16>, vector<8x8xbf16>, vector<8x8xf32> -> vector<8x8xf32>
    %64 = arith.truncf %63 : vector<8x8xf32> to vector<8x8xbf16>
    %c0_32 = arith.constant 0 : index
    %c0_33 = arith.constant 0 : index
    %c0_34 = arith.constant 0 : index
    %65 = vector.load %arg11[%c0_32, %c0_33, %c0_34] : memref<2x8x32xbf16, #tpu.memory_space<vmem>>, vector<1x8x8xbf16>
    %66 = vector.shape_cast %65 : vector<1x8x8xbf16> to vector<8x8xbf16>
    %67 = vector.shape_cast %64 : vector<8x8xbf16> to vector<1x8x8xbf16>
    tpu.vector_store %arg11[%c0_32, %c0_33, %c0_34], %67 {strides = array<i32>} : memref<2x8x32xbf16, #tpu.memory_space<vmem>>, vector<1x8x8xbf16>,
    %c0_35 = arith.constant 0 : index
    %c0_36 = arith.constant 0 : index
    %c8 = arith.constant 8 : index
    %68 = vector.load %arg10[%c0_35, %c0_36, %c8] : memref<2x8x96xbf16, #tpu.memory_space<vmem>>, vector<1x8x8xbf16>
    %69 = vector.shape_cast %68 : vector<1x8x8xbf16> to vector<8x8xbf16>
    %c0_37 = arith.constant 0 : index
    %c0_38 = arith.constant 0 : index
    %c40 = arith.constant 40 : index
    %70 = vector.load %arg10[%c0_37, %c0_38, %c40] : memref<2x8x96xbf16, #tpu.memory_space<vmem>>, vector<1x8x8xbf16>
    %71 = vector.shape_cast %70 : vector<1x8x8xbf16> to vector<8x8xbf16>
    %c0_39 = arith.constant 0 : index
    %c0_40 = arith.constant 0 : index
    %c72 = arith.constant 72 : index
    %72 = vector.load %arg10[%c0_39, %c0_40, %c72] : memref<2x8x96xbf16, #tpu.memory_space<vmem>>, vector<1x8x8xbf16>
    %73 = vector.shape_cast %72 : vector<1x8x8xbf16> to vector<8x8xbf16>
    %cst_41 = arith.constant dense<0.000000e+00> : vector<8x8xf32>
    %74 = tpu.matmul %69, %71, %cst_41 {dimension_numbers = #tpu.dot_dimension_numbers<[1], [1], [0], [0], [0, 0, 1, 0], [], []>} : vector<8x8xbf16>, vector<8x8xbf16>, vector<8x8xf32> -> vector<8x8xf32>
    %75 = vector.broadcast %42 : vector<1x8xf32> to vector<8x8xf32>
    %76 = arith.addf %74, %75 : vector<8x8xf32>
    %cst_42 = arith.constant dense<0xFF800000> : vector<8xf32>
    %77 = vector.multi_reduction <maximumf>, %76, %cst_42 [1] : vector<8x8xf32> to vector<8xf32>
    %78 = vector.shape_cast %77 : vector<8xf32> to vector<8x1xf32>
    %79 = vector.broadcast %78 : vector<8x1xf32> to vector<8x8xf32>
    %80 = arith.subf %76, %79 : vector<8x8xf32>
    %81 = math.exp %80 : vector<8x8xf32>
    %cst_43 = arith.constant dense<0.000000e+00> : vector<8xf32>
    %82 = vector.multi_reduction <add>, %81, %cst_43 [1] : vector<8x8xf32> to vector<8xf32>
    %83 = vector.shape_cast %82 : vector<8xf32> to vector<8x1xf32>
    %84 = tpu.reciprocal %83 {approx = true} : vector<8x1xf32> -> vector<8x1xf32>
    %85 = vector.broadcast %84 : vector<8x1xf32> to vector<8x8xf32>
    %86 = arith.mulf %81, %85 : vector<8x8xf32>
    %87 = arith.truncf %86 : vector<8x8xf32> to vector<8x8xbf16>
    %cst_44 = arith.constant dense<0.000000e+00> : vector<8x8xf32>
    %88 = tpu.matmul %87, %73, %cst_44 {dimension_numbers = #tpu.dot_dimension_numbers<[1], [0], [0], [1], [0, 0, 1, 1], [], []>} : vector<8x8xbf16>, vector<8x8xbf16>, vector<8x8xf32> -> vector<8x8xf32>
    %89 = arith.truncf %88 : vector<8x8xf32> to vector<8x8xbf16>
    %c0_45 = arith.constant 0 : index
    %c0_46 = arith.constant 0 : index
    %c8_47 = arith.constant 8 : index
    %90 = vector.load %arg11[%c0_45, %c0_46, %c8_47] : memref<2x8x32xbf16, #tpu.memory_space<vmem>>, vector<1x8x8xbf16>
    %91 = vector.shape_cast %90 : vector<1x8x8xbf16> to vector<8x8xbf16>
    %92 = vector.shape_cast %89 : vector<8x8xbf16> to vector<1x8x8xbf16>
    tpu.vector_store %arg11[%c0_45, %c0_46, %c8_47], %92 {strides = array<i32>} : memref<2x8x32xbf16, #tpu.memory_space<vmem>>, vector<1x8x8xbf16>,
    %c0_48 = arith.constant 0 : index
    %c0_49 = arith.constant 0 : index
    %c16 = arith.constant 16 : index
    %93 = vector.load %arg10[%c0_48, %c0_49, %c16] : memref<2x8x96xbf16, #tpu.memory_space<vmem>>, vector<1x8x8xbf16>
    %94 = vector.shape_cast %93 : vector<1x8x8xbf16> to vector<8x8xbf16>
    %c0_50 = arith.constant 0 : index
    %c0_51 = arith.constant 0 : index
    %c48 = arith.constant 48 : index
    %95 = vector.load %arg10[%c0_50, %c0_51, %c48] : memref<2x8x96xbf16, #tpu.memory_space<vmem>>, vector<1x8x8xbf16>
    %96 = vector.shape_cast %95 : vector<1x8x8xbf16> to vector<8x8xbf16>
    %c0_52 = arith.constant 0 : index
    %c0_53 = arith.constant 0 : index
    %c80 = arith.constant 80 : index
    %97 = vector.load %arg10[%c0_52, %c0_53, %c80] : memref<2x8x96xbf16, #tpu.memory_space<vmem>>, vector<1x8x8xbf16>
    %98 = vector.shape_cast %97 : vector<1x8x8xbf16> to vector<8x8xbf16>
    %cst_54 = arith.constant dense<0.000000e+00> : vector<8x8xf32>
    %99 = tpu.matmul %94, %96, %cst_54 {dimension_numbers = #tpu.dot_dimension_numbers<[1], [1], [0], [0], [0, 0, 1, 0], [], []>} : vector<8x8xbf16>, vector<8x8xbf16>, vector<8x8xf32> -> vector<8x8xf32>
    %100 = vector.broadcast %42 : vector<1x8xf32> to vector<8x8xf32>
    %101 = arith.addf %99, %100 : vector<8x8xf32>
    %cst_55 = arith.constant dense<0xFF800000> : vector<8xf32>
    %102 = vector.multi_reduction <maximumf>, %101, %cst_55 [1] : vector<8x8xf32> to vector<8xf32>
    %103 = vector.shape_cast %102 : vector<8xf32> to vector<8x1xf32>
    %104 = vector.broadcast %103 : vector<8x1xf32> to vector<8x8xf32>
    %105 = arith.subf %101, %104 : vector<8x8xf32>
    %106 = math.exp %105 : vector<8x8xf32>
    %cst_56 = arith.constant dense<0.000000e+00> : vector<8xf32>
    %107 = vector.multi_reduction <add>, %106, %cst_56 [1] : vector<8x8xf32> to vector<8xf32>
    %108 = vector.shape_cast %107 : vector<8xf32> to vector<8x1xf32>
    %109 = tpu.reciprocal %108 {approx = true} : vector<8x1xf32> -> vector<8x1xf32>
    %110 = vector.broadcast %109 : vector<8x1xf32> to vector<8x8xf32>
    %111 = arith.mulf %106, %110 : vector<8x8xf32>
    %112 = arith.truncf %111 : vector<8x8xf32> to vector<8x8xbf16>
    %cst_57 = arith.constant dense<0.000000e+00> : vector<8x8xf32>
    %113 = tpu.matmul %112, %98, %cst_57 {dimension_numbers = #tpu.dot_dimension_numbers<[1], [0], [0], [1], [0, 0, 1, 1], [], []>} : vector<8x8xbf16>, vector<8x8xbf16>, vector<8x8xf32> -> vector<8x8xf32>
    %114 = arith.truncf %113 : vector<8x8xf32> to vector<8x8xbf16>
    %c0_58 = arith.constant 0 : index
    %c0_59 = arith.constant 0 : index
    %c16_60 = arith.constant 16 : index
    %115 = vector.load %arg11[%c0_58, %c0_59, %c16_60] : memref<2x8x32xbf16, #tpu.memory_space<vmem>>, vector<1x8x8xbf16>
    %116 = vector.shape_cast %115 : vector<1x8x8xbf16> to vector<8x8xbf16>
    %117 = vector.shape_cast %114 : vector<8x8xbf16> to vector<1x8x8xbf16>
    tpu.vector_store %arg11[%c0_58, %c0_59, %c16_60], %117 {strides = array<i32>} : memref<2x8x32xbf16, #tpu.memory_space<vmem>>, vector<1x8x8xbf16>,
    %c0_61 = arith.constant 0 : index
    %c0_62 = arith.constant 0 : index
    %c24 = arith.constant 24 : index
    %118 = vector.load %arg10[%c0_61, %c0_62, %c24] : memref<2x8x96xbf16, #tpu.memory_space<vmem>>, vector<1x8x8xbf16>
    %119 = vector.shape_cast %118 : vector<1x8x8xbf16> to vector<8x8xbf16>
    %c0_63 = arith.constant 0 : index
    %c0_64 = arith.constant 0 : index
    %c56 = arith.constant 56 : index
    %120 = vector.load %arg10[%c0_63, %c0_64, %c56] : memref<2x8x96xbf16, #tpu.memory_space<vmem>>, vector<1x8x8xbf16>
    %121 = vector.shape_cast %120 : vector<1x8x8xbf16> to vector<8x8xbf16>
    %c0_65 = arith.constant 0 : index
    %c0_66 = arith.constant 0 : index
    %c88 = arith.constant 88 : index
    %122 = vector.load %arg10[%c0_65, %c0_66, %c88] : memref<2x8x96xbf16, #tpu.memory_space<vmem>>, vector<1x8x8xbf16>
    %123 = vector.shape_cast %122 : vector<1x8x8xbf16> to vector<8x8xbf16>
    %cst_67 = arith.constant dense<0.000000e+00> : vector<8x8xf32>
    %124 = tpu.matmul %119, %121, %cst_67 {dimension_numbers = #tpu.dot_dimension_numbers<[1], [1], [0], [0], [0, 0, 1, 0], [], []>} : vector<8x8xbf16>, vector<8x8xbf16>, vector<8x8xf32> -> vector<8x8xf32>
    %125 = vector.broadcast %42 : vector<1x8xf32> to vector<8x8xf32>
    %126 = arith.addf %124, %125 : vector<8x8xf32>
    %cst_68 = arith.constant dense<0xFF800000> : vector<8xf32>
    %127 = vector.multi_reduction <maximumf>, %126, %cst_68 [1] : vector<8x8xf32> to vector<8xf32>
    %128 = vector.shape_cast %127 : vector<8xf32> to vector<8x1xf32>
    %129 = vector.broadcast %128 : vector<8x1xf32> to vector<8x8xf32>
    %130 = arith.subf %126, %129 : vector<8x8xf32>
    %131 = math.exp %130 : vector<8x8xf32>
    %cst_69 = arith.constant dense<0.000000e+00> : vector<8xf32>
    %132 = vector.multi_reduction <add>, %131, %cst_69 [1] : vector<8x8xf32> to vector<8xf32>
    %133 = vector.shape_cast %132 : vector<8xf32> to vector<8x1xf32>
    %134 = tpu.reciprocal %133 {approx = true} : vector<8x1xf32> -> vector<8x1xf32>
    %135 = vector.broadcast %134 : vector<8x1xf32> to vector<8x8xf32>
    %136 = arith.mulf %131, %135 : vector<8x8xf32>
    %137 = arith.truncf %136 : vector<8x8xf32> to vector<8x8xbf16>
    %cst_70 = arith.constant dense<0.000000e+00> : vector<8x8xf32>
    %138 = tpu.matmul %137, %123, %cst_70 {dimension_numbers = #tpu.dot_dimension_numbers<[1], [0], [0], [1], [0, 0, 1, 1], [], []>} : vector<8x8xbf16>, vector<8x8xbf16>, vector<8x8xf32> -> vector<8x8xf32>
    %139 = arith.truncf %138 : vector<8x8xf32> to vector<8x8xbf16>
    %c0_71 = arith.constant 0 : index
    %c0_72 = arith.constant 0 : index
    %c24_73 = arith.constant 24 : index
    %140 = vector.load %arg11[%c0_71, %c0_72, %c24_73] : memref<2x8x32xbf16, #tpu.memory_space<vmem>>, vector<1x8x8xbf16>
    %141 = vector.shape_cast %140 : vector<1x8x8xbf16> to vector<8x8xbf16>
    %142 = vector.shape_cast %139 : vector<8x8xbf16> to vector<1x8x8xbf16>
    tpu.vector_store %arg11[%c0_71, %c0_72, %c24_73], %142 {strides = array<i32>} : memref<2x8x32xbf16, #tpu.memory_space<vmem>>, vector<1x8x8xbf16>,
    %c1 = arith.constant 1 : index
    %c0_74 = arith.constant 0 : index
    %c0_75 = arith.constant 0 : index
    %143 = vector.load %arg10[%c1, %c0_74, %c0_75] : memref<2x8x96xbf16, #tpu.memory_space<vmem>>, vector<1x8x8xbf16>
    %144 = vector.shape_cast %143 : vector<1x8x8xbf16> to vector<8x8xbf16>
    %c1_76 = arith.constant 1 : index
    %c0_77 = arith.constant 0 : index
    %c32_78 = arith.constant 32 : index
    %145 = vector.load %arg10[%c1_76, %c0_77, %c32_78] : memref<2x8x96xbf16, #tpu.memory_space<vmem>>, vector<1x8x8xbf16>
    %146 = vector.shape_cast %145 : vector<1x8x8xbf16> to vector<8x8xbf16>
    %c1_79 = arith.constant 1 : index
    %c0_80 = arith.constant 0 : index
    %c64_81 = arith.constant 64 : index
    %147 = vector.load %arg10[%c1_79, %c0_80, %c64_81] : memref<2x8x96xbf16, #tpu.memory_space<vmem>>, vector<1x8x8xbf16>
    %148 = vector.shape_cast %147 : vector<1x8x8xbf16> to vector<8x8xbf16>
    %cst_82 = arith.constant dense<0.000000e+00> : vector<8x8xf32>
    %149 = tpu.matmul %144, %146, %cst_82 {dimension_numbers = #tpu.dot_dimension_numbers<[1], [1], [0], [0], [0, 0, 1, 0], [], []>} : vector<8x8xbf16>, vector<8x8xbf16>, vector<8x8xf32> -> vector<8x8xf32>
    %150 = vector.broadcast %42 : vector<1x8xf32> to vector<8x8xf32>
    %151 = arith.addf %149, %150 : vector<8x8xf32>
    %cst_83 = arith.constant dense<0xFF800000> : vector<8xf32>
    %152 = vector.multi_reduction <maximumf>, %151, %cst_83 [1] : vector<8x8xf32> to vector<8xf32>
    %153 = vector.shape_cast %152 : vector<8xf32> to vector<8x1xf32>
    %154 = vector.broadcast %153 : vector<8x1xf32> to vector<8x8xf32>
    %155 = arith.subf %151, %154 : vector<8x8xf32>
    %156 = math.exp %155 : vector<8x8xf32>
    %cst_84 = arith.constant dense<0.000000e+00> : vector<8xf32>
    %157 = vector.multi_reduction <add>, %156, %cst_84 [1] : vector<8x8xf32> to vector<8xf32>
    %158 = vector.shape_cast %157 : vector<8xf32> to vector<8x1xf32>
    %159 = tpu.reciprocal %158 {approx = true} : vector<8x1xf32> -> vector<8x1xf32>
    %160 = vector.broadcast %159 : vector<8x1xf32> to vector<8x8xf32>
    %161 = arith.mulf %156, %160 : vector<8x8xf32>
    %162 = arith.truncf %161 : vector<8x8xf32> to vector<8x8xbf16>
    %cst_85 = arith.constant dense<0.000000e+00> : vector<8x8xf32>
    %163 = tpu.matmul %162, %148, %cst_85 {dimension_numbers = #tpu.dot_dimension_numbers<[1], [0], [0], [1], [0, 0, 1, 1], [], []>} : vector<8x8xbf16>, vector<8x8xbf16>, vector<8x8xf32> -> vector<8x8xf32>
    %164 = arith.truncf %163 : vector<8x8xf32> to vector<8x8xbf16>
    %c1_86 = arith.constant 1 : index
    %c0_87 = arith.constant 0 : index
    %c0_88 = arith.constant 0 : index
    %165 = vector.load %arg11[%c1_86, %c0_87, %c0_88] : memref<2x8x32xbf16, #tpu.memory_space<vmem>>, vector<1x8x8xbf16>
    %166 = vector.shape_cast %165 : vector<1x8x8xbf16> to vector<8x8xbf16>
    %167 = vector.shape_cast %164 : vector<8x8xbf16> to vector<1x8x8xbf16>
    tpu.vector_store %arg11[%c1_86, %c0_87, %c0_88], %167 {strides = array<i32>} : memref<2x8x32xbf16, #tpu.memory_space<vmem>>, vector<1x8x8xbf16>,
    %c1_89 = arith.constant 1 : index
    %c0_90 = arith.constant 0 : index
    %c8_91 = arith.constant 8 : index
    %168 = vector.load %arg10[%c1_89, %c0_90, %c8_91] : memref<2x8x96xbf16, #tpu.memory_space<vmem>>, vector<1x8x8xbf16>
    %169 = vector.shape_cast %168 : vector<1x8x8xbf16> to vector<8x8xbf16>
    %c1_92 = arith.constant 1 : index
    %c0_93 = arith.constant 0 : index
    %c40_94 = arith.constant 40 : index
    %170 = vector.load %arg10[%c1_92, %c0_93, %c40_94] : memref<2x8x96xbf16, #tpu.memory_space<vmem>>, vector<1x8x8xbf16>
    %171 = vector.shape_cast %170 : vector<1x8x8xbf16> to vector<8x8xbf16>
    %c1_95 = arith.constant 1 : index
    %c0_96 = arith.constant 0 : index
    %c72_97 = arith.constant 72 : index
    %172 = vector.load %arg10[%c1_95, %c0_96, %c72_97] : memref<2x8x96xbf16, #tpu.memory_space<vmem>>, vector<1x8x8xbf16>
    %173 = vector.shape_cast %172 : vector<1x8x8xbf16> to vector<8x8xbf16>
    %cst_98 = arith.constant dense<0.000000e+00> : vector<8x8xf32>
    %174 = tpu.matmul %169, %171, %cst_98 {dimension_numbers = #tpu.dot_dimension_numbers<[1], [1], [0], [0], [0, 0, 1, 0], [], []>} : vector<8x8xbf16>, vector<8x8xbf16>, vector<8x8xf32> -> vector<8x8xf32>
    %175 = vector.broadcast %42 : vector<1x8xf32> to vector<8x8xf32>
    %176 = arith.addf %174, %175 : vector<8x8xf32>
    %cst_99 = arith.constant dense<0xFF800000> : vector<8xf32>
    %177 = vector.multi_reduction <maximumf>, %176, %cst_99 [1] : vector<8x8xf32> to vector<8xf32>
    %178 = vector.shape_cast %177 : vector<8xf32> to vector<8x1xf32>
    %179 = vector.broadcast %178 : vector<8x1xf32> to vector<8x8xf32>
    %180 = arith.subf %176, %179 : vector<8x8xf32>
    %181 = math.exp %180 : vector<8x8xf32>
    %cst_100 = arith.constant dense<0.000000e+00> : vector<8xf32>
    %182 = vector.multi_reduction <add>, %181, %cst_100 [1] : vector<8x8xf32> to vector<8xf32>
    %183 = vector.shape_cast %182 : vector<8xf32> to vector<8x1xf32>
    %184 = tpu.reciprocal %183 {approx = true} : vector<8x1xf32> -> vector<8x1xf32>
    %185 = vector.broadcast %184 : vector<8x1xf32> to vector<8x8xf32>
    %186 = arith.mulf %181, %185 : vector<8x8xf32>
    %187 = arith.truncf %186 : vector<8x8xf32> to vector<8x8xbf16>
    %cst_101 = arith.constant dense<0.000000e+00> : vector<8x8xf32>
    %188 = tpu.matmul %187, %173, %cst_101 {dimension_numbers = #tpu.dot_dimension_numbers<[1], [0], [0], [1], [0, 0, 1, 1], [], []>} : vector<8x8xbf16>, vector<8x8xbf16>, vector<8x8xf32> -> vector<8x8xf32>
    %189 = arith.truncf %188 : vector<8x8xf32> to vector<8x8xbf16>
    %c1_102 = arith.constant 1 : index
    %c0_103 = arith.constant 0 : index
    %c8_104 = arith.constant 8 : index
    %190 = vector.load %arg11[%c1_102, %c0_103, %c8_104] : memref<2x8x32xbf16, #tpu.memory_space<vmem>>, vector<1x8x8xbf16>
    %191 = vector.shape_cast %190 : vector<1x8x8xbf16> to vector<8x8xbf16>
    %192 = vector.shape_cast %189 : vector<8x8xbf16> to vector<1x8x8xbf16>
    tpu.vector_store %arg11[%c1_102, %c0_103, %c8_104], %192 {strides = array<i32>} : memref<2x8x32xbf16, #tpu.memory_space<vmem>>, vector<1x8x8xbf16>,
    %c1_105 = arith.constant 1 : index
    %c0_106 = arith.constant 0 : index
    %c16_107 = arith.constant 16 : index
    %193 = vector.load %arg10[%c1_105, %c0_106, %c16_107] : memref<2x8x96xbf16, #tpu.memory_space<vmem>>, vector<1x8x8xbf16>
    %194 = vector.shape_cast %193 : vector<1x8x8xbf16> to vector<8x8xbf16>
    %c1_108 = arith.constant 1 : index
    %c0_109 = arith.constant 0 : index
    %c48_110 = arith.constant 48 : index
    %195 = vector.load %arg10[%c1_108, %c0_109, %c48_110] : memref<2x8x96xbf16, #tpu.memory_space<vmem>>, vector<1x8x8xbf16>
    %196 = vector.shape_cast %195 : vector<1x8x8xbf16> to vector<8x8xbf16>
    %c1_111 = arith.constant 1 : index
    %c0_112 = arith.constant 0 : index
    %c80_113 = arith.constant 80 : index
    %197 = vector.load %arg10[%c1_111, %c0_112, %c80_113] : memref<2x8x96xbf16, #tpu.memory_space<vmem>>, vector<1x8x8xbf16>
    %198 = vector.shape_cast %197 : vector<1x8x8xbf16> to vector<8x8xbf16>
    %cst_114 = arith.constant dense<0.000000e+00> : vector<8x8xf32>
    %199 = tpu.matmul %194, %196, %cst_114 {dimension_numbers = #tpu.dot_dimension_numbers<[1], [1], [0], [0], [0, 0, 1, 0], [], []>} : vector<8x8xbf16>, vector<8x8xbf16>, vector<8x8xf32> -> vector<8x8xf32>
    %200 = vector.broadcast %42 : vector<1x8xf32> to vector<8x8xf32>
    %201 = arith.addf %199, %200 : vector<8x8xf32>
    %cst_115 = arith.constant dense<0xFF800000> : vector<8xf32>
    %202 = vector.multi_reduction <maximumf>, %201, %cst_115 [1] : vector<8x8xf32> to vector<8xf32>
    %203 = vector.shape_cast %202 : vector<8xf32> to vector<8x1xf32>
    %204 = vector.broadcast %203 : vector<8x1xf32> to vector<8x8xf32>
    %205 = arith.subf %201, %204 : vector<8x8xf32>
    %206 = math.exp %205 : vector<8x8xf32>
    %cst_116 = arith.constant dense<0.000000e+00> : vector<8xf32>
    %207 = vector.multi_reduction <add>, %206, %cst_116 [1] : vector<8x8xf32> to vector<8xf32>
    %208 = vector.shape_cast %207 : vector<8xf32> to vector<8x1xf32>
    %209 = tpu.reciprocal %208 {approx = true} : vector<8x1xf32> -> vector<8x1xf32>
    %210 = vector.broadcast %209 : vector<8x1xf32> to vector<8x8xf32>
    %211 = arith.mulf %206, %210 : vector<8x8xf32>
    %212 = arith.truncf %211 : vector<8x8xf32> to vector<8x8xbf16>
    %cst_117 = arith.constant dense<0.000000e+00> : vector<8x8xf32>
    %213 = tpu.matmul %212, %198, %cst_117 {dimension_numbers = #tpu.dot_dimension_numbers<[1], [0], [0], [1], [0, 0, 1, 1], [], []>} : vector<8x8xbf16>, vector<8x8xbf16>, vector<8x8xf32> -> vector<8x8xf32>
    %214 = arith.truncf %213 : vector<8x8xf32> to vector<8x8xbf16>
    %c1_118 = arith.constant 1 : index
    %c0_119 = arith.constant 0 : index
    %c16_120 = arith.constant 16 : index
    %215 = vector.load %arg11[%c1_118, %c0_119, %c16_120] : memref<2x8x32xbf16, #tpu.memory_space<vmem>>, vector<1x8x8xbf16>
    %216 = vector.shape_cast %215 : vector<1x8x8xbf16> to vector<8x8xbf16>
    %217 = vector.shape_cast %214 : vector<8x8xbf16> to vector<1x8x8xbf16>
    tpu.vector_store %arg11[%c1_118, %c0_119, %c16_120], %217 {strides = array<i32>} : memref<2x8x32xbf16, #tpu.memory_space<vmem>>, vector<1x8x8xbf16>,
    %c1_121 = arith.constant 1 : index
    %c0_122 = arith.constant 0 : index
    %c24_123 = arith.constant 24 : index
    %218 = vector.load %arg10[%c1_121, %c0_122, %c24_123] : memref<2x8x96xbf16, #tpu.memory_space<vmem>>, vector<1x8x8xbf16>
    %219 = vector.shape_cast %218 : vector<1x8x8xbf16> to vector<8x8xbf16>
    %c1_124 = arith.constant 1 : index
    %c0_125 = arith.constant 0 : index
    %c56_126 = arith.constant 56 : index
    %220 = vector.load %arg10[%c1_124, %c0_125, %c56_126] : memref<2x8x96xbf16, #tpu.memory_space<vmem>>, vector<1x8x8xbf16>
    %221 = vector.shape_cast %220 : vector<1x8x8xbf16> to vector<8x8xbf16>
    %c1_127 = arith.constant 1 : index
    %c0_128 = arith.constant 0 : index
    %c88_129 = arith.constant 88 : index
    %222 = vector.load %arg10[%c1_127, %c0_128, %c88_129] : memref<2x8x96xbf16, #tpu.memory_space<vmem>>, vector<1x8x8xbf16>
    %223 = vector.shape_cast %222 : vector<1x8x8xbf16> to vector<8x8xbf16>
    %cst_130 = arith.constant dense<0.000000e+00> : vector<8x8xf32>
    %224 = tpu.matmul %219, %221, %cst_130 {dimension_numbers = #tpu.dot_dimension_numbers<[1], [1], [0], [0], [0, 0, 1, 0], [], []>} : vector<8x8xbf16>, vector<8x8xbf16>, vector<8x8xf32> -> vector<8x8xf32>
    %225 = vector.broadcast %42 : vector<1x8xf32> to vector<8x8xf32>
    %226 = arith.addf %224, %225 : vector<8x8xf32>
    %cst_131 = arith.constant dense<0xFF800000> : vector<8xf32>
    %227 = vector.multi_reduction <maximumf>, %226, %cst_131 [1] : vector<8x8xf32> to vector<8xf32>
    %228 = vector.shape_cast %227 : vector<8xf32> to vector<8x1xf32>
    %229 = vector.broadcast %228 : vector<8x1xf32> to vector<8x8xf32>
    %230 = arith.subf %226, %229 : vector<8x8xf32>
    %231 = math.exp %230 : vector<8x8xf32>
    %cst_132 = arith.constant dense<0.000000e+00> : vector<8xf32>
    %232 = vector.multi_reduction <add>, %231, %cst_132 [1] : vector<8x8xf32> to vector<8xf32>
    %233 = vector.shape_cast %232 : vector<8xf32> to vector<8x1xf32>
    %234 = tpu.reciprocal %233 {approx = true} : vector<8x1xf32> -> vector<8x1xf32>
    %235 = vector.broadcast %234 : vector<8x1xf32> to vector<8x8xf32>
    %236 = arith.mulf %231, %235 : vector<8x8xf32>
    %237 = arith.truncf %236 : vector<8x8xf32> to vector<8x8xbf16>
    %cst_133 = arith.constant dense<0.000000e+00> : vector<8x8xf32>
    %238 = tpu.matmul %237, %223, %cst_133 {dimension_numbers = #tpu.dot_dimension_numbers<[1], [0], [0], [1], [0, 0, 1, 1], [], []>} : vector<8x8xbf16>, vector<8x8xbf16>, vector<8x8xf32> -> vector<8x8xf32>
    %239 = arith.truncf %238 : vector<8x8xf32> to vector<8x8xbf16>
    %c1_134 = arith.constant 1 : index
    %c0_135 = arith.constant 0 : index
    %c24_136 = arith.constant 24 : index
    %240 = vector.load %arg11[%c1_134, %c0_135, %c24_136] : memref<2x8x32xbf16, #tpu.memory_space<vmem>>, vector<1x8x8xbf16>
    %241 = vector.shape_cast %240 : vector<1x8x8xbf16> to vector<8x8xbf16>
    %242 = vector.shape_cast %239 : vector<8x8xbf16> to vector<1x8x8xbf16>
    tpu.vector_store %arg11[%c1_134, %c0_135, %c24_136], %242 {strides = array<i32>} : memref<2x8x32xbf16, #tpu.memory_space<vmem>>, vector<1x8x8xbf16>,
    %c0_137 = arith.constant 0 : index
    %c0_138 = arith.constant 0 : index
    %c0_139 = arith.constant 0 : index
    %243 = vector.load %arg11[%c0_137, %c0_138, %c0_139] : memref<2x8x32xbf16, #tpu.memory_space<vmem>>, vector<2x8x32xbf16>
    %244 = vector.shape_cast %243 : vector<2x8x32xbf16> to vector<16x32xbf16>
    %c0_140 = arith.constant 0 : index
    %c0_141 = arith.constant 0 : index
    %c0_142 = arith.constant 0 : index
    %245 = vector.load %arg7[%c0_140, %c0_141, %c0_142] : memref<1x32x32xbf16, #tpu.memory_space<vmem>>, vector<1x32x32xbf16>
    %246 = vector.shape_cast %245 : vector<1x32x32xbf16> to vector<32x32xbf16>
    %cst_143 = arith.constant dense<0.000000e+00> : vector<16x32xf32>
    %247 = tpu.matmul %244, %246, %cst_143 {dimension_numbers = #tpu.dot_dimension_numbers<[1], [0], [0], [1], [0, 0, 1, 1], [], []>} : vector<16x32xbf16>, vector<32x32xbf16>, vector<16x32xf32> -> vector<16x32xf32>
    %c0_144 = arith.constant 0 : index
    %c0_145 = arith.constant 0 : index
    %c0_146 = arith.constant 0 : index
    %248 = vector.load %arg2[%c0_144, %c0_145, %c0_146] : memref<2x8x32xbf16, #tpu.memory_space<vmem>>, vector<2x8x32xbf16>
    %249 = vector.shape_cast %248 : vector<2x8x32xbf16> to vector<16x32xbf16>
    %c0_147 = arith.constant 0 : index
    %c0_148 = arith.constant 0 : index
    %250 = vector.load %arg8[%c0_147, %c0_148] : memref<1x32xf32, #tpu.memory_space<vmem>>, vector<1x32xf32>
    %251 = vector.broadcast %250 : vector<1x32xf32> to vector<16x32xf32>
    %252 = arith.addf %247, %251 : vector<16x32xf32>
    %253 = arith.extf %249 : vector<16x32xbf16> to vector<16x32xf32>
    %254 = arith.addf %252, %253 : vector<16x32xf32>
    %255 = vector.shape_cast %254 : vector<16x32xf32> to vector<2x8x32xf32>
    %256 = arith.truncf %255 : vector<2x8x32xf32> to vector<2x8x32xbf16>
    %c0_149 = arith.constant 0 : index
    %c0_150 = arith.constant 0 : index
    %c0_151 = arith.constant 0 : index
    %c0_152 = arith.constant 0 : index
    %257 = vector.load %arg9[%c0_149, %c0_150, %c0_151, %c0_152] : memref<1x2x8x32xbf16, #tpu.memory_space<vmem>>, vector<1x2x8x32xbf16>
    %258 = vector.shape_cast %257 : vector<1x2x8x32xbf16> to vector<2x8x32xbf16>
    %259 = vector.shape_cast %256 : vector<2x8x32xbf16> to vector<1x2x8x32xbf16>
    tpu.vector_store %arg9[%c0_149, %c0_150, %c0_151, %c0_152], %259 {strides = array<i32>} : memref<1x2x8x32xbf16, #tpu.memory_space<vmem>>, vector<1x2x8x32xbf16>,
    return
  }
  func.func @transform_0(%arg0: i32, %arg1: i32) -> (i32, i32, i32) {
    %c0_i32 = arith.constant 0 : i32
    %c0_i32_0 = arith.constant 0 : i32
    %c0_i32_1 = arith.constant 0 : i32
    return %arg1, %c0_i32, %c0_i32_0 : i32, i32, i32
  }
  func.func @transform_1(%arg0: i32, %arg1: i32) -> (i32, i32) {
    %c0_i32 = arith.constant 0 : i32
    %c0_i32_0 = arith.constant 0 : i32
    %c0_i32_1 = arith.constant 0 : i32
    return %c0_i32, %c0_i32_0 : i32, i32
  }
  func.func @transform_2(%arg0: i32, %arg1: i32) -> (i32, i32) {
    %c0_i32 = arith.constant 0 : i32
    %c0_i32_0 = arith.constant 0 : i32
    %c0_i32_1 = arith.constant 0 : i32
    return %c0_i32, %c0_i32_0 : i32, i32
  }
  func.func @transform_3(%arg0: i32, %arg1: i32) -> (i32, i32, i32) {
    %c0_i32 = arith.constant 0 : i32
    %c0_i32_0 = arith.constant 0 : i32
    %c0_i32_1 = arith.constant 0 : i32
    return %arg0, %c0_i32, %c0_i32_0 : i32, i32, i32
  }
  func.func @transform_4(%arg0: i32, %arg1: i32) -> (i32, i32) {
    %c0_i32 = arith.constant 0 : i32
    %c0_i32_0 = arith.constant 0 : i32
    %c0_i32_1 = arith.constant 0 : i32
    return %c0_i32, %c0_i32_0 : i32, i32
  }
  func.func @transform_5(%arg0: i32, %arg1: i32) -> (i32, i32, i32) {
    %c0_i32 = arith.constant 0 : i32
    %c0_i32_0 = arith.constant 0 : i32
    %c0_i32_1 = arith.constant 0 : i32
    return %arg0, %c0_i32, %c0_i32_0 : i32, i32, i32
  }
  func.func @transform_6(%arg0: i32, %arg1: i32) -> (i32, i32) {
    %c0_i32 = arith.constant 0 : i32
    %c0_i32_0 = arith.constant 0 : i32
    %c0_i32_1 = arith.constant 0 : i32
    return %c0_i32, %c0_i32_0 : i32, i32
  }
  func.func @transform_7(%arg0: i32, %arg1: i32) -> (i32, i32, i32, i32) {
    %c0_i32 = arith.constant 0 : i32
    %c0_i32_0 = arith.constant 0 : i32
    %c0_i32_1 = arith.constant 0 : i32
    return %arg0, %arg1, %c0_i32, %c0_i32_0 : i32, i32, i32, i32
  }
}

module attributes {stable_mosaic.version = 11 : i64} {
  func.func @_mlp_block_kernel(%arg0: i32, %arg1: i32, %arg2: memref<1x2x8x32xbf16, #tpu.memory_space<vmem>>, %arg3: memref<1x32xf32, #tpu.memory_space<vmem>>, %arg4: memref<1x32xf32, #tpu.memory_space<vmem>>, %arg5: memref<32x64xbf16, #tpu.memory_space<vmem>>, %arg6: memref<1x64xf32, #tpu.memory_space<vmem>>, %arg7: memref<64x32xbf16, #tpu.memory_space<vmem>>, %arg8: memref<1x32xf32, #tpu.memory_space<vmem>>, %arg9: memref<1x2x8x32xbf16, #tpu.memory_space<vmem>>) attributes {dimension_semantics = [#tpu.dimension_semantics<parallel>, #tpu.dimension_semantics<parallel>], iteration_bounds = array<i64: 2, 1>, scalar_prefetch = 0 : i64, scratch_operands = 0 : i64, tpu.core_type = #tpu.core_type<tc>, window_params = [{transform_indices = @transform_0, window_bounds = array<i64: 1, 2, 8, 32>}, {pipeline_mode = #tpu.pipeline_mode<synchronous>, transform_indices = @transform_1, window_bounds = array<i64: 1, 32>}, {pipeline_mode = #tpu.pipeline_mode<synchronous>, transform_indices = @transform_2, window_bounds = array<i64: 1, 32>}, {pipeline_mode = #tpu.pipeline_mode<synchronous>, transform_indices = @transform_3, window_bounds = array<i64: 32, 64>}, {pipeline_mode = #tpu.pipeline_mode<synchronous>, transform_indices = @transform_4, window_bounds = array<i64: 1, 64>}, {pipeline_mode = #tpu.pipeline_mode<synchronous>, transform_indices = @transform_5, window_bounds = array<i64: 64, 32>}, {pipeline_mode = #tpu.pipeline_mode<synchronous>, transform_indices = @transform_6, window_bounds = array<i64: 1, 32>}, {transform_indices = @transform_7, window_bounds = array<i64: 1, 2, 8, 32>}]} {
    %c0 = arith.constant 0 : index
    %c0_0 = arith.constant 0 : index
    %c0_1 = arith.constant 0 : index
    %c0_2 = arith.constant 0 : index
    %0 = vector.load %arg2[%c0, %c0_0, %c0_1, %c0_2] : memref<1x2x8x32xbf16, #tpu.memory_space<vmem>>, vector<1x2x8x32xbf16>
    %1 = vector.shape_cast %0 : vector<1x2x8x32xbf16> to vector<2x8x32xbf16>
    %2 = vector.shape_cast %1 : vector<2x8x32xbf16> to vector<16x32xbf16>
    %3 = arith.extf %2 : vector<16x32xbf16> to vector<16x32xf32>
    %c0_3 = arith.constant 0 : index
    %c0_4 = arith.constant 0 : index
    %4 = vector.load %arg3[%c0_3, %c0_4] : memref<1x32xf32, #tpu.memory_space<vmem>>, vector<1x32xf32>
    %c0_5 = arith.constant 0 : index
    %c0_6 = arith.constant 0 : index
    %5 = vector.load %arg4[%c0_5, %c0_6] : memref<1x32xf32, #tpu.memory_space<vmem>>, vector<1x32xf32>
    %cst = arith.constant dense<0.000000e+00> : vector<16xf32>
    %6 = vector.multi_reduction <add>, %3, %cst [1] : vector<16x32xf32> to vector<16xf32>
    %7 = vector.shape_cast %6 : vector<16xf32> to vector<16x1xf32>
    %cst_7 = arith.constant 3.200000e+01 : f32
    %8 = vector.broadcast %cst_7 : f32 to vector<16x1xf32>
    %9 = arith.divf %7, %8 : vector<16x1xf32>
    %10 = vector.broadcast %9 : vector<16x1xf32> to vector<16x32xf32>
    %11 = arith.subf %3, %10 : vector<16x32xf32>
    %12 = arith.mulf %11, %11 : vector<16x32xf32>
    %cst_8 = arith.constant dense<0.000000e+00> : vector<16xf32>
    %13 = vector.multi_reduction <add>, %12, %cst_8 [1] : vector<16x32xf32> to vector<16xf32>
    %14 = vector.shape_cast %13 : vector<16xf32> to vector<16x1xf32>
    %cst_9 = arith.constant 3.200000e+01 : f32
    %15 = vector.broadcast %cst_9 : f32 to vector<16x1xf32>
    %16 = arith.divf %14, %15 : vector<16x1xf32>
    %17 = vector.broadcast %9 : vector<16x1xf32> to vector<16x32xf32>
    %18 = arith.subf %3, %17 : vector<16x32xf32>
    %cst_10 = arith.constant 9.99999997E-7 : f32
    %19 = vector.broadcast %cst_10 : f32 to vector<16x1xf32>
    %20 = arith.addf %16, %19 : vector<16x1xf32>
    %21 = math.rsqrt %20 : vector<16x1xf32>
    %22 = vector.broadcast %21 : vector<16x1xf32> to vector<16x32xf32>
    %23 = arith.mulf %18, %22 : vector<16x32xf32>
    %24 = vector.broadcast %4 : vector<1x32xf32> to vector<16x32xf32>
    %25 = arith.mulf %23, %24 : vector<16x32xf32>
    %26 = vector.broadcast %5 : vector<1x32xf32> to vector<16x32xf32>
    %27 = arith.addf %25, %26 : vector<16x32xf32>
    %28 = arith.truncf %27 : vector<16x32xf32> to vector<16x32xbf16>
    %c0_11 = arith.constant 0 : index
    %c0_12 = arith.constant 0 : index
    %29 = vector.load %arg5[%c0_11, %c0_12] : memref<32x64xbf16, #tpu.memory_space<vmem>>, vector<32x64xbf16>
    %cst_13 = arith.constant dense<0.000000e+00> : vector<16x64xf32>
    %30 = tpu.matmul %28, %29, %cst_13 {dimension_numbers = #tpu.dot_dimension_numbers<[1], [0], [0], [1], [0, 0, 1, 1], [], []>} : vector<16x32xbf16>, vector<32x64xbf16>, vector<16x64xf32> -> vector<16x64xf32>
    %c0_14 = arith.constant 0 : index
    %c0_15 = arith.constant 0 : index
    %31 = vector.load %arg6[%c0_14, %c0_15] : memref<1x64xf32, #tpu.memory_space<vmem>>, vector<1x64xf32>
    %32 = vector.broadcast %31 : vector<1x64xf32> to vector<16x64xf32>
    %33 = arith.addf %30, %32 : vector<16x64xf32>
    %cst_16 = arith.constant 5.000000e-01 : f32
    %34 = vector.broadcast %cst_16 : f32 to vector<16x64xf32>
    %35 = arith.mulf %34, %33 : vector<16x64xf32>
    %cst_17 = arith.constant 4.471500e-02 : f32
    %36 = vector.broadcast %cst_17 : f32 to vector<16x64xf32>
    %37 = arith.mulf %36, %33 : vector<16x64xf32>
    %38 = arith.mulf %37, %33 : vector<16x64xf32>
    %39 = arith.mulf %38, %33 : vector<16x64xf32>
    %40 = arith.addf %33, %39 : vector<16x64xf32>
    %cst_18 = arith.constant 0.797884583 : f32
    %41 = vector.broadcast %cst_18 : f32 to vector<16x64xf32>
    %42 = arith.mulf %41, %40 : vector<16x64xf32>
    %43 = math.tanh %42 : vector<16x64xf32>
    %cst_19 = arith.constant 1.000000e+00 : f32
    %44 = vector.broadcast %cst_19 : f32 to vector<16x64xf32>
    %45 = arith.addf %44, %43 : vector<16x64xf32>
    %46 = arith.mulf %35, %45 : vector<16x64xf32>
    %47 = arith.truncf %46 : vector<16x64xf32> to vector<16x64xbf16>
    %c0_20 = arith.constant 0 : index
    %c0_21 = arith.constant 0 : index
    %48 = vector.load %arg7[%c0_20, %c0_21] : memref<64x32xbf16, #tpu.memory_space<vmem>>, vector<64x32xbf16>
    %cst_22 = arith.constant dense<0.000000e+00> : vector<16x32xf32>
    %49 = tpu.matmul %47, %48, %cst_22 {dimension_numbers = #tpu.dot_dimension_numbers<[1], [0], [0], [1], [0, 0, 1, 1], [], []>} : vector<16x64xbf16>, vector<64x32xbf16>, vector<16x32xf32> -> vector<16x32xf32>
    %c0_23 = arith.constant 0 : index
    %c0_24 = arith.constant 0 : index
    %50 = vector.load %arg8[%c0_23, %c0_24] : memref<1x32xf32, #tpu.memory_space<vmem>>, vector<1x32xf32>
    %51 = vector.broadcast %50 : vector<1x32xf32> to vector<16x32xf32>
    %52 = arith.addf %49, %51 : vector<16x32xf32>
    %53 = arith.addf %52, %3 : vector<16x32xf32>
    %54 = vector.shape_cast %53 : vector<16x32xf32> to vector<2x8x32xf32>
    %55 = arith.truncf %54 : vector<2x8x32xf32> to vector<2x8x32xbf16>
    %c0_25 = arith.constant 0 : index
    %c0_26 = arith.constant 0 : index
    %c0_27 = arith.constant 0 : index
    %c0_28 = arith.constant 0 : index
    %56 = vector.load %arg9[%c0_25, %c0_26, %c0_27, %c0_28] : memref<1x2x8x32xbf16, #tpu.memory_space<vmem>>, vector<1x2x8x32xbf16>
    %57 = vector.shape_cast %56 : vector<1x2x8x32xbf16> to vector<2x8x32xbf16>
    %58 = vector.shape_cast %55 : vector<2x8x32xbf16> to vector<1x2x8x32xbf16>
    tpu.vector_store %arg9[%c0_25, %c0_26, %c0_27, %c0_28], %58 {strides = array<i32>} : memref<1x2x8x32xbf16, #tpu.memory_space<vmem>>, vector<1x2x8x32xbf16>,
    return
  }
  func.func @transform_0(%arg0: i32, %arg1: i32) -> (i32, i32, i32, i32) {
    %c0_i32 = arith.constant 0 : i32
    %c0_i32_0 = arith.constant 0 : i32
    %c0_i32_1 = arith.constant 0 : i32
    return %arg0, %arg1, %c0_i32, %c0_i32_0 : i32, i32, i32, i32
  }
  func.func @transform_1(%arg0: i32, %arg1: i32) -> (i32, i32) {
    %c0_i32 = arith.constant 0 : i32
    %c0_i32_0 = arith.constant 0 : i32
    %c0_i32_1 = arith.constant 0 : i32
    return %c0_i32, %c0_i32_0 : i32, i32
  }
  func.func @transform_2(%arg0: i32, %arg1: i32) -> (i32, i32) {
    %c0_i32 = arith.constant 0 : i32
    %c0_i32_0 = arith.constant 0 : i32
    %c0_i32_1 = arith.constant 0 : i32
    return %c0_i32, %c0_i32_0 : i32, i32
  }
  func.func @transform_3(%arg0: i32, %arg1: i32) -> (i32, i32) {
    %c0_i32 = arith.constant 0 : i32
    %c0_i32_0 = arith.constant 0 : i32
    %c0_i32_1 = arith.constant 0 : i32
    return %c0_i32, %c0_i32_0 : i32, i32
  }
  func.func @transform_4(%arg0: i32, %arg1: i32) -> (i32, i32) {
    %c0_i32 = arith.constant 0 : i32
    %c0_i32_0 = arith.constant 0 : i32
    %c0_i32_1 = arith.constant 0 : i32
    return %c0_i32, %c0_i32_0 : i32, i32
  }
  func.func @transform_5(%arg0: i32, %arg1: i32) -> (i32, i32) {
    %c0_i32 = arith.constant 0 : i32
    %c0_i32_0 = arith.constant 0 : i32
    %c0_i32_1 = arith.constant 0 : i32
    return %c0_i32, %c0_i32_0 : i32, i32
  }
  func.func @transform_6(%arg0: i32, %arg1: i32) -> (i32, i32) {
    %c0_i32 = arith.constant 0 : i32
    %c0_i32_0 = arith.constant 0 : i32
    %c0_i32_1 = arith.constant 0 : i32
    return %c0_i32, %c0_i32_0 : i32, i32
  }
  func.func @transform_7(%arg0: i32, %arg1: i32) -> (i32, i32, i32, i32) {
    %c0_i32 = arith.constant 0 : i32
    %c0_i32_0 = arith.constant 0 : i32
    %c0_i32_1 = arith.constant 0 : i32
    return %arg0, %arg1, %c0_i32, %c0_i32_0 : i32, i32, i32, i32
  }
}

module attributes {stable_mosaic.version = 11 : i64} {
  func.func @_attn_block_kernel(%arg0: i32, %arg1: i32, %arg2: memref<1x2x8x32xbf16, #tpu.memory_space<vmem>>, %arg3: memref<1x32xf32, #tpu.memory_space<vmem>>, %arg4: memref<1x32xf32, #tpu.memory_space<vmem>>, %arg5: memref<1x32x96xbf16, #tpu.memory_space<vmem>>, %arg6: memref<1x96xf32, #tpu.memory_space<vmem>>, %arg7: memref<1x32x32xbf16, #tpu.memory_space<vmem>>, %arg8: memref<1x32xf32, #tpu.memory_space<vmem>>, %arg9: memref<1x2x8x32xbf16, #tpu.memory_space<vmem>>, %arg10: memref<2x8x96xbf16, #tpu.memory_space<vmem>>, %arg11: memref<2x8x32xbf16, #tpu.memory_space<vmem>>) attributes {dimension_semantics = [#tpu.dimension_semantics<parallel>, #tpu.dimension_semantics<parallel>], iteration_bounds = array<i64: 2, 1>, scalar_prefetch = 0 : i64, scratch_operands = 2 : i64, tpu.core_type = #tpu.core_type<tc>, window_params = [{transform_indices = @transform_0, window_bounds = array<i64: 1, 2, 8, 32>}, {pipeline_mode = #tpu.pipeline_mode<synchronous>, transform_indices = @transform_1, window_bounds = array<i64: 1, 32>}, {pipeline_mode = #tpu.pipeline_mode<synchronous>, transform_indices = @transform_2, window_bounds = array<i64: 1, 32>}, {transform_indices = @transform_3, window_bounds = array<i64: 1, 32, 96>}, {pipeline_mode = #tpu.pipeline_mode<synchronous>, transform_indices = @transform_4, window_bounds = array<i64: 1, 96>}, {transform_indices = @transform_5, window_bounds = array<i64: 1, 32, 32>}, {pipeline_mode = #tpu.pipeline_mode<synchronous>, transform_indices = @transform_6, window_bounds = array<i64: 1, 32>}, {transform_indices = @transform_7, window_bounds = array<i64: 1, 2, 8, 32>}]} {
    %c0 = arith.constant 0 : index
    %c0_0 = arith.constant 0 : index
    %c0_1 = arith.constant 0 : index
    %c0_2 = arith.constant 0 : index
    %0 = vector.load %arg2[%c0, %c0_0, %c0_1, %c0_2] : memref<1x2x8x32xbf16, #tpu.memory_space<vmem>>, vector<1x2x8x32xbf16>
    %1 = vector.shape_cast %0 : vector<1x2x8x32xbf16> to vector<2x8x32xbf16>
    %2 = vector.shape_cast %1 : vector<2x8x32xbf16> to vector<16x32xbf16>
    %3 = arith.extf %2 : vector<16x32xbf16> to vector<16x32xf32>
    %c0_3 = arith.constant 0 : index
    %c0_4 = arith.constant 0 : index
    %4 = vector.load %arg3[%c0_3, %c0_4] : memref<1x32xf32, #tpu.memory_space<vmem>>, vector<1x32xf32>
    %c0_5 = arith.constant 0 : index
    %c0_6 = arith.constant 0 : index
    %5 = vector.load %arg4[%c0_5, %c0_6] : memref<1x32xf32, #tpu.memory_space<vmem>>, vector<1x32xf32>
    %cst = arith.constant dense<0.000000e+00> : vector<16xf32>
    %6 = vector.multi_reduction <add>, %3, %cst [1] : vector<16x32xf32> to vector<16xf32>
    %7 = vector.shape_cast %6 : vector<16xf32> to vector<16x1xf32>
    %cst_7 = arith.constant 3.200000e+01 : f32
    %8 = vector.broadcast %cst_7 : f32 to vector<16x1xf32>
    %9 = arith.divf %7, %8 : vector<16x1xf32>
    %10 = vector.broadcast %9 : vector<16x1xf32> to vector<16x32xf32>
    %11 = arith.subf %3, %10 : vector<16x32xf32>
    %12 = arith.mulf %11, %11 : vector<16x32xf32>
    %cst_8 = arith.constant dense<0.000000e+00> : vector<16xf32>
    %13 = vector.multi_reduction <add>, %12, %cst_8 [1] : vector<16x32xf32> to vector<16xf32>
    %14 = vector.shape_cast %13 : vector<16xf32> to vector<16x1xf32>
    %cst_9 = arith.constant 3.200000e+01 : f32
    %15 = vector.broadcast %cst_9 : f32 to vector<16x1xf32>
    %16 = arith.divf %14, %15 : vector<16x1xf32>
    %17 = vector.broadcast %9 : vector<16x1xf32> to vector<16x32xf32>
    %18 = arith.subf %3, %17 : vector<16x32xf32>
    %cst_10 = arith.constant 9.99999997E-7 : f32
    %19 = vector.broadcast %cst_10 : f32 to vector<16x1xf32>
    %20 = arith.addf %16, %19 : vector<16x1xf32>
    %21 = math.rsqrt %20 : vector<16x1xf32>
    %22 = vector.broadcast %21 : vector<16x1xf32> to vector<16x32xf32>
    %23 = arith.mulf %18, %22 : vector<16x32xf32>
    %24 = vector.broadcast %4 : vector<1x32xf32> to vector<16x32xf32>
    %25 = arith.mulf %23, %24 : vector<16x32xf32>
    %26 = vector.broadcast %5 : vector<1x32xf32> to vector<16x32xf32>
    %27 = arith.addf %25, %26 : vector<16x32xf32>
    %28 = arith.truncf %27 : vector<16x32xf32> to vector<16x32xbf16>
    %c0_11 = arith.constant 0 : index
    %c0_12 = arith.constant 0 : index
    %c0_13 = arith.constant 0 : index
    %29 = vector.load %arg5[%c0_11, %c0_12, %c0_13] : memref<1x32x96xbf16, #tpu.memory_space<vmem>>, vector<1x32x96xbf16>
    %30 = vector.shape_cast %29 : vector<1x32x96xbf16> to vector<32x96xbf16>
    %cst_14 = arith.constant dense<0.000000e+00> : vector<16x96xf32>
    %31 = tpu.matmul %28, %30, %cst_14 {dimension_numbers = #tpu.dot_dimension_numbers<[1], [0], [0], [1], [0, 0, 1, 1], [], []>} : vector<16x32xbf16>, vector<32x96xbf16>, vector<16x96xf32> -> vector<16x96xf32>
    %c0_15 = arith.constant 0 : index
    %c0_16 = arith.constant 0 : index
    %32 = vector.load %arg6[%c0_15, %c0_16] : memref<1x96xf32, #tpu.memory_space<vmem>>, vector<1x96xf32>
    %33 = vector.broadcast %32 : vector<1x96xf32> to vector<16x96xf32>
    %34 = arith.addf %31, %33 : vector<16x96xf32>
    %35 = vector.shape_cast %34 : vector<16x96xf32> to vector<2x8x96xf32>
    %36 = arith.truncf %35 : vector<2x8x96xf32> to vector<2x8x96xbf16>
    %c0_17 = arith.constant 0 : index
    %c0_18 = arith.constant 0 : index
    %c0_19 = arith.constant 0 : index
    %37 = vector.load %arg10[%c0_17, %c0_18, %c0_19] : memref<2x8x96xbf16, #tpu.memory_space<vmem>>, vector<2x8x96xbf16>
    tpu.vector_store %arg10[%c0_17, %c0_18, %c0_19], %36 {strides = array<i32>} : memref<2x8x96xbf16, #tpu.memory_space<vmem>>, vector<2x8x96xbf16>,
    %38 = tpu.iota {dimensions = array<i32: 1>} : vector<1x8xi32>
    %c5_i32 = arith.constant 5 : i32
    %39 = vector.broadcast %c5_i32 : i32 to vector<1x8xi32>
    %40 = arith.cmpi slt, %38, %39 : vector<1x8xi32>
    %cst_20 = arith.constant 0.000000e+00 : f32
    %cst_21 = arith.constant -1.000000e+30 : f32
    %41 = vector.broadcast %cst_20 : f32 to vector<1x8xf32>
    %42 = vector.broadcast %cst_21 : f32 to vector<1x8xf32>
    %43 = arith.select %40, %41, %42 : vector<1x8xi1>, vector<1x8xf32>
    %c0_22 = arith.constant 0 : index
    %c0_23 = arith.constant 0 : index
    %c0_24 = arith.constant 0 : index
    %44 = vector.load %arg10[%c0_22, %c0_23, %c0_24] : memref<2x8x96xbf16, #tpu.memory_space<vmem>>, vector<1x8x8xbf16>
    %45 = vector.shape_cast %44 : vector<1x8x8xbf16> to vector<8x8xbf16>
    %c0_25 = arith.constant 0 : index
    %c0_26 = arith.constant 0 : index
    %c32 = arith.constant 32 : index
    %46 = vector.load %arg10[%c0_25, %c0_26, %c32] : memref<2x8x96xbf16, #tpu.memory_space<vmem>>, vector<1x8x8xbf16>
    %47 = vector.shape_cast %46 : vector<1x8x8xbf16> to vector<8x8xbf16>
    %c0_27 = arith.constant 0 : index
    %c0_28 = arith.constant 0 : index
    %c64 = arith.constant 64 : index
    %48 = vector.load %arg10[%c0_27, %c0_28, %c64] : memref<2x8x96xbf16, #tpu.memory_space<vmem>>, vector<1x8x8xbf16>
    %49 = vector.shape_cast %48 : vector<1x8x8xbf16> to vector<8x8xbf16>
    %cst_29 = arith.constant dense<0.000000e+00> : vector<8x8xf32>
    %50 = tpu.matmul %45, %47, %cst_29 {dimension_numbers = #tpu.dot_dimension_numbers<[1], [1], [0], [0], [0, 0, 1, 0], [], []>} : vector<8x8xbf16>, vector<8x8xbf16>, vector<8x8xf32> -> vector<8x8xf32>
    %51 = vector.broadcast %43 : vector<1x8xf32> to vector<8x8xf32>
    %52 = arith.addf %50, %51 : vector<8x8xf32>
    %cst_30 = arith.constant dense<0xFF800000> : vector<8xf32>
    %53 = vector.multi_reduction <maximumf>, %52, %cst_30 [1] : vector<8x8xf32> to vector<8xf32>
    %54 = vector.shape_cast %53 : vector<8xf32> to vector<8x1xf32>
    %55 = vector.broadcast %54 : vector<8x1xf32> to vector<8x8xf32>
    %56 = arith.subf %52, %55 : vector<8x8xf32>
    %57 = math.exp %56 : vector<8x8xf32>
    %cst_31 = arith.constant dense<0.000000e+00> : vector<8xf32>
    %58 = vector.multi_reduction <add>, %57, %cst_31 [1] : vector<8x8xf32> to vector<8xf32>
    %59 = vector.shape_cast %58 : vector<8xf32> to vector<8x1xf32>
    %60 = tpu.reciprocal %59 {approx = true} : vector<8x1xf32> -> vector<8x1xf32>
    %61 = vector.broadcast %60 : vector<8x1xf32> to vector<8x8xf32>
    %62 = arith.mulf %57, %61 : vector<8x8xf32>
    %63 = arith.truncf %62 : vector<8x8xf32> to vector<8x8xbf16>
    %cst_32 = arith.constant dense<0.000000e+00> : vector<8x8xf32>
    %64 = tpu.matmul %63, %49, %cst_32 {dimension_numbers = #tpu.dot_dimension_numbers<[1], [0], [0], [1], [0, 0, 1, 1], [], []>} : vector<8x8xbf16>, vector<8x8xbf16>, vector<8x8xf32> -> vector<8x8xf32>
    %65 = arith.truncf %64 : vector<8x8xf32> to vector<8x8xbf16>
    %c0_33 = arith.constant 0 : index
    %c0_34 = arith.constant 0 : index
    %c0_35 = arith.constant 0 : index
    %66 = vector.load %arg11[%c0_33, %c0_34, %c0_35] : memref<2x8x32xbf16, #tpu.memory_space<vmem>>, vector<1x8x8xbf16>
    %67 = vector.shape_cast %66 : vector<1x8x8xbf16> to vector<8x8xbf16>
    %68 = vector.shape_cast %65 : vector<8x8xbf16> to vector<1x8x8xbf16>
    tpu.vector_store %arg11[%c0_33, %c0_34, %c0_35], %68 {strides = array<i32>} : memref<2x8x32xbf16, #tpu.memory_space<vmem>>, vector<1x8x8xbf16>,
    %c0_36 = arith.constant 0 : index
    %c0_37 = arith.constant 0 : index
    %c8 = arith.constant 8 : index
    %69 = vector.load %arg10[%c0_36, %c0_37, %c8] : memref<2x8x96xbf16, #tpu.memory_space<vmem>>, vector<1x8x8xbf16>
    %70 = vector.shape_cast %69 : vector<1x8x8xbf16> to vector<8x8xbf16>
    %c0_38 = arith.constant 0 : index
    %c0_39 = arith.constant 0 : index
    %c40 = arith.constant 40 : index
    %71 = vector.load %arg10[%c0_38, %c0_39, %c40] : memref<2x8x96xbf16, #tpu.memory_space<vmem>>, vector<1x8x8xbf16>
    %72 = vector.shape_cast %71 : vector<1x8x8xbf16> to vector<8x8xbf16>
    %c0_40 = arith.constant 0 : index
    %c0_41 = arith.constant 0 : index
    %c72 = arith.constant 72 : index
    %73 = vector.load %arg10[%c0_40, %c0_41, %c72] : memref<2x8x96xbf16, #tpu.memory_space<vmem>>, vector<1x8x8xbf16>
    %74 = vector.shape_cast %73 : vector<1x8x8xbf16> to vector<8x8xbf16>
    %cst_42 = arith.constant dense<0.000000e+00> : vector<8x8xf32>
    %75 = tpu.matmul %70, %72, %cst_42 {dimension_numbers = #tpu.dot_dimension_numbers<[1], [1], [0], [0], [0, 0, 1, 0], [], []>} : vector<8x8xbf16>, vector<8x8xbf16>, vector<8x8xf32> -> vector<8x8xf32>
    %76 = vector.broadcast %43 : vector<1x8xf32> to vector<8x8xf32>
    %77 = arith.addf %75, %76 : vector<8x8xf32>
    %cst_43 = arith.constant dense<0xFF800000> : vector<8xf32>
    %78 = vector.multi_reduction <maximumf>, %77, %cst_43 [1] : vector<8x8xf32> to vector<8xf32>
    %79 = vector.shape_cast %78 : vector<8xf32> to vector<8x1xf32>
    %80 = vector.broadcast %79 : vector<8x1xf32> to vector<8x8xf32>
    %81 = arith.subf %77, %80 : vector<8x8xf32>
    %82 = math.exp %81 : vector<8x8xf32>
    %cst_44 = arith.constant dense<0.000000e+00> : vector<8xf32>
    %83 = vector.multi_reduction <add>, %82, %cst_44 [1] : vector<8x8xf32> to vector<8xf32>
    %84 = vector.shape_cast %83 : vector<8xf32> to vector<8x1xf32>
    %85 = tpu.reciprocal %84 {approx = true} : vector<8x1xf32> -> vector<8x1xf32>
    %86 = vector.broadcast %85 : vector<8x1xf32> to vector<8x8xf32>
    %87 = arith.mulf %82, %86 : vector<8x8xf32>
    %88 = arith.truncf %87 : vector<8x8xf32> to vector<8x8xbf16>
    %cst_45 = arith.constant dense<0.000000e+00> : vector<8x8xf32>
    %89 = tpu.matmul %88, %74, %cst_45 {dimension_numbers = #tpu.dot_dimension_numbers<[1], [0], [0], [1], [0, 0, 1, 1], [], []>} : vector<8x8xbf16>, vector<8x8xbf16>, vector<8x8xf32> -> vector<8x8xf32>
    %90 = arith.truncf %89 : vector<8x8xf32> to vector<8x8xbf16>
    %c0_46 = arith.constant 0 : index
    %c0_47 = arith.constant 0 : index
    %c8_48 = arith.constant 8 : index
    %91 = vector.load %arg11[%c0_46, %c0_47, %c8_48] : memref<2x8x32xbf16, #tpu.memory_space<vmem>>, vector<1x8x8xbf16>
    %92 = vector.shape_cast %91 : vector<1x8x8xbf16> to vector<8x8xbf16>
    %93 = vector.shape_cast %90 : vector<8x8xbf16> to vector<1x8x8xbf16>
    tpu.vector_store %arg11[%c0_46, %c0_47, %c8_48], %93 {strides = array<i32>} : memref<2x8x32xbf16, #tpu.memory_space<vmem>>, vector<1x8x8xbf16>,
    %c0_49 = arith.constant 0 : index
    %c0_50 = arith.constant 0 : index
    %c16 = arith.constant 16 : index
    %94 = vector.load %arg10[%c0_49, %c0_50, %c16] : memref<2x8x96xbf16, #tpu.memory_space<vmem>>, vector<1x8x8xbf16>
    %95 = vector.shape_cast %94 : vector<1x8x8xbf16> to vector<8x8xbf16>
    %c0_51 = arith.constant 0 : index
    %c0_52 = arith.constant 0 : index
    %c48 = arith.constant 48 : index
    %96 = vector.load %arg10[%c0_51, %c0_52, %c48] : memref<2x8x96xbf16, #tpu.memory_space<vmem>>, vector<1x8x8xbf16>
    %97 = vector.shape_cast %96 : vector<1x8x8xbf16> to vector<8x8xbf16>
    %c0_53 = arith.constant 0 : index
    %c0_54 = arith.constant 0 : index
    %c80 = arith.constant 80 : index
    %98 = vector.load %arg10[%c0_53, %c0_54, %c80] : memref<2x8x96xbf16, #tpu.memory_space<vmem>>, vector<1x8x8xbf16>
    %99 = vector.shape_cast %98 : vector<1x8x8xbf16> to vector<8x8xbf16>
    %cst_55 = arith.constant dense<0.000000e+00> : vector<8x8xf32>
    %100 = tpu.matmul %95, %97, %cst_55 {dimension_numbers = #tpu.dot_dimension_numbers<[1], [1], [0], [0], [0, 0, 1, 0], [], []>} : vector<8x8xbf16>, vector<8x8xbf16>, vector<8x8xf32> -> vector<8x8xf32>
    %101 = vector.broadcast %43 : vector<1x8xf32> to vector<8x8xf32>
    %102 = arith.addf %100, %101 : vector<8x8xf32>
    %cst_56 = arith.constant dense<0xFF800000> : vector<8xf32>
    %103 = vector.multi_reduction <maximumf>, %102, %cst_56 [1] : vector<8x8xf32> to vector<8xf32>
    %104 = vector.shape_cast %103 : vector<8xf32> to vector<8x1xf32>
    %105 = vector.broadcast %104 : vector<8x1xf32> to vector<8x8xf32>
    %106 = arith.subf %102, %105 : vector<8x8xf32>
    %107 = math.exp %106 : vector<8x8xf32>
    %cst_57 = arith.constant dense<0.000000e+00> : vector<8xf32>
    %108 = vector.multi_reduction <add>, %107, %cst_57 [1] : vector<8x8xf32> to vector<8xf32>
    %109 = vector.shape_cast %108 : vector<8xf32> to vector<8x1xf32>
    %110 = tpu.reciprocal %109 {approx = true} : vector<8x1xf32> -> vector<8x1xf32>
    %111 = vector.broadcast %110 : vector<8x1xf32> to vector<8x8xf32>
    %112 = arith.mulf %107, %111 : vector<8x8xf32>
    %113 = arith.truncf %112 : vector<8x8xf32> to vector<8x8xbf16>
    %cst_58 = arith.constant dense<0.000000e+00> : vector<8x8xf32>
    %114 = tpu.matmul %113, %99, %cst_58 {dimension_numbers = #tpu.dot_dimension_numbers<[1], [0], [0], [1], [0, 0, 1, 1], [], []>} : vector<8x8xbf16>, vector<8x8xbf16>, vector<8x8xf32> -> vector<8x8xf32>
    %115 = arith.truncf %114 : vector<8x8xf32> to vector<8x8xbf16>
    %c0_59 = arith.constant 0 : index
    %c0_60 = arith.constant 0 : index
    %c16_61 = arith.constant 16 : index
    %116 = vector.load %arg11[%c0_59, %c0_60, %c16_61] : memref<2x8x32xbf16, #tpu.memory_space<vmem>>, vector<1x8x8xbf16>
    %117 = vector.shape_cast %116 : vector<1x8x8xbf16> to vector<8x8xbf16>
    %118 = vector.shape_cast %115 : vector<8x8xbf16> to vector<1x8x8xbf16>
    tpu.vector_store %arg11[%c0_59, %c0_60, %c16_61], %118 {strides = array<i32>} : memref<2x8x32xbf16, #tpu.memory_space<vmem>>, vector<1x8x8xbf16>,
    %c0_62 = arith.constant 0 : index
    %c0_63 = arith.constant 0 : index
    %c24 = arith.constant 24 : index
    %119 = vector.load %arg10[%c0_62, %c0_63, %c24] : memref<2x8x96xbf16, #tpu.memory_space<vmem>>, vector<1x8x8xbf16>
    %120 = vector.shape_cast %119 : vector<1x8x8xbf16> to vector<8x8xbf16>
    %c0_64 = arith.constant 0 : index
    %c0_65 = arith.constant 0 : index
    %c56 = arith.constant 56 : index
    %121 = vector.load %arg10[%c0_64, %c0_65, %c56] : memref<2x8x96xbf16, #tpu.memory_space<vmem>>, vector<1x8x8xbf16>
    %122 = vector.shape_cast %121 : vector<1x8x8xbf16> to vector<8x8xbf16>
    %c0_66 = arith.constant 0 : index
    %c0_67 = arith.constant 0 : index
    %c88 = arith.constant 88 : index
    %123 = vector.load %arg10[%c0_66, %c0_67, %c88] : memref<2x8x96xbf16, #tpu.memory_space<vmem>>, vector<1x8x8xbf16>
    %124 = vector.shape_cast %123 : vector<1x8x8xbf16> to vector<8x8xbf16>
    %cst_68 = arith.constant dense<0.000000e+00> : vector<8x8xf32>
    %125 = tpu.matmul %120, %122, %cst_68 {dimension_numbers = #tpu.dot_dimension_numbers<[1], [1], [0], [0], [0, 0, 1, 0], [], []>} : vector<8x8xbf16>, vector<8x8xbf16>, vector<8x8xf32> -> vector<8x8xf32>
    %126 = vector.broadcast %43 : vector<1x8xf32> to vector<8x8xf32>
    %127 = arith.addf %125, %126 : vector<8x8xf32>
    %cst_69 = arith.constant dense<0xFF800000> : vector<8xf32>
    %128 = vector.multi_reduction <maximumf>, %127, %cst_69 [1] : vector<8x8xf32> to vector<8xf32>
    %129 = vector.shape_cast %128 : vector<8xf32> to vector<8x1xf32>
    %130 = vector.broadcast %129 : vector<8x1xf32> to vector<8x8xf32>
    %131 = arith.subf %127, %130 : vector<8x8xf32>
    %132 = math.exp %131 : vector<8x8xf32>
    %cst_70 = arith.constant dense<0.000000e+00> : vector<8xf32>
    %133 = vector.multi_reduction <add>, %132, %cst_70 [1] : vector<8x8xf32> to vector<8xf32>
    %134 = vector.shape_cast %133 : vector<8xf32> to vector<8x1xf32>
    %135 = tpu.reciprocal %134 {approx = true} : vector<8x1xf32> -> vector<8x1xf32>
    %136 = vector.broadcast %135 : vector<8x1xf32> to vector<8x8xf32>
    %137 = arith.mulf %132, %136 : vector<8x8xf32>
    %138 = arith.truncf %137 : vector<8x8xf32> to vector<8x8xbf16>
    %cst_71 = arith.constant dense<0.000000e+00> : vector<8x8xf32>
    %139 = tpu.matmul %138, %124, %cst_71 {dimension_numbers = #tpu.dot_dimension_numbers<[1], [0], [0], [1], [0, 0, 1, 1], [], []>} : vector<8x8xbf16>, vector<8x8xbf16>, vector<8x8xf32> -> vector<8x8xf32>
    %140 = arith.truncf %139 : vector<8x8xf32> to vector<8x8xbf16>
    %c0_72 = arith.constant 0 : index
    %c0_73 = arith.constant 0 : index
    %c24_74 = arith.constant 24 : index
    %141 = vector.load %arg11[%c0_72, %c0_73, %c24_74] : memref<2x8x32xbf16, #tpu.memory_space<vmem>>, vector<1x8x8xbf16>
    %142 = vector.shape_cast %141 : vector<1x8x8xbf16> to vector<8x8xbf16>
    %143 = vector.shape_cast %140 : vector<8x8xbf16> to vector<1x8x8xbf16>
    tpu.vector_store %arg11[%c0_72, %c0_73, %c24_74], %143 {strides = array<i32>} : memref<2x8x32xbf16, #tpu.memory_space<vmem>>, vector<1x8x8xbf16>,
    %c1 = arith.constant 1 : index
    %c0_75 = arith.constant 0 : index
    %c0_76 = arith.constant 0 : index
    %144 = vector.load %arg10[%c1, %c0_75, %c0_76] : memref<2x8x96xbf16, #tpu.memory_space<vmem>>, vector<1x8x8xbf16>
    %145 = vector.shape_cast %144 : vector<1x8x8xbf16> to vector<8x8xbf16>
    %c1_77 = arith.constant 1 : index
    %c0_78 = arith.constant 0 : index
    %c32_79 = arith.constant 32 : index
    %146 = vector.load %arg10[%c1_77, %c0_78, %c32_79] : memref<2x8x96xbf16, #tpu.memory_space<vmem>>, vector<1x8x8xbf16>
    %147 = vector.shape_cast %146 : vector<1x8x8xbf16> to vector<8x8xbf16>
    %c1_80 = arith.constant 1 : index
    %c0_81 = arith.constant 0 : index
    %c64_82 = arith.constant 64 : index
    %148 = vector.load %arg10[%c1_80, %c0_81, %c64_82] : memref<2x8x96xbf16, #tpu.memory_space<vmem>>, vector<1x8x8xbf16>
    %149 = vector.shape_cast %148 : vector<1x8x8xbf16> to vector<8x8xbf16>
    %cst_83 = arith.constant dense<0.000000e+00> : vector<8x8xf32>
    %150 = tpu.matmul %145, %147, %cst_83 {dimension_numbers = #tpu.dot_dimension_numbers<[1], [1], [0], [0], [0, 0, 1, 0], [], []>} : vector<8x8xbf16>, vector<8x8xbf16>, vector<8x8xf32> -> vector<8x8xf32>
    %151 = vector.broadcast %43 : vector<1x8xf32> to vector<8x8xf32>
    %152 = arith.addf %150, %151 : vector<8x8xf32>
    %cst_84 = arith.constant dense<0xFF800000> : vector<8xf32>
    %153 = vector.multi_reduction <maximumf>, %152, %cst_84 [1] : vector<8x8xf32> to vector<8xf32>
    %154 = vector.shape_cast %153 : vector<8xf32> to vector<8x1xf32>
    %155 = vector.broadcast %154 : vector<8x1xf32> to vector<8x8xf32>
    %156 = arith.subf %152, %155 : vector<8x8xf32>
    %157 = math.exp %156 : vector<8x8xf32>
    %cst_85 = arith.constant dense<0.000000e+00> : vector<8xf32>
    %158 = vector.multi_reduction <add>, %157, %cst_85 [1] : vector<8x8xf32> to vector<8xf32>
    %159 = vector.shape_cast %158 : vector<8xf32> to vector<8x1xf32>
    %160 = tpu.reciprocal %159 {approx = true} : vector<8x1xf32> -> vector<8x1xf32>
    %161 = vector.broadcast %160 : vector<8x1xf32> to vector<8x8xf32>
    %162 = arith.mulf %157, %161 : vector<8x8xf32>
    %163 = arith.truncf %162 : vector<8x8xf32> to vector<8x8xbf16>
    %cst_86 = arith.constant dense<0.000000e+00> : vector<8x8xf32>
    %164 = tpu.matmul %163, %149, %cst_86 {dimension_numbers = #tpu.dot_dimension_numbers<[1], [0], [0], [1], [0, 0, 1, 1], [], []>} : vector<8x8xbf16>, vector<8x8xbf16>, vector<8x8xf32> -> vector<8x8xf32>
    %165 = arith.truncf %164 : vector<8x8xf32> to vector<8x8xbf16>
    %c1_87 = arith.constant 1 : index
    %c0_88 = arith.constant 0 : index
    %c0_89 = arith.constant 0 : index
    %166 = vector.load %arg11[%c1_87, %c0_88, %c0_89] : memref<2x8x32xbf16, #tpu.memory_space<vmem>>, vector<1x8x8xbf16>
    %167 = vector.shape_cast %166 : vector<1x8x8xbf16> to vector<8x8xbf16>
    %168 = vector.shape_cast %165 : vector<8x8xbf16> to vector<1x8x8xbf16>
    tpu.vector_store %arg11[%c1_87, %c0_88, %c0_89], %168 {strides = array<i32>} : memref<2x8x32xbf16, #tpu.memory_space<vmem>>, vector<1x8x8xbf16>,
    %c1_90 = arith.constant 1 : index
    %c0_91 = arith.constant 0 : index
    %c8_92 = arith.constant 8 : index
    %169 = vector.load %arg10[%c1_90, %c0_91, %c8_92] : memref<2x8x96xbf16, #tpu.memory_space<vmem>>, vector<1x8x8xbf16>
    %170 = vector.shape_cast %169 : vector<1x8x8xbf16> to vector<8x8xbf16>
    %c1_93 = arith.constant 1 : index
    %c0_94 = arith.constant 0 : index
    %c40_95 = arith.constant 40 : index
    %171 = vector.load %arg10[%c1_93, %c0_94, %c40_95] : memref<2x8x96xbf16, #tpu.memory_space<vmem>>, vector<1x8x8xbf16>
    %172 = vector.shape_cast %171 : vector<1x8x8xbf16> to vector<8x8xbf16>
    %c1_96 = arith.constant 1 : index
    %c0_97 = arith.constant 0 : index
    %c72_98 = arith.constant 72 : index
    %173 = vector.load %arg10[%c1_96, %c0_97, %c72_98] : memref<2x8x96xbf16, #tpu.memory_space<vmem>>, vector<1x8x8xbf16>
    %174 = vector.shape_cast %173 : vector<1x8x8xbf16> to vector<8x8xbf16>
    %cst_99 = arith.constant dense<0.000000e+00> : vector<8x8xf32>
    %175 = tpu.matmul %170, %172, %cst_99 {dimension_numbers = #tpu.dot_dimension_numbers<[1], [1], [0], [0], [0, 0, 1, 0], [], []>} : vector<8x8xbf16>, vector<8x8xbf16>, vector<8x8xf32> -> vector<8x8xf32>
    %176 = vector.broadcast %43 : vector<1x8xf32> to vector<8x8xf32>
    %177 = arith.addf %175, %176 : vector<8x8xf32>
    %cst_100 = arith.constant dense<0xFF800000> : vector<8xf32>
    %178 = vector.multi_reduction <maximumf>, %177, %cst_100 [1] : vector<8x8xf32> to vector<8xf32>
    %179 = vector.shape_cast %178 : vector<8xf32> to vector<8x1xf32>
    %180 = vector.broadcast %179 : vector<8x1xf32> to vector<8x8xf32>
    %181 = arith.subf %177, %180 : vector<8x8xf32>
    %182 = math.exp %181 : vector<8x8xf32>
    %cst_101 = arith.constant dense<0.000000e+00> : vector<8xf32>
    %183 = vector.multi_reduction <add>, %182, %cst_101 [1] : vector<8x8xf32> to vector<8xf32>
    %184 = vector.shape_cast %183 : vector<8xf32> to vector<8x1xf32>
    %185 = tpu.reciprocal %184 {approx = true} : vector<8x1xf32> -> vector<8x1xf32>
    %186 = vector.broadcast %185 : vector<8x1xf32> to vector<8x8xf32>
    %187 = arith.mulf %182, %186 : vector<8x8xf32>
    %188 = arith.truncf %187 : vector<8x8xf32> to vector<8x8xbf16>
    %cst_102 = arith.constant dense<0.000000e+00> : vector<8x8xf32>
    %189 = tpu.matmul %188, %174, %cst_102 {dimension_numbers = #tpu.dot_dimension_numbers<[1], [0], [0], [1], [0, 0, 1, 1], [], []>} : vector<8x8xbf16>, vector<8x8xbf16>, vector<8x8xf32> -> vector<8x8xf32>
    %190 = arith.truncf %189 : vector<8x8xf32> to vector<8x8xbf16>
    %c1_103 = arith.constant 1 : index
    %c0_104 = arith.constant 0 : index
    %c8_105 = arith.constant 8 : index
    %191 = vector.load %arg11[%c1_103, %c0_104, %c8_105] : memref<2x8x32xbf16, #tpu.memory_space<vmem>>, vector<1x8x8xbf16>
    %192 = vector.shape_cast %191 : vector<1x8x8xbf16> to vector<8x8xbf16>
    %193 = vector.shape_cast %190 : vector<8x8xbf16> to vector<1x8x8xbf16>
    tpu.vector_store %arg11[%c1_103, %c0_104, %c8_105], %193 {strides = array<i32>} : memref<2x8x32xbf16, #tpu.memory_space<vmem>>, vector<1x8x8xbf16>,
    %c1_106 = arith.constant 1 : index
    %c0_107 = arith.constant 0 : index
    %c16_108 = arith.constant 16 : index
    %194 = vector.load %arg10[%c1_106, %c0_107, %c16_108] : memref<2x8x96xbf16, #tpu.memory_space<vmem>>, vector<1x8x8xbf16>
    %195 = vector.shape_cast %194 : vector<1x8x8xbf16> to vector<8x8xbf16>
    %c1_109 = arith.constant 1 : index
    %c0_110 = arith.constant 0 : index
    %c48_111 = arith.constant 48 : index
    %196 = vector.load %arg10[%c1_109, %c0_110, %c48_111] : memref<2x8x96xbf16, #tpu.memory_space<vmem>>, vector<1x8x8xbf16>
    %197 = vector.shape_cast %196 : vector<1x8x8xbf16> to vector<8x8xbf16>
    %c1_112 = arith.constant 1 : index
    %c0_113 = arith.constant 0 : index
    %c80_114 = arith.constant 80 : index
    %198 = vector.load %arg10[%c1_112, %c0_113, %c80_114] : memref<2x8x96xbf16, #tpu.memory_space<vmem>>, vector<1x8x8xbf16>
    %199 = vector.shape_cast %198 : vector<1x8x8xbf16> to vector<8x8xbf16>
    %cst_115 = arith.constant dense<0.000000e+00> : vector<8x8xf32>
    %200 = tpu.matmul %195, %197, %cst_115 {dimension_numbers = #tpu.dot_dimension_numbers<[1], [1], [0], [0], [0, 0, 1, 0], [], []>} : vector<8x8xbf16>, vector<8x8xbf16>, vector<8x8xf32> -> vector<8x8xf32>
    %201 = vector.broadcast %43 : vector<1x8xf32> to vector<8x8xf32>
    %202 = arith.addf %200, %201 : vector<8x8xf32>
    %cst_116 = arith.constant dense<0xFF800000> : vector<8xf32>
    %203 = vector.multi_reduction <maximumf>, %202, %cst_116 [1] : vector<8x8xf32> to vector<8xf32>
    %204 = vector.shape_cast %203 : vector<8xf32> to vector<8x1xf32>
    %205 = vector.broadcast %204 : vector<8x1xf32> to vector<8x8xf32>
    %206 = arith.subf %202, %205 : vector<8x8xf32>
    %207 = math.exp %206 : vector<8x8xf32>
    %cst_117 = arith.constant dense<0.000000e+00> : vector<8xf32>
    %208 = vector.multi_reduction <add>, %207, %cst_117 [1] : vector<8x8xf32> to vector<8xf32>
    %209 = vector.shape_cast %208 : vector<8xf32> to vector<8x1xf32>
    %210 = tpu.reciprocal %209 {approx = true} : vector<8x1xf32> -> vector<8x1xf32>
    %211 = vector.broadcast %210 : vector<8x1xf32> to vector<8x8xf32>
    %212 = arith.mulf %207, %211 : vector<8x8xf32>
    %213 = arith.truncf %212 : vector<8x8xf32> to vector<8x8xbf16>
    %cst_118 = arith.constant dense<0.000000e+00> : vector<8x8xf32>
    %214 = tpu.matmul %213, %199, %cst_118 {dimension_numbers = #tpu.dot_dimension_numbers<[1], [0], [0], [1], [0, 0, 1, 1], [], []>} : vector<8x8xbf16>, vector<8x8xbf16>, vector<8x8xf32> -> vector<8x8xf32>
    %215 = arith.truncf %214 : vector<8x8xf32> to vector<8x8xbf16>
    %c1_119 = arith.constant 1 : index
    %c0_120 = arith.constant 0 : index
    %c16_121 = arith.constant 16 : index
    %216 = vector.load %arg11[%c1_119, %c0_120, %c16_121] : memref<2x8x32xbf16, #tpu.memory_space<vmem>>, vector<1x8x8xbf16>
    %217 = vector.shape_cast %216 : vector<1x8x8xbf16> to vector<8x8xbf16>
    %218 = vector.shape_cast %215 : vector<8x8xbf16> to vector<1x8x8xbf16>
    tpu.vector_store %arg11[%c1_119, %c0_120, %c16_121], %218 {strides = array<i32>} : memref<2x8x32xbf16, #tpu.memory_space<vmem>>, vector<1x8x8xbf16>,
    %c1_122 = arith.constant 1 : index
    %c0_123 = arith.constant 0 : index
    %c24_124 = arith.constant 24 : index
    %219 = vector.load %arg10[%c1_122, %c0_123, %c24_124] : memref<2x8x96xbf16, #tpu.memory_space<vmem>>, vector<1x8x8xbf16>
    %220 = vector.shape_cast %219 : vector<1x8x8xbf16> to vector<8x8xbf16>
    %c1_125 = arith.constant 1 : index
    %c0_126 = arith.constant 0 : index
    %c56_127 = arith.constant 56 : index
    %221 = vector.load %arg10[%c1_125, %c0_126, %c56_127] : memref<2x8x96xbf16, #tpu.memory_space<vmem>>, vector<1x8x8xbf16>
    %222 = vector.shape_cast %221 : vector<1x8x8xbf16> to vector<8x8xbf16>
    %c1_128 = arith.constant 1 : index
    %c0_129 = arith.constant 0 : index
    %c88_130 = arith.constant 88 : index
    %223 = vector.load %arg10[%c1_128, %c0_129, %c88_130] : memref<2x8x96xbf16, #tpu.memory_space<vmem>>, vector<1x8x8xbf16>
    %224 = vector.shape_cast %223 : vector<1x8x8xbf16> to vector<8x8xbf16>
    %cst_131 = arith.constant dense<0.000000e+00> : vector<8x8xf32>
    %225 = tpu.matmul %220, %222, %cst_131 {dimension_numbers = #tpu.dot_dimension_numbers<[1], [1], [0], [0], [0, 0, 1, 0], [], []>} : vector<8x8xbf16>, vector<8x8xbf16>, vector<8x8xf32> -> vector<8x8xf32>
    %226 = vector.broadcast %43 : vector<1x8xf32> to vector<8x8xf32>
    %227 = arith.addf %225, %226 : vector<8x8xf32>
    %cst_132 = arith.constant dense<0xFF800000> : vector<8xf32>
    %228 = vector.multi_reduction <maximumf>, %227, %cst_132 [1] : vector<8x8xf32> to vector<8xf32>
    %229 = vector.shape_cast %228 : vector<8xf32> to vector<8x1xf32>
    %230 = vector.broadcast %229 : vector<8x1xf32> to vector<8x8xf32>
    %231 = arith.subf %227, %230 : vector<8x8xf32>
    %232 = math.exp %231 : vector<8x8xf32>
    %cst_133 = arith.constant dense<0.000000e+00> : vector<8xf32>
    %233 = vector.multi_reduction <add>, %232, %cst_133 [1] : vector<8x8xf32> to vector<8xf32>
    %234 = vector.shape_cast %233 : vector<8xf32> to vector<8x1xf32>
    %235 = tpu.reciprocal %234 {approx = true} : vector<8x1xf32> -> vector<8x1xf32>
    %236 = vector.broadcast %235 : vector<8x1xf32> to vector<8x8xf32>
    %237 = arith.mulf %232, %236 : vector<8x8xf32>
    %238 = arith.truncf %237 : vector<8x8xf32> to vector<8x8xbf16>
    %cst_134 = arith.constant dense<0.000000e+00> : vector<8x8xf32>
    %239 = tpu.matmul %238, %224, %cst_134 {dimension_numbers = #tpu.dot_dimension_numbers<[1], [0], [0], [1], [0, 0, 1, 1], [], []>} : vector<8x8xbf16>, vector<8x8xbf16>, vector<8x8xf32> -> vector<8x8xf32>
    %240 = arith.truncf %239 : vector<8x8xf32> to vector<8x8xbf16>
    %c1_135 = arith.constant 1 : index
    %c0_136 = arith.constant 0 : index
    %c24_137 = arith.constant 24 : index
    %241 = vector.load %arg11[%c1_135, %c0_136, %c24_137] : memref<2x8x32xbf16, #tpu.memory_space<vmem>>, vector<1x8x8xbf16>
    %242 = vector.shape_cast %241 : vector<1x8x8xbf16> to vector<8x8xbf16>
    %243 = vector.shape_cast %240 : vector<8x8xbf16> to vector<1x8x8xbf16>
    tpu.vector_store %arg11[%c1_135, %c0_136, %c24_137], %243 {strides = array<i32>} : memref<2x8x32xbf16, #tpu.memory_space<vmem>>, vector<1x8x8xbf16>,
    %c0_138 = arith.constant 0 : index
    %c0_139 = arith.constant 0 : index
    %c0_140 = arith.constant 0 : index
    %244 = vector.load %arg11[%c0_138, %c0_139, %c0_140] : memref<2x8x32xbf16, #tpu.memory_space<vmem>>, vector<2x8x32xbf16>
    %245 = vector.shape_cast %244 : vector<2x8x32xbf16> to vector<16x32xbf16>
    %c0_141 = arith.constant 0 : index
    %c0_142 = arith.constant 0 : index
    %c0_143 = arith.constant 0 : index
    %246 = vector.load %arg7[%c0_141, %c0_142, %c0_143] : memref<1x32x32xbf16, #tpu.memory_space<vmem>>, vector<1x32x32xbf16>
    %247 = vector.shape_cast %246 : vector<1x32x32xbf16> to vector<32x32xbf16>
    %cst_144 = arith.constant dense<0.000000e+00> : vector<16x32xf32>
    %248 = tpu.matmul %245, %247, %cst_144 {dimension_numbers = #tpu.dot_dimension_numbers<[1], [0], [0], [1], [0, 0, 1, 1], [], []>} : vector<16x32xbf16>, vector<32x32xbf16>, vector<16x32xf32> -> vector<16x32xf32>
    %c0_145 = arith.constant 0 : index
    %c0_146 = arith.constant 0 : index
    %c0_147 = arith.constant 0 : index
    %c0_148 = arith.constant 0 : index
    %249 = vector.load %arg2[%c0_145, %c0_146, %c0_147, %c0_148] : memref<1x2x8x32xbf16, #tpu.memory_space<vmem>>, vector<1x2x8x32xbf16>
    %250 = vector.shape_cast %249 : vector<1x2x8x32xbf16> to vector<2x8x32xbf16>
    %251 = vector.shape_cast %250 : vector<2x8x32xbf16> to vector<16x32xbf16>
    %c0_149 = arith.constant 0 : index
    %c0_150 = arith.constant 0 : index
    %252 = vector.load %arg8[%c0_149, %c0_150] : memref<1x32xf32, #tpu.memory_space<vmem>>, vector<1x32xf32>
    %253 = vector.broadcast %252 : vector<1x32xf32> to vector<16x32xf32>
    %254 = arith.addf %248, %253 : vector<16x32xf32>
    %255 = arith.extf %251 : vector<16x32xbf16> to vector<16x32xf32>
    %256 = arith.addf %254, %255 : vector<16x32xf32>
    %257 = vector.shape_cast %256 : vector<16x32xf32> to vector<2x8x32xf32>
    %258 = arith.truncf %257 : vector<2x8x32xf32> to vector<2x8x32xbf16>
    %c0_151 = arith.constant 0 : index
    %c0_152 = arith.constant 0 : index
    %c0_153 = arith.constant 0 : index
    %c0_154 = arith.constant 0 : index
    %259 = vector.load %arg9[%c0_151, %c0_152, %c0_153, %c0_154] : memref<1x2x8x32xbf16, #tpu.memory_space<vmem>>, vector<1x2x8x32xbf16>
    %260 = vector.shape_cast %259 : vector<1x2x8x32xbf16> to vector<2x8x32xbf16>
    %261 = vector.shape_cast %258 : vector<2x8x32xbf16> to vector<1x2x8x32xbf16>
    tpu.vector_store %arg9[%c0_151, %c0_152, %c0_153, %c0_154], %261 {strides = array<i32>} : memref<1x2x8x32xbf16, #tpu.memory_space<vmem>>, vector<1x2x8x32xbf16>,
    return
  }
  func.func @transform_0(%arg0: i32, %arg1: i32) -> (i32, i32, i32, i32) {
    %c0_i32 = arith.constant 0 : i32
    %c0_i32_0 = arith.constant 0 : i32
    %c0_i32_1 = arith.constant 0 : i32
    return %arg0, %arg1, %c0_i32, %c0_i32_0 : i32, i32, i32, i32
  }
  func.func @transform_1(%arg0: i32, %arg1: i32) -> (i32, i32) {
    %c0_i32 = arith.constant 0 : i32
    %c0_i32_0 = arith.constant 0 : i32
    %c0_i32_1 = arith.constant 0 : i32
    return %c0_i32, %c0_i32_0 : i32, i32
  }
  func.func @transform_2(%arg0: i32, %arg1: i32) -> (i32, i32) {
    %c0_i32 = arith.constant 0 : i32
    %c0_i32_0 = arith.constant 0 : i32
    %c0_i32_1 = arith.constant 0 : i32
    return %c0_i32, %c0_i32_0 : i32, i32
  }
  func.func @transform_3(%arg0: i32, %arg1: i32) -> (i32, i32, i32) {
    %c0_i32 = arith.constant 0 : i32
    %c0_i32_0 = arith.constant 0 : i32
    %c0_i32_1 = arith.constant 0 : i32
    return %arg0, %c0_i32, %c0_i32_0 : i32, i32, i32
  }
  func.func @transform_4(%arg0: i32, %arg1: i32) -> (i32, i32) {
    %c0_i32 = arith.constant 0 : i32
    %c0_i32_0 = arith.constant 0 : i32
    %c0_i32_1 = arith.constant 0 : i32
    return %c0_i32, %c0_i32_0 : i32, i32
  }
  func.func @transform_5(%arg0: i32, %arg1: i32) -> (i32, i32, i32) {
    %c0_i32 = arith.constant 0 : i32
    %c0_i32_0 = arith.constant 0 : i32
    %c0_i32_1 = arith.constant 0 : i32
    return %arg0, %c0_i32, %c0_i32_0 : i32, i32, i32
  }
  func.func @transform_6(%arg0: i32, %arg1: i32) -> (i32, i32) {
    %c0_i32 = arith.constant 0 : i32
    %c0_i32_0 = arith.constant 0 : i32
    %c0_i32_1 = arith.constant 0 : i32
    return %c0_i32, %c0_i32_0 : i32, i32
  }
  func.func @transform_7(%arg0: i32, %arg1: i32) -> (i32, i32, i32, i32) {
    %c0_i32 = arith.constant 0 : i32
    %c0_i32_0 = arith.constant 0 : i32
    %c0_i32_1 = arith.constant 0 : i32
    return %arg0, %arg1, %c0_i32, %c0_i32_0 : i32, i32, i32, i32
  }
}

module attributes {stable_mosaic.version = 11 : i64} {
  func.func @_head_kernel(%arg0: i32, %arg1: memref<1x2x32xbf16, #tpu.memory_space<vmem>>, %arg2: memref<1x32xf32, #tpu.memory_space<vmem>>, %arg3: memref<1x32xf32, #tpu.memory_space<vmem>>, %arg4: memref<1x32x10xbf16, #tpu.memory_space<vmem>>, %arg5: memref<1x1x10xf32, #tpu.memory_space<vmem>>, %arg6: memref<1x2x10xf32, #tpu.memory_space<vmem>>) attributes {dimension_semantics = [#tpu.dimension_semantics<parallel>], iteration_bounds = array<i64: 2>, scalar_prefetch = 0 : i64, scratch_operands = 0 : i64, tpu.core_type = #tpu.core_type<tc>, window_params = [{transform_indices = @transform_0, window_bounds = array<i64: 1, 2, 32>}, {pipeline_mode = #tpu.pipeline_mode<synchronous>, transform_indices = @transform_1, window_bounds = array<i64: 1, 32>}, {pipeline_mode = #tpu.pipeline_mode<synchronous>, transform_indices = @transform_2, window_bounds = array<i64: 1, 32>}, {transform_indices = @transform_3, window_bounds = array<i64: 1, 32, 10>}, {transform_indices = @transform_4, window_bounds = array<i64: 1, 1, 10>}, {transform_indices = @transform_5, window_bounds = array<i64: 1, 2, 10>}]} {
    %c0 = arith.constant 0 : index
    %c0_0 = arith.constant 0 : index
    %c0_1 = arith.constant 0 : index
    %0 = vector.load %arg1[%c0, %c0_0, %c0_1] : memref<1x2x32xbf16, #tpu.memory_space<vmem>>, vector<1x2x32xbf16>
    %1 = vector.shape_cast %0 : vector<1x2x32xbf16> to vector<2x32xbf16>
    %2 = arith.extf %1 : vector<2x32xbf16> to vector<2x32xf32>
    %c0_2 = arith.constant 0 : index
    %c0_3 = arith.constant 0 : index
    %3 = vector.load %arg2[%c0_2, %c0_3] : memref<1x32xf32, #tpu.memory_space<vmem>>, vector<1x32xf32>
    %c0_4 = arith.constant 0 : index
    %c0_5 = arith.constant 0 : index
    %4 = vector.load %arg3[%c0_4, %c0_5] : memref<1x32xf32, #tpu.memory_space<vmem>>, vector<1x32xf32>
    %cst = arith.constant dense<0.000000e+00> : vector<2xf32>
    %5 = vector.multi_reduction <add>, %2, %cst [1] : vector<2x32xf32> to vector<2xf32>
    %6 = vector.shape_cast %5 : vector<2xf32> to vector<2x1xf32>
    %cst_6 = arith.constant 3.200000e+01 : f32
    %7 = vector.broadcast %cst_6 : f32 to vector<2x1xf32>
    %8 = arith.divf %6, %7 : vector<2x1xf32>
    %9 = vector.broadcast %8 : vector<2x1xf32> to vector<2x32xf32>
    %10 = arith.subf %2, %9 : vector<2x32xf32>
    %11 = arith.mulf %10, %10 : vector<2x32xf32>
    %cst_7 = arith.constant dense<0.000000e+00> : vector<2xf32>
    %12 = vector.multi_reduction <add>, %11, %cst_7 [1] : vector<2x32xf32> to vector<2xf32>
    %13 = vector.shape_cast %12 : vector<2xf32> to vector<2x1xf32>
    %cst_8 = arith.constant 3.200000e+01 : f32
    %14 = vector.broadcast %cst_8 : f32 to vector<2x1xf32>
    %15 = arith.divf %13, %14 : vector<2x1xf32>
    %16 = vector.broadcast %8 : vector<2x1xf32> to vector<2x32xf32>
    %17 = arith.subf %2, %16 : vector<2x32xf32>
    %cst_9 = arith.constant 9.99999997E-7 : f32
    %18 = vector.broadcast %cst_9 : f32 to vector<2x1xf32>
    %19 = arith.addf %15, %18 : vector<2x1xf32>
    %20 = math.rsqrt %19 : vector<2x1xf32>
    %21 = vector.broadcast %20 : vector<2x1xf32> to vector<2x32xf32>
    %22 = arith.mulf %17, %21 : vector<2x32xf32>
    %23 = vector.broadcast %3 : vector<1x32xf32> to vector<2x32xf32>
    %24 = arith.mulf %22, %23 : vector<2x32xf32>
    %25 = vector.broadcast %4 : vector<1x32xf32> to vector<2x32xf32>
    %26 = arith.addf %24, %25 : vector<2x32xf32>
    %27 = arith.truncf %26 : vector<2x32xf32> to vector<2x32xbf16>
    %c0_10 = arith.constant 0 : index
    %c0_11 = arith.constant 0 : index
    %c0_12 = arith.constant 0 : index
    %28 = vector.load %arg4[%c0_10, %c0_11, %c0_12] : memref<1x32x10xbf16, #tpu.memory_space<vmem>>, vector<1x32x10xbf16>
    %29 = vector.shape_cast %28 : vector<1x32x10xbf16> to vector<32x10xbf16>
    %cst_13 = arith.constant dense<0.000000e+00> : vector<2x10xf32>
    %30 = tpu.matmul %27, %29, %cst_13 {dimension_numbers = #tpu.dot_dimension_numbers<[1], [0], [0], [1], [0, 0, 1, 1], [], []>} : vector<2x32xbf16>, vector<32x10xbf16>, vector<2x10xf32> -> vector<2x10xf32>
    %c0_14 = arith.constant 0 : index
    %c0_15 = arith.constant 0 : index
    %c0_16 = arith.constant 0 : index
    %31 = vector.load %arg5[%c0_14, %c0_15, %c0_16] : memref<1x1x10xf32, #tpu.memory_space<vmem>>, vector<1x1x10xf32>
    %32 = vector.shape_cast %31 : vector<1x1x10xf32> to vector<1x10xf32>
    %33 = vector.broadcast %32 : vector<1x10xf32> to vector<2x10xf32>
    %34 = arith.addf %30, %33 : vector<2x10xf32>
    %c0_17 = arith.constant 0 : index
    %c0_18 = arith.constant 0 : index
    %c0_19 = arith.constant 0 : index
    %35 = vector.load %arg6[%c0_17, %c0_18, %c0_19] : memref<1x2x10xf32, #tpu.memory_space<vmem>>, vector<1x2x10xf32>
    %36 = vector.shape_cast %35 : vector<1x2x10xf32> to vector<2x10xf32>
    %37 = vector.shape_cast %34 : vector<2x10xf32> to vector<1x2x10xf32>
    tpu.vector_store %arg6[%c0_17, %c0_18, %c0_19], %37 {strides = array<i32>} : memref<1x2x10xf32, #tpu.memory_space<vmem>>, vector<1x2x10xf32>,
    return
  }
  func.func @transform_0(%arg0: i32) -> (i32, i32, i32) {
    %c0_i32 = arith.constant 0 : i32
    %c0_i32_0 = arith.constant 0 : i32
    %c0_i32_1 = arith.constant 0 : i32
    return %arg0, %c0_i32, %c0_i32_0 : i32, i32, i32
  }
  func.func @transform_1(%arg0: i32) -> (i32, i32) {
    %c0_i32 = arith.constant 0 : i32
    %c0_i32_0 = arith.constant 0 : i32
    %c0_i32_1 = arith.constant 0 : i32
    return %c0_i32, %c0_i32_0 : i32, i32
  }
  func.func @transform_2(%arg0: i32) -> (i32, i32) {
    %c0_i32 = arith.constant 0 : i32
    %c0_i32_0 = arith.constant 0 : i32
    %c0_i32_1 = arith.constant 0 : i32
    return %c0_i32, %c0_i32_0 : i32, i32
  }
  func.func @transform_3(%arg0: i32) -> (i32, i32, i32) {
    %c0_i32 = arith.constant 0 : i32
    %c0_i32_0 = arith.constant 0 : i32
    %c0_i32_1 = arith.constant 0 : i32
    return %arg0, %c0_i32, %c0_i32_0 : i32, i32, i32
  }
  func.func @transform_4(%arg0: i32) -> (i32, i32, i32) {
    %c0_i32 = arith.constant 0 : i32
    %c0_i32_0 = arith.constant 0 : i32
    %c0_i32_1 = arith.constant 0 : i32
    return %arg0, %c0_i32, %c0_i32_0 : i32, i32, i32
  }
  func.func @transform_5(%arg0: i32) -> (i32, i32, i32) {
    %c0_i32 = arith.constant 0 : i32
    %c0_i32_0 = arith.constant 0 : i32
    %c0_i32_1 = arith.constant 0 : i32
    return %arg0, %c0_i32, %c0_i32_0 : i32, i32, i32
  }
}

</mosaic_0001>

<llo_original>
// kernel: tpu_custom_call.1
$region0: #{tpu_custom_call.1}
  #allocation0 [shape = 'u32[]', space=smem, size = 0x4, offset = 0x4, fixed_abs, tag = 'smem constant byte address 0x4 - core index']
  #allocation1 [shape = 'u32[144,128]{1,0:T(1,128)}', space=vmem, size = 0x12000, scoped, tag = 'internal scratch']
  %s0 = inlined_call_operand.hbm [shape: f32[8,128], index: 0, kind: input, shape index: {}]
  %s1 = inlined_call_operand.hbm [shape: f32[8,128], index: 1, kind: output, shape index: {}]
  %s2 = sld [smem:[#allocation0]]
  $region18: #{tpu_custom_call.1} parent=0
    _
  %s4 = ssub.s32 1, %s2
  %s5 = scalar_select 0, %s4, %s2
  $region1: #{tpu_custom_call.1} parent=0
    #allocation2 [shape = 'u8[4096]{0}', space=vmem, size = 0x1000, scoped, tag = 'input window, operand 0, single buffered']
    #allocation3 [shape = 's32[1]{0}', space=sflag, size = 0x4, scoped, tag = 'scoped memory for tpu_custom_call.1']
    #allocation4 [shape = 's32[1]{0}', space=sflag, size = 0x4, scoped, tag = 'scoped memory for tpu_custom_call.1']
    #allocation5 [shape = 'u8[4096]{0}', space=vmem, size = 0x1000, scoped, tag = 'output window, operand 0, single buffered']
    %6 = vsyncpa [#allocation3], 0
    %7 = vsyncpa [#allocation4], 0
    // Predicated region
    $region2: #{tpu_custom_call.1} parent=1 // pred_check
      _
    $region3: #{tpu_custom_call.1} parent=1 // pred_check_branch
      %9 = sbr.rel (0) target = $region5
    $region4: #{tpu_custom_call.1} parent=1 // pred_region
      %s11 = ssub.s32 128, 128
      %12 = vsyncadd [#allocation3], %s11
      %s14 = sshll.u32 [#allocation2], 4
      %s15 = int_to_ptr.vmem [resolvable:$true] %s14
      %17 = dma.hbm_to_vmem [thread:$0]  %s0, 128, %s15, [#allocation3]
    $region5: #{tpu_custom_call.1} parent=1 // pred_fallthru
      _
    // Predicated region
    $region6: #{tpu_custom_call.1} parent=1 // pred_check
      _
    $region7: #{tpu_custom_call.1} parent=1 // pred_check_branch
      %19 = sbr.rel (0) target = $region9
    $region8: #{tpu_custom_call.1} parent=1 // pred_region
      %20 = dma.done [#allocation3], 128
    $region9: #{tpu_custom_call.1} parent=1 // pred_fallthru
      _
    %v21 = vld [vmem:[#allocation2] sm:$0xff]
    %22 = vst [vmem:[#allocation5] sm:$0xff] %v21
    // Predicated region
    $region10: #{tpu_custom_call.1} parent=1 // pred_check
      _
    $region11: #{tpu_custom_call.1} parent=1 // pred_check_branch
      %24 = sbr.rel (0) target = $region13
    $region12: #{tpu_custom_call.1} parent=1 // pred_region
      %s26 = ssub.s32 128, 128
      %27 = vsyncadd [#allocation4], %s26
      %s29 = sshll.u32 [#allocation5], 4
      %s30 = int_to_ptr.vmem [resolvable:$true] %s29
      %32 = dma.vmem_to_hbm [thread:$0]  %s30, 128, %s1, [#allocation4]
    $region13: #{tpu_custom_call.1} parent=1 // pred_fallthru
      _
    // Predicated region
    $region14: #{tpu_custom_call.1} parent=1 // pred_check
      _
    $region15: #{tpu_custom_call.1} parent=1 // pred_check_branch
      %34 = sbr.rel (0) target = $region17
    $region16: #{tpu_custom_call.1} parent=1 // pred_region
      %35 = dma.done [#allocation4], 128
    $region17: #{tpu_custom_call.1} parent=1 // pred_fallthru
      _
    %36 = vsyncpa [#allocation3], 1
    %37 = vsyncpa [#allocation4], 1

// kernel: lora_ensemble_forward.6
$region0: #{lora_ensemble_forward.6}
  #allocation0 [shape = 'u32[]', space=smem, size = 0x4, offset = 0x4, fixed_abs, tag = 'smem constant byte address 0x4 - core index']
  #allocation1 [shape = 'u32[144,128]{1,0:T(1,128)}', space=vmem, size = 0x12000, scoped, tag = 'internal scratch']
  %s0 = inlined_call_operand.vmem [shape: bf16[2,8,192], index: 0, kind: input, shape index: {}]
  %s1 = inlined_call_operand.vmem [shape: bf16[192,32], index: 1, kind: input, shape index: {}]
  %s2 = inlined_call_operand.vmem [shape: f32[8,32], index: 2, kind: input, shape index: {}]
  %s3 = inlined_call_operand.vmem [shape: bf16[2,8,32], index: 3, kind: output, shape index: {}]
  %s4 = sld [smem:[#allocation0]]
  $region22: #{lora_ensemble_forward.6} parent=0
    _
  %s6 = ssub.s32 1, %s4
  %s7 = scalar_select 0, %s6, %s4
  // Predicated region
  $region2: #{lora_ensemble_forward.6} parent=0 // pred_check
    _
  $region3: #{lora_ensemble_forward.6} parent=0 // pred_check_branch
    %9 = sbr.rel (0) target = $region5
  $region4: #{lora_ensemble_forward.6} parent=0 // pred_region
    _
  $region5: #{lora_ensemble_forward.6} parent=0 // pred_fallthru
    _
  // Predicated region
  $region6: #{lora_ensemble_forward.6} parent=0 // pred_check
    _
  $region7: #{lora_ensemble_forward.6} parent=0 // pred_check_branch
    %11 = sbr.rel (0) target = $region9
  $region8: #{lora_ensemble_forward.6} parent=0 // pred_region
    _
  $region9: #{lora_ensemble_forward.6} parent=0 // pred_fallthru
    _
  // Predicated region
  $region10: #{lora_ensemble_forward.6} parent=0 // pred_check
    _
  $region11: #{lora_ensemble_forward.6} parent=0 // pred_check_branch
    %13 = sbr.rel (0) target = $region13
  $region12: #{lora_ensemble_forward.6} parent=0 // pred_region
    _
  $region13: #{lora_ensemble_forward.6} parent=0 // pred_fallthru
    _
  %v15 = vld [vmem:[%s0] sm:$0xff]
  %v16 = vld [vmem:[%s0 + $0x8] sm:$0xff]
  %v17 = vld [vmem:[%s1] sm:$0xf]
  %v18 = vld [vmem:[%s1 + $0x4] sm:$0xf]
  %v19 = vld [vmem:[%s1 + $0x8] sm:$0xf]
  %v20 = vld [vmem:[%s1 + $0xc] sm:$0xf]
  %v21 = vld [vmem:[%s1 + $0x10] sm:$0xf]
  %v22 = vld [vmem:[%s1 + $0x14] sm:$0xf]
  %v23 = vld [vmem:[%s1 + $0x18] sm:$0xf]
  %v24 = vld [vmem:[%s1 + $0x1c] sm:$0xf]
  %v25 = vld [vmem:[%s1 + $0x20] sm:$0xf]
  %v26 = vld [vmem:[%s1 + $0x24] sm:$0xf]
  %v27 = vld [vmem:[%s1 + $0x28] sm:$0xf]
  %v28 = vld [vmem:[%s1 + $0x2c] sm:$0xf]
  %v29 = vld [vmem:[%s1 + $0x30] sm:$0xf]
  %v30 = vld [vmem:[%s1 + $0x34] sm:$0xf]
  %v31 = vld [vmem:[%s1 + $0x38] sm:$0xf]
  %v32 = vld [vmem:[%s1 + $0x3c] sm:$0xf]
  %v33 = vld [vmem:[%s1 + $0x40] sm:$0xf]
  %v34 = vld [vmem:[%s1 + $0x44] sm:$0xf]
  %v35 = vld [vmem:[%s1 + $0x48] sm:$0xf]
  %v36 = vld [vmem:[%s1 + $0x4c] sm:$0xf]
  %v37 = vld [vmem:[%s1 + $0x50] sm:$0xf]
  %v38 = vld [vmem:[%s1 + $0x54] sm:$0xf]
  %v39 = vld [vmem:[%s1 + $0x58] sm:$0xf]
  %v40 = vld [vmem:[%s1 + $0x5c] sm:$0xf]
  %v43 = vunpack.c.l.b16 %v15
  %v44 = vunpack.c.h.b16 %v15
  %v45 = vunpack.c.l.b16 %v16
  %v46 = vunpack.c.h.b16 %v16
  %v47 = vpack.c.b16 %v45, %v43
  %v48 = vpack.c.b16 %v46, %v44
  %v74 = vunpack.c.l.b16 %v17
  %v75 = vunpack.c.l.b16 %v18
  %v76 = vunpack.c.l.b16 %v19
  %v77 = vunpack.c.l.b16 %v20
  %v78 = vunpack.c.l.b16 %v21
  %v79 = vunpack.c.l.b16 %v22
  %v80 = vunpack.c.l.b16 %v23
  %v81 = vunpack.c.l.b16 %v24
  %v82 = vunpack.c.l.b16 %v25
  %v83 = vunpack.c.l.b16 %v26
  %v84 = vunpack.c.l.b16 %v27
  %v85 = vunpack.c.l.b16 %v28
  %v86 = vunpack.c.l.b16 %v29
  %v87 = vunpack.c.l.b16 %v30
  %v88 = vunpack.c.l.b16 %v31
  %v89 = vunpack.c.l.b16 %v32
  %v90 = vunpack.c.l.b16 %v33
  %v91 = vunpack.c.l.b16 %v34
  %v92 = vunpack.c.l.b16 %v35
  %v93 = vunpack.c.l.b16 %v36
  %v94 = vunpack.c.l.b16 %v37
  %v95 = vunpack.c.l.b16 %v38
  %v96 = vunpack.c.l.b16 %v39
  %v97 = vunpack.c.l.b16 %v40
  %v98 = vpack.c.b16 %v75, %v74
  %v99 = vpack.c.b16 %v77, %v76
  %v100 = vpack.c.b16 %v79, %v78
  %v101 = vpack.c.b16 %v81, %v80
  %v102 = vpack.c.b16 %v83, %v82
  %v103 = vpack.c.b16 %v85, %v84
  %v104 = vpack.c.b16 %v87, %v86
  %v105 = vpack.c.b16 %v89, %v88
  %v106 = vpack.c.b16 %v91, %v90
  %v107 = vpack.c.b16 %v93, %v92
  %v108 = vpack.c.b16 %v95, %v94
  %v109 = vpack.c.b16 %v97, %v96
  %vm122 = vcmask 523264
  %v124 = vsel %vm122, %v48, 0
  %126 = vmatprep.subr.bf16.mxu0 0
  %127 = vmatpush1.bf16.msra.mxu0 %v105
  %128 = vmatprep.subr.bf16.mxu0 0
  %129 = vmatpush1.bf16.msra.mxu0 %v104
  %130 = vmatprep.subr.bf16.mxu0 0
  %131 = vmatpush1.bf16.msra.mxu0 %v103
  %132 = vmatprep.subr.bf16.mxu0 0
  %133 = vmatpush1.bf16.msra.mxu0 %v102
  %134 = vmatprep.subr.bf16.mxu0 0
  %135 = vmatpush1.bf16.msra.mxu0 %v101
  %136 = vmatprep.subr.bf16.mxu0 0
  %137 = vmatpush1.bf16.msra.mxu0 %v100
  %138 = vmatprep.subr.bf16.mxu0 0
  %139 = vmatpush1.bf16.msra.mxu0 %v99
  %140 = vmatprep.subr.bf16.mxu0 0
  %141 = vmatpush1.bf16.msra.mxu0 %v98
  %142 = vmatprep.subr.bf16.mxu0 0
  %143 = vmatpush2.bf16.msra.mxu0 0
  %144 = vmatprep.subr.bf16.mxu0 0
  %145 = vmatpush2.bf16.msra.mxu0 0
  %146 = vmatprep.subr.bf16.mxu0 0
  %147 = vmatpush2.bf16.msra.mxu0 0
  %148 = vmatprep.subr.bf16.mxu0 0
  %149 = vmatpush2.bf16.msra.mxu0 0
  %150 = vmatprep.subr.bf16.mxu0 0
  %151 = vmatpush2.bf16.msra.mxu0 %v109
  %152 = vmatprep.subr.bf16.mxu0 0
  %153 = vmatpush2.bf16.msra.mxu0 %v108
  %154 = vmatprep.subr.bf16.mxu0 0
  %155 = vmatpush2.bf16.msra.mxu0 %v107
  %156 = vmatprep.subr.bf16.mxu0 0
  %157 = vmatpush2.bf16.msra.mxu0 %v106
  %158 = vmatprep.mubr.bf16.mxu0 %v124
  %159 = vmatmul.mubr.bf16.gmra.mxu0 %v47
  %v160 = vpop.f32.mrf.mxu0
  %v161 = vadd.f32 0.0, %v160
  %v162 = vpop.f32.mrf.mxu0
  %v163 = vpop.f32.mrf.mxu0
  %v164 = vadd.f32 0.0, %v163
  %v165 = vpop.f32.mrf.mxu0
  %166 = vdwg.mxu0
  %v167 = vld [vmem:[%s2] sm:$0xff]
  %v168 = vadd.f32 %v161, %v167
  %v169 = vadd.f32 %v164, %v167
  %v170 = vpack.c.bf16 %v168, %v168
  %v171 = vpack.c.bf16 %v169, %v169
  %vm172 = vcmask 257024
  %173 = vst.msk [vmem:[%s3] sm:$0xf] %vm172, %v170
  %174 = vst.msk [vmem:[%s3 + $0x4] sm:$0xf] %vm172, %v171
  // Predicated region
  $region14: #{lora_ensemble_forward.6} parent=0 // pred_check
    _
  $region15: #{lora_ensemble_forward.6} parent=0 // pred_check_branch
    %176 = sbr.rel (0) target = $region17
  $region16: #{lora_ensemble_forward.6} parent=0 // pred_region
    _
  $region17: #{lora_ensemble_forward.6} parent=0 // pred_fallthru
    _
  // Predicated region
  $region18: #{lora_ensemble_forward.6} parent=0 // pred_check
    _
  $region19: #{lora_ensemble_forward.6} parent=0 // pred_check_branch
    %178 = sbr.rel (0) target = $region21
  $region20: #{lora_ensemble_forward.6} parent=0 // pred_region
    _
  $region21: #{lora_ensemble_forward.6} parent=0 // pred_fallthru
    _

// kernel: lora_ensemble_forward.8
$region0: #{lora_ensemble_forward.8}
  #allocation0 [shape = 'u32[]', space=smem, size = 0x4, offset = 0x4, fixed_abs, tag = 'smem constant byte address 0x4 - core index']
  #allocation1 [shape = 'u32[144,128]{1,0:T(1,128)}', space=vmem, size = 0x12000, scoped, tag = 'internal scratch']
  %s0 = inlined_call_operand.vmem [shape: bf16[2,2,8,32], index: 0, kind: input, shape index: {}]
  %s1 = inlined_call_operand.vmem [shape: f32[1,32], index: 1, kind: input, shape index: {}]
  %s2 = inlined_call_operand.vmem [shape: f32[1,32], index: 2, kind: input, shape index: {}]
  %s3 = inlined_call_operand.vmem [shape: bf16[32,64], index: 3, kind: input, shape index: {}]
  %s4 = inlined_call_operand.vmem [shape: f32[1,64], index: 4, kind: input, shape index: {}]
  %s5 = inlined_call_operand.vmem [shape: bf16[64,32], index: 5, kind: input, shape index: {}]
  %s6 = inlined_call_operand.vmem [shape: f32[1,32], index: 6, kind: input, shape index: {}]
  %s7 = inlined_call_operand.vmem [shape: bf16[2,2,8,32], index: 7, kind: output, shape index: {}]
  %s8 = sld [smem:[#allocation0]]
  $region61: #{lora_ensemble_forward.8} parent=0
    _
  %s10 = ssub.s32 1, %s8
  %s11 = scalar_select 0, %s10, %s8
  loop: start=0, step=1, limit=4
  $region2: #{lora_ensemble_forward.8} parent=0 // loop_pre_header
    _
  $region3: #{lora_ensemble_forward.8} parent=0 // loop_header
    %s13 = sphi 0, %s17
    %p14 = scmp.ge.s32.totalorder %s13, 4
    %s20 = sphi 0, %s32
    %s21 = sphi 0, %s28
    %s22 = sphi 0, %s20
    %s23 = sphi 0, %s21
    %s24 = sphi 0, %s22
    %s25 = sphi 0, %s23
    %s37 = sphi 0, %s39
    %s40 = sphi 0, %s37
    %s41 = sphi 0, %s40
    %s57 = sphi 0, %s41
    %s61 = sphi 0, %s61
    %s63 = sphi 0, %s61
    %s64 = sphi 0, %s63
    %s78 = sphi 0, %s64
    %s82 = sphi 0, %s82
    %s84 = sphi 0, %s82
    %s85 = sphi 0, %s84
    %s99 = sphi 0, %s85
    %s103 = sphi 0, %s103
    %s105 = sphi 0, %s103
    %s106 = sphi 0, %s105
    %s120 = sphi 0, %s106
    %s124 = sphi 0, %s124
    %s126 = sphi 0, %s124
    %s127 = sphi 0, %s126
    %s141 = sphi 0, %s127
    %s145 = sphi 0, %s145
    %s147 = sphi 0, %s145
    %s148 = sphi 0, %s147
    %s162 = sphi 0, %s148
    %s166 = sphi 0, %s166
    %s168 = sphi 0, %s166
    %s169 = sphi 0, %s168
    %s183 = sphi 0, %s169
    %s191 = sphi 0, %s193
    %s194 = sphi 0, %s191
    %s195 = sphi 0, %s194
    %s211 = sphi 0, %s195
  $region4: #{lora_ensemble_forward.8} parent=0 // loop_header_branch
    %16 = sbr.rel (%p14) target = $region8
  $region5: #{lora_ensemble_forward.8} parent=0 // loop_body
    %s18 = ssub.s32 %s13, 1
    %s19 = ssub.s32 %s13, 2
    %s26 = sadd.s32 1, %s21
    %p27 = scmp.ge.s32.totalorder %s26, 1
    %s28 = scalar_select %p27, 0, %s26
    %s29 = sadd.s32 1, %s20
    %s30 = scalar_select %p27, %s29, %s20
    %p31 = scmp.ge.s32.totalorder %s30, 2
    %s32 = scalar_select %p31, 0, %s30
    %s33 = ssub.s32 %s20, %s32
    %s34 = ssub.s32 %s21, %s28
    %s35 = sor.u32 %s33, %s34
    %p36 = scmp.eq.s32.totalorder %s35, 0
    %s38 = sadd.s32 %s37, 1
    %s39 = scalar_select %p36, %s37, %s38
    %p42 = pneg %p36
    %p43 = scmp.eq.s32.totalorder %s13, 1
    %p44 = por %p42, %p43
    %p45 = scmp.ne.s32.totalorder %s37, %s40
    %p46 = scmp.eq.s32.totalorder %s13, 0
    %p47 = por %p45, %p46
    %p48 = scmp.ne.s32.totalorder %s37, %s40
    %p49 = scmp.eq.s32.totalorder %s18, 1
    %p50 = por %p48, %p49
    %p51 = scmp.ne.s32.totalorder %s40, %s41
    %p52 = scmp.eq.s32.totalorder %s18, 0
    %p53 = por %p51, %p52
    %p54 = scmp.ne.s32.totalorder %s40, %s41
    %p55 = scmp.eq.s32.totalorder %s19, 1
    %p56 = por %p54, %p55
    %p58 = scmp.ne.s32.totalorder %s41, %s57
    %p59 = scmp.eq.s32.totalorder %s19, 0
    %p60 = por %p58, %p59
    %s62 = sadd.s32 %s61, 1
    %p65 = scmp.eq.s32.totalorder %s13, 1
    %p66 = scmp.ne.s32.totalorder %s61, %s63
    %p67 = scmp.eq.s32.totalorder %s13, 0
    %p68 = por %p66, %p67
    %p69 = scmp.ne.s32.totalorder %s61, %s63
    %p70 = scmp.eq.s32.totalorder %s18, 1
    %p71 = por %p69, %p70
    %p72 = scmp.ne.s32.totalorder %s63, %s64
    %p73 = scmp.eq.s32.totalorder %s18, 0
    %p74 = por %p72, %p73
    %p75 = scmp.ne.s32.totalorder %s63, %s64
    %p76 = scmp.eq.s32.totalorder %s19, 1
    %p77 = por %p75, %p76
    %p79 = scmp.ne.s32.totalorder %s64, %s78
    %p80 = scmp.eq.s32.totalorder %s19, 0
    %p81 = por %p79, %p80
    %s83 = sadd.s32 %s82, 1
    %p86 = scmp.eq.s32.totalorder %s13, 1
    %p87 = scmp.ne.s32.totalorder %s82, %s84
    %p88 = scmp.eq.s32.totalorder %s13, 0
    %p89 = por %p87, %p88
    %p90 = scmp.ne.s32.totalorder %s82, %s84
    %p91 = scmp.eq.s32.totalorder %s18, 1
    %p92 = por %p90, %p91
    %p93 = scmp.ne.s32.totalorder %s84, %s85
    %p94 = scmp.eq.s32.totalorder %s18, 0
    %p95 = por %p93, %p94
    %p96 = scmp.ne.s32.totalorder %s84, %s85
    %p97 = scmp.eq.s32.totalorder %s19, 1
    %p98 = por %p96, %p97
    %p100 = scmp.ne.s32.totalorder %s85, %s99
    %p101 = scmp.eq.s32.totalorder %s19, 0
    %p102 = por %p100, %p101
    %s104 = sadd.s32 %s103, 1
    %p107 = scmp.eq.s32.totalorder %s13, 1
    %p108 = scmp.ne.s32.totalorder %s103, %s105
    %p109 = scmp.eq.s32.totalorder %s13, 0
    %p110 = por %p108, %p109
    %p111 = scmp.ne.s32.totalorder %s103, %s105
    %p112 = scmp.eq.s32.totalorder %s18, 1
    %p113 = por %p111, %p112
    %p114 = scmp.ne.s32.totalorder %s105, %s106
    %p115 = scmp.eq.s32.totalorder %s18, 0
    %p116 = por %p114, %p115
    %p117 = scmp.ne.s32.totalorder %s105, %s106
    %p118 = scmp.eq.s32.totalorder %s19, 1
    %p119 = por %p117, %p118
    %p121 = scmp.ne.s32.totalorder %s106, %s120
    %p122 = scmp.eq.s32.totalorder %s19, 0
    %p123 = por %p121, %p122
    %s125 = sadd.s32 %s124, 1
    %p128 = scmp.eq.s32.totalorder %s13, 1
    %p129 = scmp.ne.s32.totalorder %s124, %s126
    %p130 = scmp.eq.s32.totalorder %s13, 0
    %p131 = por %p129, %p130
    %p132 = scmp.ne.s32.totalorder %s124, %s126
    %p133 = scmp.eq.s32.totalorder %s18, 1
    %p134 = por %p132, %p133
    %p135 = scmp.ne.s32.totalorder %s126, %s127
    %p136 = scmp.eq.s32.totalorder %s18, 0
    %p137 = por %p135, %p136
    %p138 = scmp.ne.s32.totalorder %s126, %s127
    %p139 = scmp.eq.s32.totalorder %s19, 1
    %p140 = por %p138, %p139
    %p142 = scmp.ne.s32.totalorder %s127, %s141
    %p143 = scmp.eq.s32.totalorder %s19, 0
    %p144 = por %p142, %p143
    %s146 = sadd.s32 %s145, 1
    %p149 = scmp.eq.s32.totalorder %s13, 1
    %p150 = scmp.ne.s32.totalorder %s145, %s147
    %p151 = scmp.eq.s32.totalorder %s13, 0
    %p152 = por %p150, %p151
    %p153 = scmp.ne.s32.totalorder %s145, %s147
    %p154 = scmp.eq.s32.totalorder %s18, 1
    %p155 = por %p153, %p154
    %p156 = scmp.ne.s32.totalorder %s147, %s148
    %p157 = scmp.eq.s32.totalorder %s18, 0
    %p158 = por %p156, %p157
    %p159 = scmp.ne.s32.totalorder %s147, %s148
    %p160 = scmp.eq.s32.totalorder %s19, 1
    %p161 = por %p159, %p160
    %p163 = scmp.ne.s32.totalorder %s148, %s162
    %p164 = scmp.eq.s32.totalorder %s19, 0
    %p165 = por %p163, %p164
    %s167 = sadd.s32 %s166, 1
    %p170 = scmp.eq.s32.totalorder %s13, 1
    %p171 = scmp.ne.s32.totalorder %s166, %s168
    %p172 = scmp.eq.s32.totalorder %s13, 0
    %p173 = por %p171, %p172
    %p174 = scmp.ne.s32.totalorder %s166, %s168
    %p175 = scmp.eq.s32.totalorder %s18, 1
    %p176 = por %p174, %p175
    %p177 = scmp.ne.s32.totalorder %s168, %s169
    %p178 = scmp.eq.s32.totalorder %s18, 0
    %p179 = por %p177, %p178
    %p180 = scmp.ne.s32.totalorder %s168, %s169
    %p181 = scmp.eq.s32.totalorder %s19, 1
    %p182 = por %p180, %p181
    %p184 = scmp.ne.s32.totalorder %s169, %s183
    %p185 = scmp.eq.s32.totalorder %s19, 0
    %p186 = por %p184, %p185
    %s187 = ssub.s32 %s20, %s32
    %s188 = ssub.s32 %s21, %s28
    %s189 = sor.u32 %s187, %s188
    %p190 = scmp.eq.s32.totalorder %s189, 0
    %s192 = sadd.s32 %s191, 1
    %s193 = scalar_select %p190, %s191, %s192
    %p196 = pneg %p190
    %p197 = scmp.eq.s32.totalorder %s13, 1
    %p198 = por %p196, %p197
    %p199 = scmp.ne.s32.totalorder %s191, %s194
    %p200 = scmp.eq.s32.totalorder %s13, 0
    %p201 = por %p199, %p200
    %p202 = scmp.ne.s32.totalorder %s191, %s194
    %p203 = scmp.eq.s32.totalorder %s18, 1
    %p204 = por %p202, %p203
    %p205 = scmp.ne.s32.totalorder %s194, %s195
    %p206 = scmp.eq.s32.totalorder %s18, 0
    %p207 = por %p205, %p206
    %p208 = scmp.ne.s32.totalorder %s194, %s195
    %p209 = scmp.eq.s32.totalorder %s19, 1
    %p210 = por %p208, %p209
    %p212 = scmp.ne.s32.totalorder %s195, %s211
    %p213 = scmp.eq.s32.totalorder %s19, 0
    %p214 = por %p212, %p213
    %p215 = scmp.le.s32.totalorder 1, %s13
    %p216 = scmp.lt.s32.totalorder %s13, 3
    %p217 = pnand %p215, %p216
    %p218 = pneg %p217
    // Predicated region
    $region9: #{lora_ensemble_forward.8} parent=5 // pred_check
      _
    $region10: #{lora_ensemble_forward.8} parent=5 // pred_check_branch
      %220 = sbr.rel (%p217) target = $region12
    $region11: #{lora_ensemble_forward.8} parent=5 // pred_region
      %s221 = ssub.s32 %s13, 1
      // Predicated region
      $region13: #{lora_ensemble_forward.8} parent=11 // pred_check
        %p222 = pneg %p74
      $region14: #{lora_ensemble_forward.8} parent=11 // pred_check_branch
        %224 = sbr.rel (%p222) target = $region16
      $region15: #{lora_ensemble_forward.8} parent=11 // pred_region
        _
      $region16: #{lora_ensemble_forward.8} parent=11 // pred_fallthru
        _
      // Predicated region
      $region17: #{lora_ensemble_forward.8} parent=11 // pred_check
        %p225 = pneg %p95
      $region18: #{lora_ensemble_forward.8} parent=11 // pred_check_branch
        %227 = sbr.rel (%p225) target = $region20
      $region19: #{lora_ensemble_forward.8} parent=11 // pred_region
        _
      $region20: #{lora_ensemble_forward.8} parent=11 // pred_fallthru
        _
      // Predicated region
      $region21: #{lora_ensemble_forward.8} parent=11 // pred_check
        %p228 = pneg %p116
      $region22: #{lora_ensemble_forward.8} parent=11 // pred_check_branch
        %230 = sbr.rel (%p228) target = $region24
      $region23: #{lora_ensemble_forward.8} parent=11 // pred_region
        _
      $region24: #{lora_ensemble_forward.8} parent=11 // pred_fallthru
        _
      // Predicated region
      $region25: #{lora_ensemble_forward.8} parent=11 // pred_check
        %p231 = pneg %p137
      $region26: #{lora_ensemble_forward.8} parent=11 // pred_check_branch
        %233 = sbr.rel (%p231) target = $region28
      $region27: #{lora_ensemble_forward.8} parent=11 // pred_region
        _
      $region28: #{lora_ensemble_forward.8} parent=11 // pred_fallthru
        _
      // Predicated region
      $region29: #{lora_ensemble_forward.8} parent=11 // pred_check
        %p234 = pneg %p158
      $region30: #{lora_ensemble_forward.8} parent=11 // pred_check_branch
        %236 = sbr.rel (%p234) target = $region32
      $region31: #{lora_ensemble_forward.8} parent=11 // pred_region
        _
      $region32: #{lora_ensemble_forward.8} parent=11 // pred_fallthru
        _
      // Predicated region
      $region33: #{lora_ensemble_forward.8} parent=11 // pred_check
        %p237 = pneg %p179
      $region34: #{lora_ensemble_forward.8} parent=11 // pred_check_branch
        %239 = sbr.rel (%p237) target = $region36
      $region35: #{lora_ensemble_forward.8} parent=11 // pred_region
        _
      $region36: #{lora_ensemble_forward.8} parent=11 // pred_fallthru
        _
    $region12: #{lora_ensemble_forward.8} parent=5 // pred_fallthru
      _
    %p240 = scmp.lt.s32.totalorder %s13, 2
    // Predicated region
    $region37: #{lora_ensemble_forward.8} parent=5 // pred_check
      %p241 = pneg %p240
    $region38: #{lora_ensemble_forward.8} parent=5 // pred_check_branch
      %243 = sbr.rel (%p241) target = $region40
    $region39: #{lora_ensemble_forward.8} parent=5 // pred_region
      // Predicated region
      $region41: #{lora_ensemble_forward.8} parent=39 // pred_check
        %p244 = pneg %p47
      $region42: #{lora_ensemble_forward.8} parent=39 // pred_check_branch
        %246 = sbr.rel (%p244) target = $region44
      $region43: #{lora_ensemble_forward.8} parent=39 // pred_region
        %s247 = smul.u32 2, %s21
        %p248 = scmp.lt.s32.totalorder %s20, 1
        %s249 = scalar_select %p248, %s20, 1
        %p250 = scmp.lt.s32.totalorder %s247, 1
        %s251 = scalar_select %p250, %s247, 1
        %s252 = smul.addr %s249, 2
        %s253 = sadd.s32 %s251, %s252
        %s254 = smul.addr %s253, 4
        %s255 = scalar_lea.vmem %s0, %s254
        %s256 = smul.u32 2, %s21
      $region44: #{lora_ensemble_forward.8} parent=39 // pred_fallthru
        _
    $region40: #{lora_ensemble_forward.8} parent=5 // pred_fallthru
      _
    %p257 = scmp.le.s32.totalorder 1, %s13
    %p258 = scmp.lt.s32.totalorder %s13, 3
    %p259 = pnand %p257, %p258
    %p260 = pneg %p259
    // Predicated region
    $region45: #{lora_ensemble_forward.8} parent=5 // pred_check
      _
    $region46: #{lora_ensemble_forward.8} parent=5 // pred_check_branch
      %262 = sbr.rel (%p259) target = $region48
    $region47: #{lora_ensemble_forward.8} parent=5 // pred_region
      %s263 = ssub.s32 %s13, 1
      %s264 = smul.u32 2, %s23
      %p265 = scmp.lt.s32.totalorder %s22, 1
      %s266 = scalar_select %p265, %s22, 1
      %p267 = scmp.lt.s32.totalorder %s264, 1
      %s268 = scalar_select %p267, %s264, 1
      %s269 = smul.addr %s266, 2
      %s270 = sadd.s32 %s268, %s269
      %s271 = smul.addr %s270, 4
      %s272 = scalar_lea.vmem %s0, %s271
      %p273 = pneg %p53
      %p274 = pneg %p50
      %p275 = pneg %p74
      %p276 = pneg %p71
      %p277 = pneg %p95
      %p278 = pneg %p92
      %p279 = pneg %p116
      %p280 = pneg %p113
      %p281 = pneg %p137
      %p282 = pneg %p134
      %p283 = pneg %p158
      %p284 = pneg %p155
      %p285 = pneg %p179
      %p286 = pneg %p176
      %p287 = pneg %p207
      %p288 = pneg %p204
      %s289 = smul.u32 2, %s23
      %p290 = scmp.lt.s32.totalorder %s22, 1
      %s291 = scalar_select %p290, %s22, 1
      %p292 = scmp.lt.s32.totalorder %s289, 1
      %s293 = scalar_select %p292, %s289, 1
      %s294 = smul.addr %s291, 2
      %s295 = sadd.s32 %s293, %s294
      %s296 = smul.addr %s295, 4
      %s297 = scalar_lea.vmem %s7, %s296
      %s298 = smul.u32 2, %s23
      %p299 = scmp.lt.s32.totalorder %s22, 1
      %s300 = scalar_select %p299, %s22, 1
      %p301 = scmp.lt.s32.totalorder %s298, 1
      %s302 = scalar_select %p301, %s298, 1
      %s303 = smul.addr %s300, 2
      %s304 = sadd.s32 %s302, %s303
      %s305 = smul.addr %s304, 4
      %s306 = scalar_lea.vmem %s0, %s305
      %s307 = smul.u32 2, %s23
      %s308 = smul.u32 2, %s23
      %p309 = scmp.lt.s32.totalorder %s22, 1
      %s310 = scalar_select %p309, %s22, 1
      %p311 = scmp.lt.s32.totalorder %s308, 1
      %s312 = scalar_select %p311, %s308, 1
      %s313 = smul.addr %s310, 2
      %s314 = sadd.s32 %s312, %s313
      %s315 = smul.addr %s314, 4
      %s316 = scalar_lea.vmem %s7, %s315
      %s317 = smul.u32 2, %s23
      %v319 = vld [vmem:[%s306] sm:$0xf]
      %v320 = vld [vmem:[%s306 + $0x4] sm:$0xf]
      %v321 = vunpack.c.l.bf16 %v319
      %v322 = vunpack.c.l.bf16 %v320
      %v323 = vld [vmem:[%s1] sm:$0x1]
      %v324 = vld [vmem:[%s2] sm:$0x1]
      %vm325 = vcmask 261120
      %v326 = vsel %vm325, %v321, 0.0
      %327 = vadd.xlane.f32.xlu0 %v326
      %v328 = vpop.xlane.xlu0 %327
      %v329 = vsel %vm325, %v322, 0.0
      %330 = vadd.xlane.f32.xlu0 %v329
      %v331 = vpop.xlane.xlu0 %330
      %v332 = vrcp.pop 32.0
      %v333 = vmul.f32 %v328, %v332
      %v334 = vmul.f32 %v331, %v332
      %v335 = vsub.f32 %v321, %v333
      %v336 = vsub.f32 %v322, %v334
      %v337 = vmul.f32 %v335, %v335
      %v338 = vmul.f32 %v336, %v336
      %v339 = vsel %vm325, %v337, 0.0
      %340 = vadd.xlane.f32.xlu0 %v339
      %v341 = vpop.xlane.xlu0 %340
      %v342 = vsel %vm325, %v338, 0.0
      %343 = vadd.xlane.f32.xlu0 %v342
      %v344 = vpop.xlane.xlu0 %343
      %v345 = vmul.f32 %v341, %v332
      %v346 = vmul.f32 %v344, %v332
      %v347 = vadd.f32 %v345, 1e-06
      %v348 = vadd.f32 %v346, 1e-06
      %v349 = vrsqrt.pop %v347
      %v350 = vrsqrt.pop %v348
      %v351 = vmul.f32 %v335, %v349
      %v352 = vmul.f32 %v336, %v350
      %v354 = vlaneseq
      %v355 = vshrl.u32 %v354, 7
      %v356 = vsub.s32 0, %v355
      %v357 = vrot.slane %v323, %v356
      %v359 = vmul.f32 %v351, %v357
      %v360 = vmul.f32 %v352, %v357
      %v362 = vlaneseq
      %v363 = vshrl.u32 %v362, 7
      %v364 = vsub.s32 0, %v363
      %v365 = vrot.slane %v324, %v364
      %v367 = vadd.f32 %v359, %v365
      %v368 = vadd.f32 %v360, %v365
      %v369 = vpack.c.bf16 %v368, %v367
      %v370 = vld [vmem:[%s3] sm:$0xf]
      %v371 = vld [vmem:[%s3 + $0x4] sm:$0xf]
      %v372 = vld [vmem:[%s3 + $0x8] sm:$0xf]
      %v373 = vld [vmem:[%s3 + $0xc] sm:$0xf]
      %v374 = vld [vmem:[%s4] sm:$0x1]
      %v376 = vlaneseq
      %v377 = vshrl.u32 %v376, 7
      %v378 = vsub.s32 0, %v377
      %v379 = vrot.slane %v374, %v378
      %v385 = vunpack.c.l.b16 %v370
      %v386 = vunpack.c.l.b16 %v371
      %v387 = vunpack.c.l.b16 %v372
      %v388 = vunpack.c.l.b16 %v373
      %v389 = vpack.c.b16 %v386, %v385
      %v390 = vpack.c.b16 %v388, %v387
      %v394 = vsel %vm325, %v369, 0
      %396 = vmatprep.subr.bf16.mxu0 0
      %397 = vmatpush1.bf16.msra.mxu0 0
      %398 = vmatprep.subr.bf16.mxu0 0
      %399 = vmatpush1.bf16.msra.mxu0 0
      %400 = vmatprep.subr.bf16.mxu0 0
      %401 = vmatpush1.bf16.msra.mxu0 0
      %402 = vmatprep.subr.bf16.mxu0 0
      %403 = vmatpush1.bf16.msra.mxu0 0
      %404 = vmatprep.subr.bf16.mxu0 0
      %405 = vmatpush1.bf16.msra.mxu0 0
      %406 = vmatprep.subr.bf16.mxu0 0
      %407 = vmatpush1.bf16.msra.mxu0 0
      %408 = vmatprep.subr.bf16.mxu0 0
      %409 = vmatpush1.bf16.msra.mxu0 %v390
      %410 = vmatprep.subr.bf16.mxu0 0
      %411 = vmatpush1.bf16.msra.mxu0 %v389
      %412 = vmatprep.subr.bf16.mxu0 0
      %413 = vmatpush2.bf16.msra.mxu0 0
      %414 = vmatprep.subr.bf16.mxu0 0
      %415 = vmatpush2.bf16.msra.mxu0 0
      %416 = vmatprep.subr.bf16.mxu0 0
      %417 = vmatpush2.bf16.msra.mxu0 0
      %418 = vmatprep.subr.bf16.mxu0 0
      %419 = vmatpush2.bf16.msra.mxu0 0
      %420 = vmatprep.subr.bf16.mxu0 0
      %421 = vmatpush2.bf16.msra.mxu0 0
      %422 = vmatprep.subr.bf16.mxu0 0
      %423 = vmatpush2.bf16.msra.mxu0 0
      %424 = vmatprep.subr.bf16.mxu0 0
      %425 = vmatpush2.bf16.msra.mxu0 0
      %426 = vmatprep.subr.bf16.mxu0 0
      %427 = vmatpush2.bf16.msra.mxu0 0
      %428 = vmatprep.mubr.bf16.mxu0 0
      %429 = vmatmul.mubr.bf16.gmra.mxu0 %v394
      %v430 = vpop.f32.mrf.mxu0
      %v431 = vadd.f32 %v379, %v430
      %v432 = vpop.f32.mrf.mxu0
      %v433 = vpop.f32.mrf.mxu0
      %v434 = vadd.f32 %v379, %v433
      %v435 = vpop.f32.mrf.mxu0
      %436 = vdwg.mxu0
      %v437 = vmul.f32 %v431, 0.5
      %v438 = vmul.f32 %v434, 0.5
      %v439 = vmul.f32 %v431, 0.044715
      %v440 = vmul.f32 %v434, 0.044715
      %v441 = vmul.f32 %v439, %v431
      %v442 = vmul.f32 %v440, %v434
      %v443 = vmul.f32 %v441, %v431
      %v444 = vmul.f32 %v442, %v434
      %v445 = vadd.f32 %v431, %v443
      %v446 = vadd.f32 %v434, %v444
      %v447 = vmul.f32 %v445, 0.7978846
      %v448 = vmul.f32 %v446, 0.7978846
      %v449 = vtanh.pop %v447
      %v450 = vtanh.pop %v448
      %v451 = vadd.f32 %v449, 1.0
      %v452 = vadd.f32 %v450, 1.0
      %v453 = vmul.f32 %v437, %v451
      %v454 = vmul.f32 %v438, %v452
      %v455 = vpack.c.bf16 %v454, %v453
      %v456 = vld [vmem:[%s5] sm:$0xf]
      %v457 = vld [vmem:[%s5 + $0x4] sm:$0xf]
      %v458 = vld [vmem:[%s5 + $0x8] sm:$0xf]
      %v459 = vld [vmem:[%s5 + $0xc] sm:$0xf]
      %v460 = vld [vmem:[%s5 + $0x10] sm:$0xf]
      %v461 = vld [vmem:[%s5 + $0x14] sm:$0xf]
      %v462 = vld [vmem:[%s5 + $0x18] sm:$0xf]
      %v463 = vld [vmem:[%s5 + $0x1c] sm:$0xf]
      %v464 = vld [vmem:[%s6] sm:$0x1]
      %v466 = vlaneseq
      %v467 = vshrl.u32 %v466, 7
      %v468 = vsub.s32 0, %v467
      %v469 = vrot.slane %v464, %v468
      %v479 = vunpack.c.l.b16 %v456
      %v480 = vunpack.c.l.b16 %v457
      %v481 = vunpack.c.l.b16 %v458
      %v482 = vunpack.c.l.b16 %v459
      %v483 = vunpack.c.l.b16 %v460
      %v484 = vunpack.c.l.b16 %v461
      %v485 = vunpack.c.l.b16 %v462
      %v486 = vunpack.c.l.b16 %v463
      %v487 = vpack.c.b16 %v480, %v479
      %v488 = vpack.c.b16 %v482, %v481
      %v489 = vpack.c.b16 %v484, %v483
      %v490 = vpack.c.b16 %v486, %v485
      %vm495 = vcmask 523264
      %v497 = vsel %vm495, %v455, 0
      %499 = vmatprep.subr.bf16.mxu0 0
      %500 = vmatpush1.bf16.msra.mxu0 0
      %501 = vmatprep.subr.bf16.mxu0 0
      %502 = vmatpush1.bf16.msra.mxu0 0
      %503 = vmatprep.subr.bf16.mxu0 0
      %504 = vmatpush1.bf16.msra.mxu0 0
      %505 = vmatprep.subr.bf16.mxu0 0
      %506 = vmatpush1.bf16.msra.mxu0 0
      %507 = vmatprep.subr.bf16.mxu0 0
      %508 = vmatpush1.bf16.msra.mxu0 %v490
      %509 = vmatprep.subr.bf16.mxu0 0
      %510 = vmatpush1.bf16.msra.mxu0 %v489
      %511 = vmatprep.subr.bf16.mxu0 0
      %512 = vmatpush1.bf16.msra.mxu0 %v488
      %513 = vmatprep.subr.bf16.mxu0 0
      %514 = vmatpush1.bf16.msra.mxu0 %v487
      %515 = vmatprep.subr.bf16.mxu0 0
      %516 = vmatpush2.bf16.msra.mxu0 0
      %517 = vmatprep.subr.bf16.mxu0 0
      %518 = vmatpush2.bf16.msra.mxu0 0
      %519 = vmatprep.subr.bf16.mxu0 0
      %520 = vmatpush2.bf16.msra.mxu0 0
      %521 = vmatprep.subr.bf16.mxu0 0
      %522 = vmatpush2.bf16.msra.mxu0 0
      %523 = vmatprep.subr.bf16.mxu0 0
      %524 = vmatpush2.bf16.msra.mxu0 0
      %525 = vmatprep.subr.bf16.mxu0 0
      %526 = vmatpush2.bf16.msra.mxu0 0
      %527 = vmatprep.subr.bf16.mxu0 0
      %528 = vmatpush2.bf16.msra.mxu0 0
      %529 = vmatprep.subr.bf16.mxu0 0
      %530 = vmatpush2.bf16.msra.mxu0 0
      %531 = vmatprep.mubr.bf16.mxu0 0
      %532 = vmatmul.mubr.bf16.gmra.mxu0 %v497
      %v533 = vpop.f32.mrf.mxu0
      %v534 = vadd.f32 %v469, %v533
      %v535 = vpop.f32.mrf.mxu0
      %v536 = vpop.f32.mrf.mxu0
      %v537 = vadd.f32 %v469, %v536
      %v538 = vpop.f32.mrf.mxu0
      %539 = vdwg.mxu0
      %v540 = vadd.f32 %v534, %v321
      %v541 = vadd.f32 %v537, %v322
      %v542 = vpack.c.bf16 %v540, %v540
      %v543 = vpack.c.bf16 %v541, %v541
      %vm544 = vcmask 257024
      %545 = vst.msk [vmem:[%s316] sm:$0xf] %vm544, %v542
      %546 = vst.msk [vmem:[%s316 + $0x4] sm:$0xf] %vm544, %v543
      %s547 = smul.u32 2, %s23
      %p548 = scmp.lt.s32.totalorder %s22, 1
      %s549 = scalar_select %p548, %s22, 1
      %p550 = scmp.lt.s32.totalorder %s547, 1
      %s551 = scalar_select %p550, %s547, 1
      %s552 = smul.addr %s549, 2
      %s553 = sadd.s32 %s551, %s552
      %s554 = smul.addr %s553, 4
      %s555 = scalar_lea.vmem %s7, %s554
      // Predicated region
      $region49: #{lora_ensemble_forward.8} parent=47 // pred_check
        %p556 = pneg %p204
      $region50: #{lora_ensemble_forward.8} parent=47 // pred_check_branch
        %558 = sbr.rel (%p556) target = $region52
      $region51: #{lora_ensemble_forward.8} parent=47 // pred_region
        %s559 = smul.u32 2, %s23
      $region52: #{lora_ensemble_forward.8} parent=47 // pred_fallthru
        _
    $region48: #{lora_ensemble_forward.8} parent=5 // pred_fallthru
      _
    %p560 = scmp.le.s32.totalorder 2, %s13
    // Predicated region
    $region53: #{lora_ensemble_forward.8} parent=5 // pred_check
      %p561 = pneg %p560
    $region54: #{lora_ensemble_forward.8} parent=5 // pred_check_branch
      %563 = sbr.rel (%p561) target = $region56
    $region55: #{lora_ensemble_forward.8} parent=5 // pred_region
      %s564 = ssub.s32 %s13, 2
      // Predicated region
      $region57: #{lora_ensemble_forward.8} parent=55 // pred_check
        %p565 = pneg %p210
      $region58: #{lora_ensemble_forward.8} parent=55 // pred_check_branch
        %567 = sbr.rel (%p565) target = $region60
      $region59: #{lora_ensemble_forward.8} parent=55 // pred_region
        %s568 = smul.u32 2, %s25
        %p569 = scmp.lt.s32.totalorder %s24, 1
        %s570 = scalar_select %p569, %s24, 1
        %p571 = scmp.lt.s32.totalorder %s568, 1
        %s572 = scalar_select %p571, %s568, 1
        %s573 = smul.addr %s570, 2
        %s574 = sadd.s32 %s572, %s573
        %s575 = smul.addr %s574, 4
        %s576 = scalar_lea.vmem %s7, %s575
      $region60: #{lora_ensemble_forward.8} parent=55 // pred_fallthru
        _
    $region56: #{lora_ensemble_forward.8} parent=5 // pred_fallthru
      _
  $region6: #{lora_ensemble_forward.8} parent=0 // loop_footer
    %s17 = sadd.s32 1, %s13
  $region7: #{lora_ensemble_forward.8} parent=0 // loop_footer_branch
    %12 = sbr.rel target = $region3
  $region8: #{lora_ensemble_forward.8} parent=0 // loop_exit
    _

// kernel: lora_ensemble_forward.7
$region0: #{lora_ensemble_forward.7}
  #allocation0 [shape = 'u32[]', space=smem, size = 0x4, offset = 0x4, fixed_abs, tag = 'smem constant byte address 0x4 - core index']
  #allocation1 [shape = 'u32[144,128]{1,0:T(1,128)}', space=vmem, size = 0x12000, scoped, tag = 'internal scratch']
  #allocation2 [shape = 'bf16[2,8,96]{2,1,0:T(8,128)(2,1)}', space=vmem, size = 0x1000, scoped, tag = 'scratch operand']
  #allocation3 [shape = 'bf16[2,8,32]{2,1,0:T(8,128)(2,1)}', space=vmem, size = 0x1000, scoped, tag = 'scratch operand']
  %s0 = inlined_call_operand.vmem [shape: bf16[2,8,32], index: 0, kind: input, shape index: {}]
  %s1 = inlined_call_operand.vmem [shape: f32[1,32], index: 1, kind: input, shape index: {}]
  %s2 = inlined_call_operand.vmem [shape: f32[1,32], index: 2, kind: input, shape index: {}]
  %s3 = inlined_call_operand.vmem [shape: bf16[2,32,96], index: 3, kind: input, shape index: {}]
  %s4 = inlined_call_operand.vmem [shape: f32[1,96], index: 4, kind: input, shape index: {}]
  %s5 = inlined_call_operand.vmem [shape: bf16[2,32,32], index: 5, kind: input, shape index: {}]
  %s6 = inlined_call_operand.vmem [shape: f32[1,32], index: 6, kind: input, shape index: {}]
  %s7 = inlined_call_operand.vmem [shape: bf16[2,2,8,32], index: 7, kind: output, shape index: {}]
  %s8 = sld [smem:[#allocation0]]
  $region61: #{lora_ensemble_forward.7} parent=0
    _
  %s10 = ssub.s32 1, %s8
  %s11 = scalar_select 0, %s10, %s8
  loop: start=0, step=1, limit=4
  $region2: #{lora_ensemble_forward.7} parent=0 // loop_pre_header
    _
  $region3: #{lora_ensemble_forward.7} parent=0 // loop_header
    %s13 = sphi 0, %s17
    %p14 = scmp.ge.s32.totalorder %s13, 4
    %s20 = sphi 0, %s32
    %s21 = sphi 0, %s28
    %s22 = sphi 0, %s20
    %s23 = sphi 0, %s21
    %s24 = sphi 0, %s22
    %s25 = sphi 0, %s23
    %s35 = sphi 0, %s37
    %s38 = sphi 0, %s35
    %s39 = sphi 0, %s38
    %s55 = sphi 0, %s39
    %s59 = sphi 0, %s59
    %s61 = sphi 0, %s59
    %s62 = sphi 0, %s61
    %s76 = sphi 0, %s62
    %s80 = sphi 0, %s80
    %s82 = sphi 0, %s80
    %s83 = sphi 0, %s82
    %s97 = sphi 0, %s83
    %s103 = sphi 0, %s105
    %s106 = sphi 0, %s103
    %s107 = sphi 0, %s106
    %s123 = sphi 0, %s107
    %s127 = sphi 0, %s127
    %s129 = sphi 0, %s127
    %s130 = sphi 0, %s129
    %s144 = sphi 0, %s130
    %s150 = sphi 0, %s152
    %s153 = sphi 0, %s150
    %s154 = sphi 0, %s153
    %s170 = sphi 0, %s154
    %s174 = sphi 0, %s174
    %s176 = sphi 0, %s174
    %s177 = sphi 0, %s176
    %s191 = sphi 0, %s177
    %s199 = sphi 0, %s201
    %s202 = sphi 0, %s199
    %s203 = sphi 0, %s202
    %s219 = sphi 0, %s203
  $region4: #{lora_ensemble_forward.7} parent=0 // loop_header_branch
    %16 = sbr.rel (%p14) target = $region8
  $region5: #{lora_ensemble_forward.7} parent=0 // loop_body
    %s18 = ssub.s32 %s13, 1
    %s19 = ssub.s32 %s13, 2
    %s26 = sadd.s32 1, %s21
    %p27 = scmp.ge.s32.totalorder %s26, 1
    %s28 = scalar_select %p27, 0, %s26
    %s29 = sadd.s32 1, %s20
    %s30 = scalar_select %p27, %s29, %s20
    %p31 = scmp.ge.s32.totalorder %s30, 2
    %s32 = scalar_select %p31, 0, %s30
    %s33 = ssub.s32 %s21, %s28
    %p34 = scmp.eq.s32.totalorder %s33, 0
    %s36 = sadd.s32 %s35, 1
    %s37 = scalar_select %p34, %s35, %s36
    %p40 = pneg %p34
    %p41 = scmp.eq.s32.totalorder %s13, 1
    %p42 = por %p40, %p41
    %p43 = scmp.ne.s32.totalorder %s35, %s38
    %p44 = scmp.eq.s32.totalorder %s13, 0
    %p45 = por %p43, %p44
    %p46 = scmp.ne.s32.totalorder %s35, %s38
    %p47 = scmp.eq.s32.totalorder %s18, 1
    %p48 = por %p46, %p47
    %p49 = scmp.ne.s32.totalorder %s38, %s39
    %p50 = scmp.eq.s32.totalorder %s18, 0
    %p51 = por %p49, %p50
    %p52 = scmp.ne.s32.totalorder %s38, %s39
    %p53 = scmp.eq.s32.totalorder %s19, 1
    %p54 = por %p52, %p53
    %p56 = scmp.ne.s32.totalorder %s39, %s55
    %p57 = scmp.eq.s32.totalorder %s19, 0
    %p58 = por %p56, %p57
    %s60 = sadd.s32 %s59, 1
    %p63 = scmp.eq.s32.totalorder %s13, 1
    %p64 = scmp.ne.s32.totalorder %s59, %s61
    %p65 = scmp.eq.s32.totalorder %s13, 0
    %p66 = por %p64, %p65
    %p67 = scmp.ne.s32.totalorder %s59, %s61
    %p68 = scmp.eq.s32.totalorder %s18, 1
    %p69 = por %p67, %p68
    %p70 = scmp.ne.s32.totalorder %s61, %s62
    %p71 = scmp.eq.s32.totalorder %s18, 0
    %p72 = por %p70, %p71
    %p73 = scmp.ne.s32.totalorder %s61, %s62
    %p74 = scmp.eq.s32.totalorder %s19, 1
    %p75 = por %p73, %p74
    %p77 = scmp.ne.s32.totalorder %s62, %s76
    %p78 = scmp.eq.s32.totalorder %s19, 0
    %p79 = por %p77, %p78
    %s81 = sadd.s32 %s80, 1
    %p84 = scmp.eq.s32.totalorder %s13, 1
    %p85 = scmp.ne.s32.totalorder %s80, %s82
    %p86 = scmp.eq.s32.totalorder %s13, 0
    %p87 = por %p85, %p86
    %p88 = scmp.ne.s32.totalorder %s80, %s82
    %p89 = scmp.eq.s32.totalorder %s18, 1
    %p90 = por %p88, %p89
    %p91 = scmp.ne.s32.totalorder %s82, %s83
    %p92 = scmp.eq.s32.totalorder %s18, 0
    %p93 = por %p91, %p92
    %p94 = scmp.ne.s32.totalorder %s82, %s83
    %p95 = scmp.eq.s32.totalorder %s19, 1
    %p96 = por %p94, %p95
    %p98 = scmp.ne.s32.totalorder %s83, %s97
    %p99 = scmp.eq.s32.totalorder %s19, 0
    %p100 = por %p98, %p99
    %s101 = ssub.s32 %s20, %s32
    %p102 = scmp.eq.s32.totalorder %s101, 0
    %s104 = sadd.s32 %s103, 1
    %s105 = scalar_select %p102, %s103, %s104
    %p108 = pneg %p102
    %p109 = scmp.eq.s32.totalorder %s13, 1
    %p110 = por %p108, %p109
    %p111 = scmp.ne.s32.totalorder %s103, %s106
    %p112 = scmp.eq.s32.totalorder %s13, 0
    %p113 = por %p111, %p112
    %p114 = scmp.ne.s32.totalorder %s103, %s106
    %p115 = scmp.eq.s32.totalorder %s18, 1
    %p116 = por %p114, %p115
    %p117 = scmp.ne.s32.totalorder %s106, %s107
    %p118 = scmp.eq.s32.totalorder %s18, 0
    %p119 = por %p117, %p118
    %p120 = scmp.ne.s32.totalorder %s106, %s107
    %p121 = scmp.eq.s32.totalorder %s19, 1
    %p122 = por %p120, %p121
    %p124 = scmp.ne.s32.totalorder %s107, %s123
    %p125 = scmp.eq.s32.totalorder %s19, 0
    %p126 = por %p124, %p125
    %s128 = sadd.s32 %s127, 1
    %p131 = scmp.eq.s32.totalorder %s13, 1
    %p132 = scmp.ne.s32.totalorder %s127, %s129
    %p133 = scmp.eq.s32.totalorder %s13, 0
    %p134 = por %p132, %p133
    %p135 = scmp.ne.s32.totalorder %s127, %s129
    %p136 = scmp.eq.s32.totalorder %s18, 1
    %p137 = por %p135, %p136
    %p138 = scmp.ne.s32.totalorder %s129, %s130
    %p139 = scmp.eq.s32.totalorder %s18, 0
    %p140 = por %p138, %p139
    %p141 = scmp.ne.s32.totalorder %s129, %s130
    %p142 = scmp.eq.s32.totalorder %s19, 1
    %p143 = por %p141, %p142
    %p145 = scmp.ne.s32.totalorder %s130, %s144
    %p146 = scmp.eq.s32.totalorder %s19, 0
    %p147 = por %p145, %p146
    %s148 = ssub.s32 %s20, %s32
    %p149 = scmp.eq.s32.totalorder %s148, 0
    %s151 = sadd.s32 %s150, 1
    %s152 = scalar_select %p149, %s150, %s151
    %p155 = pneg %p149
    %p156 = scmp.eq.s32.totalorder %s13, 1
    %p157 = por %p155, %p156
    %p158 = scmp.ne.s32.totalorder %s150, %s153
    %p159 = scmp.eq.s32.totalorder %s13, 0
    %p160 = por %p158, %p159
    %p161 = scmp.ne.s32.totalorder %s150, %s153
    %p162 = scmp.eq.s32.totalorder %s18, 1
    %p163 = por %p161, %p162
    %p164 = scmp.ne.s32.totalorder %s153, %s154
    %p165 = scmp.eq.s32.totalorder %s18, 0
    %p166 = por %p164, %p165
    %p167 = scmp.ne.s32.totalorder %s153, %s154
    %p168 = scmp.eq.s32.totalorder %s19, 1
    %p169 = por %p167, %p168
    %p171 = scmp.ne.s32.totalorder %s154, %s170
    %p172 = scmp.eq.s32.totalorder %s19, 0
    %p173 = por %p171, %p172
    %s175 = sadd.s32 %s174, 1
    %p178 = scmp.eq.s32.totalorder %s13, 1
    %p179 = scmp.ne.s32.totalorder %s174, %s176
    %p180 = scmp.eq.s32.totalorder %s13, 0
    %p181 = por %p179, %p180
    %p182 = scmp.ne.s32.totalorder %s174, %s176
    %p183 = scmp.eq.s32.totalorder %s18, 1
    %p184 = por %p182, %p183
    %p185 = scmp.ne.s32.totalorder %s176, %s177
    %p186 = scmp.eq.s32.totalorder %s18, 0
    %p187 = por %p185, %p186
    %p188 = scmp.ne.s32.totalorder %s176, %s177
    %p189 = scmp.eq.s32.totalorder %s19, 1
    %p190 = por %p188, %p189
    %p192 = scmp.ne.s32.totalorder %s177, %s191
    %p193 = scmp.eq.s32.totalorder %s19, 0
    %p194 = por %p192, %p193
    %s195 = ssub.s32 %s20, %s32
    %s196 = ssub.s32 %s21, %s28
    %s197 = sor.u32 %s195, %s196
    %p198 = scmp.eq.s32.totalorder %s197, 0
    %s200 = sadd.s32 %s199, 1
    %s201 = scalar_select %p198, %s199, %s200
    %p204 = pneg %p198
    %p205 = scmp.eq.s32.totalorder %s13, 1
    %p206 = por %p204, %p205
    %p207 = scmp.ne.s32.totalorder %s199, %s202
    %p208 = scmp.eq.s32.totalorder %s13, 0
    %p209 = por %p207, %p208
    %p210 = scmp.ne.s32.totalorder %s199, %s202
    %p211 = scmp.eq.s32.totalorder %s18, 1
    %p212 = por %p210, %p211
    %p213 = scmp.ne.s32.totalorder %s202, %s203
    %p214 = scmp.eq.s32.totalorder %s18, 0
    %p215 = por %p213, %p214
    %p216 = scmp.ne.s32.totalorder %s202, %s203
    %p217 = scmp.eq.s32.totalorder %s19, 1
    %p218 = por %p216, %p217
    %p220 = scmp.ne.s32.totalorder %s203, %s219
    %p221 = scmp.eq.s32.totalorder %s19, 0
    %p222 = por %p220, %p221
    %p223 = scmp.le.s32.totalorder 1, %s13
    %p224 = scmp.lt.s32.totalorder %s13, 3
    %p225 = pnand %p223, %p224
    %p226 = pneg %p225
    // Predicated region
    $region9: #{lora_ensemble_forward.7} parent=5 // pred_check
      _
    $region10: #{lora_ensemble_forward.7} parent=5 // pred_check_branch
      %228 = sbr.rel (%p225) target = $region12
    $region11: #{lora_ensemble_forward.7} parent=5 // pred_region
      %s229 = ssub.s32 %s13, 1
      // Predicated region
      $region13: #{lora_ensemble_forward.7} parent=11 // pred_check
        %p230 = pneg %p51
      $region14: #{lora_ensemble_forward.7} parent=11 // pred_check_branch
        %232 = sbr.rel (%p230) target = $region16
      $region15: #{lora_ensemble_forward.7} parent=11 // pred_region
        %s233 = smul.u32 2, %s23
        %p234 = scmp.lt.s32.totalorder %s233, 1
        %s235 = scalar_select %p234, %s233, 1
        %s236 = smul.addr %s235, 4
        %s237 = scalar_lea.vmem %s0, %s236
        %s238 = smul.u32 2, %s23
      $region16: #{lora_ensemble_forward.7} parent=11 // pred_fallthru
        _
      // Predicated region
      $region17: #{lora_ensemble_forward.7} parent=11 // pred_check
        %p239 = pneg %p72
      $region18: #{lora_ensemble_forward.7} parent=11 // pred_check_branch
        %241 = sbr.rel (%p239) target = $region20
      $region19: #{lora_ensemble_forward.7} parent=11 // pred_region
        _
      $region20: #{lora_ensemble_forward.7} parent=11 // pred_fallthru
        _
      // Predicated region
      $region21: #{lora_ensemble_forward.7} parent=11 // pred_check
        %p242 = pneg %p93
      $region22: #{lora_ensemble_forward.7} parent=11 // pred_check_branch
        %244 = sbr.rel (%p242) target = $region24
      $region23: #{lora_ensemble_forward.7} parent=11 // pred_region
        _
      $region24: #{lora_ensemble_forward.7} parent=11 // pred_fallthru
        _
      // Predicated region
      $region25: #{lora_ensemble_forward.7} parent=11 // pred_check
        %p245 = pneg %p140
      $region26: #{lora_ensemble_forward.7} parent=11 // pred_check_branch
        %247 = sbr.rel (%p245) target = $region28
      $region27: #{lora_ensemble_forward.7} parent=11 // pred_region
        _
      $region28: #{lora_ensemble_forward.7} parent=11 // pred_fallthru
        _
      // Predicated region
      $region29: #{lora_ensemble_forward.7} parent=11 // pred_check
        %p248 = pneg %p187
      $region30: #{lora_ensemble_forward.7} parent=11 // pred_check_branch
        %250 = sbr.rel (%p248) target = $region32
      $region31: #{lora_ensemble_forward.7} parent=11 // pred_region
        _
      $region32: #{lora_ensemble_forward.7} parent=11 // pred_fallthru
        _
    $region12: #{lora_ensemble_forward.7} parent=5 // pred_fallthru
      _
    %p251 = scmp.lt.s32.totalorder %s13, 2
    // Predicated region
    $region33: #{lora_ensemble_forward.7} parent=5 // pred_check
      %p252 = pneg %p251
    $region34: #{lora_ensemble_forward.7} parent=5 // pred_check_branch
      %254 = sbr.rel (%p252) target = $region36
    $region35: #{lora_ensemble_forward.7} parent=5 // pred_region
      // Predicated region
      $region37: #{lora_ensemble_forward.7} parent=35 // pred_check
        %p255 = pneg %p113
      $region38: #{lora_ensemble_forward.7} parent=35 // pred_check_branch
        %257 = sbr.rel (%p255) target = $region40
      $region39: #{lora_ensemble_forward.7} parent=35 // pred_region
        %p258 = scmp.lt.s32.totalorder %s20, 1
        %s259 = scalar_select %p258, %s20, 1
        %s260 = smul.addr %s259, 4
        %s261 = smul.addr %s260, 4
        %s262 = scalar_lea.vmem %s3, %s261
      $region40: #{lora_ensemble_forward.7} parent=35 // pred_fallthru
        _
      // Predicated region
      $region41: #{lora_ensemble_forward.7} parent=35 // pred_check
        %p263 = pneg %p160
      $region42: #{lora_ensemble_forward.7} parent=35 // pred_check_branch
        %265 = sbr.rel (%p263) target = $region44
      $region43: #{lora_ensemble_forward.7} parent=35 // pred_region
        %p266 = scmp.lt.s32.totalorder %s20, 1
        %s267 = scalar_select %p266, %s20, 1
        %s268 = smul.addr %s267, 4
        %s269 = smul.addr %s268, 4
        %s270 = scalar_lea.vmem %s5, %s269
      $region44: #{lora_ensemble_forward.7} parent=35 // pred_fallthru
        _
    $region36: #{lora_ensemble_forward.7} parent=5 // pred_fallthru
      _
    %p271 = scmp.le.s32.totalorder 1, %s13
    %p272 = scmp.lt.s32.totalorder %s13, 3
    %p273 = pnand %p271, %p272
    %p274 = pneg %p273
    // Predicated region
    $region45: #{lora_ensemble_forward.7} parent=5 // pred_check
      _
    $region46: #{lora_ensemble_forward.7} parent=5 // pred_check_branch
      %276 = sbr.rel (%p273) target = $region48
    $region47: #{lora_ensemble_forward.7} parent=5 // pred_region
      %s277 = ssub.s32 %s13, 1
      %s278 = smul.u32 2, %s23
      %p279 = scmp.lt.s32.totalorder %s278, 1
      %s280 = scalar_select %p279, %s278, 1
      %s281 = smul.addr %s280, 4
      %s282 = scalar_lea.vmem %s0, %s281
      %p283 = pneg %p51
      %p284 = pneg %p48
      %p285 = pneg %p72
      %p286 = pneg %p69
      %p287 = pneg %p93
      %p288 = pneg %p90
      %p289 = scmp.lt.s32.totalorder %s22, 1
      %s290 = scalar_select %p289, %s22, 1
      %s291 = smul.addr %s290, 4
      %s292 = smul.addr %s291, 4
      %s293 = scalar_lea.vmem %s3, %s292
      %p294 = pneg %p119
      %p295 = pneg %p116
      %p296 = pneg %p140
      %p297 = pneg %p137
      %p298 = scmp.lt.s32.totalorder %s22, 1
      %s299 = scalar_select %p298, %s22, 1
      %s300 = smul.addr %s299, 4
      %s301 = smul.addr %s300, 4
      %s302 = scalar_lea.vmem %s5, %s301
      %p303 = pneg %p166
      %p304 = pneg %p163
      %p305 = pneg %p187
      %p306 = pneg %p184
      %p307 = pneg %p215
      %p308 = pneg %p212
      %s309 = smul.u32 2, %s23
      %p310 = scmp.lt.s32.totalorder %s22, 1
      %s311 = scalar_select %p310, %s22, 1
      %p312 = scmp.lt.s32.totalorder %s309, 1
      %s313 = scalar_select %p312, %s309, 1
      %s314 = smul.addr %s311, 2
      %s315 = sadd.s32 %s313, %s314
      %s316 = smul.addr %s315, 4
      %s317 = scalar_lea.vmem %s7, %s316
      %s318 = smul.u32 2, %s23
      %p319 = scmp.lt.s32.totalorder %s318, 1
      %s320 = scalar_select %p319, %s318, 1
      %s321 = smul.addr %s320, 4
      %s322 = scalar_lea.vmem %s0, %s321
      %s323 = smul.u32 2, %s23
      %p324 = scmp.lt.s32.totalorder %s22, 1
      %s325 = scalar_select %p324, %s22, 1
      %s326 = smul.addr %s325, 4
      %s327 = smul.addr %s326, 4
      %s328 = scalar_lea.vmem %s3, %s327
      %p329 = scmp.lt.s32.totalorder %s22, 1
      %s330 = scalar_select %p329, %s22, 1
      %s331 = smul.addr %s330, 4
      %s332 = smul.addr %s331, 4
      %s333 = scalar_lea.vmem %s5, %s332
      %s334 = smul.u32 2, %s23
      %p335 = scmp.lt.s32.totalorder %s22, 1
      %s336 = scalar_select %p335, %s22, 1
      %p337 = scmp.lt.s32.totalorder %s334, 1
      %s338 = scalar_select %p337, %s334, 1
      %s339 = smul.addr %s336, 2
      %s340 = sadd.s32 %s338, %s339
      %s341 = smul.addr %s340, 4
      %s342 = scalar_lea.vmem %s7, %s341
      %s343 = smul.u32 2, %s23
      %v345 = vld [vmem:[%s322] sm:$0xf]
      %v346 = vld [vmem:[%s322 + $0x4] sm:$0xf]
      %v347 = vunpack.c.l.bf16 %v345
      %v348 = vunpack.c.l.bf16 %v346
      %v349 = vld [vmem:[%s1] sm:$0x1]
      %v350 = vld [vmem:[%s2] sm:$0x1]
      %vm351 = vcmask 261120
      %v352 = vsel %vm351, %v347, 0.0
      %353 = vadd.xlane.f32.xlu0 %v352
      %v354 = vpop.xlane.xlu0 %353
      %v355 = vsel %vm351, %v348, 0.0
      %356 = vadd.xlane.f32.xlu0 %v355
      %v357 = vpop.xlane.xlu0 %356
      %v358 = vrcp.pop 32.0
      %v359 = vmul.f32 %v354, %v358
      %v360 = vmul.f32 %v357, %v358
      %v361 = vsub.f32 %v347, %v359
      %v362 = vsub.f32 %v348, %v360
      %v363 = vmul.f32 %v361, %v361
      %v364 = vmul.f32 %v362, %v362
      %v365 = vsel %vm351, %v363, 0.0
      %366 = vadd.xlane.f32.xlu0 %v365
      %v367 = vpop.xlane.xlu0 %366
      %v368 = vsel %vm351, %v364, 0.0
      %369 = vadd.xlane.f32.xlu0 %v368
      %v370 = vpop.xlane.xlu0 %369
      %v371 = vmul.f32 %v367, %v358
      %v372 = vmul.f32 %v370, %v358
      %v373 = vadd.f32 %v371, 1e-06
      %v374 = vadd.f32 %v372, 1e-06
      %v375 = vrsqrt.pop %v373
      %v376 = vrsqrt.pop %v374
      %v377 = vmul.f32 %v361, %v375
      %v378 = vmul.f32 %v362, %v376
      %v380 = vlaneseq
      %v381 = vshrl.u32 %v380, 7
      %v382 = vsub.s32 0, %v381
      %v383 = vrot.slane %v349, %v382
      %v385 = vmul.f32 %v377, %v383
      %v386 = vmul.f32 %v378, %v383
      %v388 = vlaneseq
      %v389 = vshrl.u32 %v388, 7
      %v390 = vsub.s32 0, %v389
      %v391 = vrot.slane %v350, %v390
      %v393 = vadd.f32 %v385, %v391
      %v394 = vadd.f32 %v386, %v391
      %v395 = vpack.c.bf16 %v394, %v393
      %v396 = vld [vmem:[%s328] sm:$0xf]
      %v397 = vld [vmem:[%s328 + $0x4] sm:$0xf]
      %v398 = vld [vmem:[%s328 + $0x8] sm:$0xf]
      %v399 = vld [vmem:[%s328 + $0xc] sm:$0xf]
      %v400 = vld [vmem:[%s4] sm:$0x1]
      %v402 = vlaneseq
      %v403 = vshrl.u32 %v402, 7
      %v404 = vsub.s32 0, %v403
      %v405 = vrot.slane %v400, %v404
      %v411 = vunpack.c.l.b16 %v396
      %v412 = vunpack.c.l.b16 %v397
      %v413 = vunpack.c.l.b16 %v398
      %v414 = vunpack.c.l.b16 %v399
      %v415 = vpack.c.b16 %v412, %v411
      %v416 = vpack.c.b16 %v414, %v413
      %v420 = vsel %vm351, %v395, 0
      %422 = vmatprep.subr.bf16.mxu0 0
      %423 = vmatpush1.bf16.msra.mxu0 0
      %424 = vmatprep.subr.bf16.mxu0 0
      %425 = vmatpush1.bf16.msra.mxu0 0
      %426 = vmatprep.subr.bf16.mxu0 0
      %427 = vmatpush1.bf16.msra.mxu0 0
      %428 = vmatprep.subr.bf16.mxu0 0
      %429 = vmatpush1.bf16.msra.mxu0 0
      %430 = vmatprep.subr.bf16.mxu0 0
      %431 = vmatpush1.bf16.msra.mxu0 0
      %432 = vmatprep.subr.bf16.mxu0 0
      %433 = vmatpush1.bf16.msra.mxu0 0
      %434 = vmatprep.subr.bf16.mxu0 0
      %435 = vmatpush1.bf16.msra.mxu0 %v416
      %436 = vmatprep.subr.bf16.mxu0 0
      %437 = vmatpush1.bf16.msra.mxu0 %v415
      %438 = vmatprep.subr.bf16.mxu0 0
      %439 = vmatpush2.bf16.msra.mxu0 0
      %440 = vmatprep.subr.bf16.mxu0 0
      %441 = vmatpush2.bf16.msra.mxu0 0
      %442 = vmatprep.subr.bf16.mxu0 0
      %443 = vmatpush2.bf16.msra.mxu0 0
      %444 = vmatprep.subr.bf16.mxu0 0
      %445 = vmatpush2.bf16.msra.mxu0 0
      %446 = vmatprep.subr.bf16.mxu0 0
      %447 = vmatpush2.bf16.msra.mxu0 0
      %448 = vmatprep.subr.bf16.mxu0 0
      %449 = vmatpush2.bf16.msra.mxu0 0
      %450 = vmatprep.subr.bf16.mxu0 0
      %451 = vmatpush2.bf16.msra.mxu0 0
      %452 = vmatprep.subr.bf16.mxu0 0
      %453 = vmatpush2.bf16.msra.mxu0 0
      %454 = vmatprep.mubr.bf16.mxu0 0
      %455 = vmatmul.mubr.bf16.gmra.mxu0 %v420
      %v456 = vpop.f32.mrf.mxu0
      %v457 = vadd.f32 %v405, %v456
      %v458 = vpop.f32.mrf.mxu0
      %v459 = vpop.f32.mrf.mxu0
      %v460 = vadd.f32 %v405, %v459
      %v461 = vpop.f32.mrf.mxu0
      %462 = vdwg.mxu0
      %v463 = vpack.c.bf16 %v457, %v457
      %v464 = vpack.c.bf16 %v460, %v460
      %vm465 = vcmask 781312
      %466 = vst.msk [vmem:[#allocation2] sm:$0xf] %vm465, %v463
      %467 = vst.msk [vmem:[#allocation2 + $0x4] sm:$0xf] %vm465, %v464
      %v468 = vlaneseq
      %v469 = vand.u32 %v468, 127
      %vm470 = vcmp.lt.s32.totalorder %v469, 5
      %v471 = vsel %vm470, 0.0, -1e+30
      %v472 = vld [vmem:[#allocation2] sm:$0xf]
      %v474 = vunpack.c.l.b16 %v472
      %v475 = vpack.c.b16 %v474, %v474
      %476 = vrot.lane.b32.xlu0 %v475, 96
      %v477 = vpop.permute.xlu0 %476
      %vm478 = vcmask 64512
      %v480 = vsel %vm478, %v472, 0
      %v483 = vsel %vm478, %v477, 0
      %485 = vmatprep.subr.bf16.mxu0 0
      %486 = vmatpush1.bf16.xpose.msra.mxu0 0
      %487 = vmatprep.subr.bf16.mxu0 0
      %488 = vmatpush1.bf16.xpose.msra.mxu0 0
      %489 = vmatprep.subr.bf16.mxu0 0
      %490 = vmatpush1.bf16.xpose.msra.mxu0 0
      %491 = vmatprep.subr.bf16.mxu0 0
      %492 = vmatpush1.bf16.xpose.msra.mxu0 0
      %493 = vmatprep.subr.bf16.mxu0 0
      %494 = vmatpush1.bf16.xpose.msra.mxu0 0
      %495 = vmatprep.subr.bf16.mxu0 0
      %496 = vmatpush1.bf16.xpose.msra.mxu0 0
      %497 = vmatprep.subr.bf16.mxu0 0
      %498 = vmatpush1.bf16.xpose.msra.mxu0 0
      %499 = vmatprep.subr.bf16.mxu0 0
      %500 = vmatpush1.bf16.xpose.msra.mxu0 %v483
      %501 = vmatprep.subr.bf16.mxu0 0
      %502 = vmatpush2.bf16.xpose.msra.mxu0 0
      %503 = vmatprep.subr.bf16.mxu0 0
      %504 = vmatpush2.bf16.xpose.msra.mxu0 0
      %505 = vmatprep.subr.bf16.mxu0 0
      %506 = vmatpush2.bf16.xpose.msra.mxu0 0
      %507 = vmatprep.subr.bf16.mxu0 0
      %508 = vmatpush2.bf16.xpose.msra.mxu0 0
      %509 = vmatprep.subr.bf16.mxu0 0
      %510 = vmatpush2.bf16.xpose.msra.mxu0 0
      %511 = vmatprep.subr.bf16.mxu0 0
      %512 = vmatpush2.bf16.xpose.msra.mxu0 0
      %513 = vmatprep.subr.bf16.mxu0 0
      %514 = vmatpush2.bf16.xpose.msra.mxu0 0
      %515 = vmatprep.subr.bf16.mxu0 0
      %516 = vmatpush2.bf16.xpose.msra.mxu0 0
      %517 = vmatprep.mubr.bf16.mxu0 0
      %518 = vmatmul.mubr.bf16.gmra.mxu0 %v480
      %v519 = vpop.f32.mrf.mxu0
      %v520 = vadd.f32 %v471, %v519
      %v521 = vpop.f32.mrf.mxu0
      %v522 = vpop.f32.mrf.mxu0
      %v523 = vpop.f32.mrf.mxu0
      %524 = vdwg.mxu0
      %v525 = vsel %vm478, %v520, -inf
      %526 = vmax.xlane.f32.xlu0 %v525
      %v527 = vpop.xlane.xlu0 %526
      %v528 = vsub.f32 %v520, %v527
      %v529 = vmul.f32 %v528, 1.442695
      %v530 = vpow.pop %v529
      %v531 = vsel %vm478, %v530, 0.0
      %532 = vadd.xlane.f32.xlu0 %v531
      %v533 = vpop.xlane.xlu0 %532
      %v534 = vrcp.pop %v533
      %v535 = vmul.f32 %v530, %v534
      %v536 = vpack.c.bf16 %v535, %v535
      %537 = vrot.lane.b32.xlu0 %v475, 64
      %v538 = vpop.permute.xlu0 %537
      %v540 = vsel %vm478, %v536, 0
      %vm542 = vcmask 1043456
      %v544 = vsel %vm542, %v538, 0
      %546 = vmatprep.subr.bf16.mxu0 0
      %547 = vmatpush1.bf16.msra.mxu0 0
      %548 = vmatprep.subr.bf16.mxu0 0
      %549 = vmatpush1.bf16.msra.mxu0 0
      %550 = vmatprep.subr.bf16.mxu0 0
      %551 = vmatpush1.bf16.msra.mxu0 0
      %552 = vmatprep.subr.bf16.mxu0 0
      %553 = vmatpush1.bf16.msra.mxu0 0
      %554 = vmatprep.subr.bf16.mxu0 0
      %555 = vmatpush1.bf16.msra.mxu0 0
      %556 = vmatprep.subr.bf16.mxu0 0
      %557 = vmatpush1.bf16.msra.mxu0 0
      %558 = vmatprep.subr.bf16.mxu0 0
      %559 = vmatpush1.bf16.msra.mxu0 0
      %560 = vmatprep.subr.bf16.mxu0 0
      %561 = vmatpush1.bf16.msra.mxu0 %v544
      %562 = vmatprep.subr.bf16.mxu0 0
      %563 = vmatpush2.bf16.msra.mxu0 0
      %564 = vmatprep.subr.bf16.mxu0 0
      %565 = vmatpush2.bf16.msra.mxu0 0
      %566 = vmatprep.subr.bf16.mxu0 0
      %567 = vmatpush2.bf16.msra.mxu0 0
      %568 = vmatprep.subr.bf16.mxu0 0
      %569 = vmatpush2.bf16.msra.mxu0 0
      %570 = vmatprep.subr.bf16.mxu0 0
      %571 = vmatpush2.bf16.msra.mxu0 0
      %572 = vmatprep.subr.bf16.mxu0 0
      %573 = vmatpush2.bf16.msra.mxu0 0
      %574 = vmatprep.subr.bf16.mxu0 0
      %575 = vmatpush2.bf16.msra.mxu0 0
      %576 = vmatprep.subr.bf16.mxu0 0
      %577 = vmatpush2.bf16.msra.mxu0 0
      %578 = vmatprep.mubr.bf16.mxu0 0
      %579 = vmatmul.mubr.bf16.gmra.mxu0 %v540
      %v580 = vpop.f32.mrf.mxu0
      %v581 = vadd.f32 0.0, %v580
      %v582 = vpop.f32.mrf.mxu0
      %v583 = vpop.f32.mrf.mxu0
      %v584 = vpop.f32.mrf.mxu0
      %585 = vdwg.mxu0
      %v586 = vpack.c.bf16 %v581, %v581
      %vm587 = vcmask 60416
      %588 = vst.msk [vmem:[#allocation3] sm:$0xf] %vm587, %v586
      %v589 = vld [vmem:[#allocation2] sm:$0xf]
      %v591 = vunpack.c.l.b16 %v589
      %v592 = vpack.c.b16 %v591, %v591
      %593 = vrot.lane.b32.xlu0 %v592, 120
      %v594 = vpop.permute.xlu0 %593
      %595 = vrot.lane.b32.xlu0 %v592, 88
      %v596 = vpop.permute.xlu0 %595
      %v598 = vsel %vm478, %v594, 0
      %v601 = vsel %vm478, %v596, 0
      %603 = vmatprep.subr.bf16.mxu0 0
      %604 = vmatpush1.bf16.xpose.msra.mxu0 0
      %605 = vmatprep.subr.bf16.mxu0 0
      %606 = vmatpush1.bf16.xpose.msra.mxu0 0
      %607 = vmatprep.subr.bf16.mxu0 0
      %608 = vmatpush1.bf16.xpose.msra.mxu0 0
      %609 = vmatprep.subr.bf16.mxu0 0
      %610 = vmatpush1.bf16.xpose.msra.mxu0 0
      %611 = vmatprep.subr.bf16.mxu0 0
      %612 = vmatpush1.bf16.xpose.msra.mxu0 0
      %613 = vmatprep.subr.bf16.mxu0 0
      %614 = vmatpush1.bf16.xpose.msra.mxu0 0
      %615 = vmatprep.subr.bf16.mxu0 0
      %616 = vmatpush1.bf16.xpose.msra.mxu0 0
      %617 = vmatprep.subr.bf16.mxu0 0
      %618 = vmatpush1.bf16.xpose.msra.mxu0 %v601
      %619 = vmatprep.subr.bf16.mxu0 0
      %620 = vmatpush2.bf16.xpose.msra.mxu0 0
      %621 = vmatprep.subr.bf16.mxu0 0
      %622 = vmatpush2.bf16.xpose.msra.mxu0 0
      %623 = vmatprep.subr.bf16.mxu0 0
      %624 = vmatpush2.bf16.xpose.msra.mxu0 0
      %625 = vmatprep.subr.bf16.mxu0 0
      %626 = vmatpush2.bf16.xpose.msra.mxu0 0
      %627 = vmatprep.subr.bf16.mxu0 0
      %628 = vmatpush2.bf16.xpose.msra.mxu0 0
      %629 = vmatprep.subr.bf16.mxu0 0
      %630 = vmatpush2.bf16.xpose.msra.mxu0 0
      %631 = vmatprep.subr.bf16.mxu0 0
      %632 = vmatpush2.bf16.xpose.msra.mxu0 0
      %633 = vmatprep.subr.bf16.mxu0 0
      %634 = vmatpush2.bf16.xpose.msra.mxu0 0
      %635 = vmatprep.mubr.bf16.mxu0 0
      %636 = vmatmul.mubr.bf16.gmra.mxu0 %v598
      %v637 = vpop.f32.mrf.mxu0
      %v638 = vadd.f32 %v471, %v637
      %v639 = vpop.f32.mrf.mxu0
      %v640 = vpop.f32.mrf.mxu0
      %v641 = vpop.f32.mrf.mxu0
      %642 = vdwg.mxu0
      %v643 = vsel %vm478, %v638, -inf
      %644 = vmax.xlane.f32.xlu0 %v643
      %v645 = vpop.xlane.xlu0 %644
      %v646 = vsub.f32 %v638, %v645
      %v647 = vmul.f32 %v646, 1.442695
      %v648 = vpow.pop %v647
      %v649 = vsel %vm478, %v648, 0.0
      %650 = vadd.xlane.f32.xlu0 %v649
      %v651 = vpop.xlane.xlu0 %650
      %v652 = vrcp.pop %v651
      %v653 = vmul.f32 %v648, %v652
      %v654 = vpack.c.bf16 %v653, %v653
      %655 = vrot.lane.b32.xlu0 %v592, 56
      %v656 = vpop.permute.xlu0 %655
      %v658 = vsel %vm478, %v654, 0
      %v661 = vsel %vm542, %v656, 0
      %663 = vmatprep.subr.bf16.mxu0 0
      %664 = vmatpush1.bf16.msra.mxu0 0
      %665 = vmatprep.subr.bf16.mxu0 0
      %666 = vmatpush1.bf16.msra.mxu0 0
      %667 = vmatprep.subr.bf16.mxu0 0
      %668 = vmatpush1.bf16.msra.mxu0 0
      %669 = vmatprep.subr.bf16.mxu0 0
      %670 = vmatpush1.bf16.msra.mxu0 0
      %671 = vmatprep.subr.bf16.mxu0 0
      %672 = vmatpush1.bf16.msra.mxu0 0
      %673 = vmatprep.subr.bf16.mxu0 0
      %674 = vmatpush1.bf16.msra.mxu0 0
      %675 = vmatprep.subr.bf16.mxu0 0
      %676 = vmatpush1.bf16.msra.mxu0 0
      %677 = vmatprep.subr.bf16.mxu0 0
      %678 = vmatpush1.bf16.msra.mxu0 %v661
      %679 = vmatprep.subr.bf16.mxu0 0
      %680 = vmatpush2.bf16.msra.mxu0 0
      %681 = vmatprep.subr.bf16.mxu0 0
      %682 = vmatpush2.bf16.msra.mxu0 0
      %683 = vmatprep.subr.bf16.mxu0 0
      %684 = vmatpush2.bf16.msra.mxu0 0
      %685 = vmatprep.subr.bf16.mxu0 0
      %686 = vmatpush2.bf16.msra.mxu0 0
      %687 = vmatprep.subr.bf16.mxu0 0
      %688 = vmatpush2.bf16.msra.mxu0 0
      %689 = vmatprep.subr.bf16.mxu0 0
      %690 = vmatpush2.bf16.msra.mxu0 0
      %691 = vmatprep.subr.bf16.mxu0 0
      %692 = vmatpush2.bf16.msra.mxu0 0
      %693 = vmatprep.subr.bf16.mxu0 0
      %694 = vmatpush2.bf16.msra.mxu0 0
      %695 = vmatprep.mubr.bf16.mxu0 0
      %696 = vmatmul.mubr.bf16.gmra.mxu0 %v658
      %v697 = vpop.f32.mrf.mxu0
      %v698 = vadd.f32 0.0, %v697
      %v699 = vpop.f32.mrf.mxu0
      %v700 = vpop.f32.mrf.mxu0
      %v701 = vpop.f32.mrf.mxu0
      %702 = vdwg.mxu0
      %v703 = vpack.c.bf16 %v698, %v698
      %v705 = vunpack.c.l.b16 %v703
      %v706 = vpack.c.b16 %v705, %v705
      %707 = vrot.lane.b32.xlu0 %v706, 8
      %v708 = vpop.permute.xlu0 %707
      %vm710 = vcmask 126016
      %711 = vst.msk [vmem:[#allocation3] sm:$0xf] %vm710, %v708
      %v712 = vld [vmem:[#allocation2] sm:$0xf]
      %v714 = vunpack.c.l.b16 %v712
      %v715 = vpack.c.b16 %v714, %v714
      %716 = vrot.lane.b32.xlu0 %v715, 112
      %v717 = vpop.permute.xlu0 %716
      %718 = vrot.lane.b32.xlu0 %v715, 80
      %v719 = vpop.permute.xlu0 %718
      %v721 = vsel %vm478, %v717, 0
      %v724 = vsel %vm478, %v719, 0
      %726 = vmatprep.subr.bf16.mxu0 0
      %727 = vmatpush1.bf16.xpose.msra.mxu0 0
      %728 = vmatprep.subr.bf16.mxu0 0
      %729 = vmatpush1.bf16.xpose.msra.mxu0 0
      %730 = vmatprep.subr.bf16.mxu0 0
      %731 = vmatpush1.bf16.xpose.msra.mxu0 0
      %732 = vmatprep.subr.bf16.mxu0 0
      %733 = vmatpush1.bf16.xpose.msra.mxu0 0
      %734 = vmatprep.subr.bf16.mxu0 0
      %735 = vmatpush1.bf16.xpose.msra.mxu0 0
      %736 = vmatprep.subr.bf16.mxu0 0
      %737 = vmatpush1.bf16.xpose.msra.mxu0 0
      %738 = vmatprep.subr.bf16.mxu0 0
      %739 = vmatpush1.bf16.xpose.msra.mxu0 0
      %740 = vmatprep.subr.bf16.mxu0 0
      %741 = vmatpush1.bf16.xpose.msra.mxu0 %v724
      %742 = vmatprep.subr.bf16.mxu0 0
      %743 = vmatpush2.bf16.xpose.msra.mxu0 0
      %744 = vmatprep.subr.bf16.mxu0 0
      %745 = vmatpush2.bf16.xpose.msra.mxu0 0
      %746 = vmatprep.subr.bf16.mxu0 0
      %747 = vmatpush2.bf16.xpose.msra.mxu0 0
      %748 = vmatprep.subr.bf16.mxu0 0
      %749 = vmatpush2.bf16.xpose.msra.mxu0 0
      %750 = vmatprep.subr.bf16.mxu0 0
      %751 = vmatpush2.bf16.xpose.msra.mxu0 0
      %752 = vmatprep.subr.bf16.mxu0 0
      %753 = vmatpush2.bf16.xpose.msra.mxu0 0
      %754 = vmatprep.subr.bf16.mxu0 0
      %755 = vmatpush2.bf16.xpose.msra.mxu0 0
      %756 = vmatprep.subr.bf16.mxu0 0
      %757 = vmatpush2.bf16.xpose.msra.mxu0 0
      %758 = vmatprep.mubr.bf16.mxu0 0
      %759 = vmatmul.mubr.bf16.gmra.mxu0 %v721
      %v760 = vpop.f32.mrf.mxu0
      %v761 = vadd.f32 %v471, %v760
      %v762 = vpop.f32.mrf.mxu0
      %v763 = vpop.f32.mrf.mxu0
      %v764 = vpop.f32.mrf.mxu0
      %765 = vdwg.mxu0
      %v766 = vsel %vm478, %v761, -inf
      %767 = vmax.xlane.f32.xlu0 %v766
      %v768 = vpop.xlane.xlu0 %767
      %v769 = vsub.f32 %v761, %v768
      %v770 = vmul.f32 %v769, 1.442695
      %v771 = vpow.pop %v770
      %v772 = vsel %vm478, %v771, 0.0
      %773 = vadd.xlane.f32.xlu0 %v772
      %v774 = vpop.xlane.xlu0 %773
      %v775 = vrcp.pop %v774
      %v776 = vmul.f32 %v771, %v775
      %v777 = vpack.c.bf16 %v776, %v776
      %778 = vrot.lane.b32.xlu0 %v715, 48
      %v779 = vpop.permute.xlu0 %778
      %v781 = vsel %vm478, %v777, 0
      %v784 = vsel %vm542, %v779, 0
      %786 = vmatprep.subr.bf16.mxu0 0
      %787 = vmatpush1.bf16.msra.mxu0 0
      %788 = vmatprep.subr.bf16.mxu0 0
      %789 = vmatpush1.bf16.msra.mxu0 0
      %790 = vmatprep.subr.bf16.mxu0 0
      %791 = vmatpush1.bf16.msra.mxu0 0
      %792 = vmatprep.subr.bf16.mxu0 0
      %793 = vmatpush1.bf16.msra.mxu0 0
      %794 = vmatprep.subr.bf16.mxu0 0
      %795 = vmatpush1.bf16.msra.mxu0 0
      %796 = vmatprep.subr.bf16.mxu0 0
      %797 = vmatpush1.bf16.msra.mxu0 0
      %798 = vmatprep.subr.bf16.mxu0 0
      %799 = vmatpush1.bf16.msra.mxu0 0
      %800 = vmatprep.subr.bf16.mxu0 0
      %801 = vmatpush1.bf16.msra.mxu0 %v784
      %802 = vmatprep.subr.bf16.mxu0 0
      %803 = vmatpush2.bf16.msra.mxu0 0
      %804 = vmatprep.subr.bf16.mxu0 0
      %805 = vmatpush2.bf16.msra.mxu0 0
      %806 = vmatprep.subr.bf16.mxu0 0
      %807 = vmatpush2.bf16.msra.mxu0 0
      %808 = vmatprep.subr.bf16.mxu0 0
      %809 = vmatpush2.bf16.msra.mxu0 0
      %810 = vmatprep.subr.bf16.mxu0 0
      %811 = vmatpush2.bf16.msra.mxu0 0
      %812 = vmatprep.subr.bf16.mxu0 0
      %813 = vmatpush2.bf16.msra.mxu0 0
      %814 = vmatprep.subr.bf16.mxu0 0
      %815 = vmatpush2.bf16.msra.mxu0 0
      %816 = vmatprep.subr.bf16.mxu0 0
      %817 = vmatpush2.bf16.msra.mxu0 0
      %818 = vmatprep.mubr.bf16.mxu0 0
      %819 = vmatmul.mubr.bf16.gmra.mxu0 %v781
      %v820 = vpop.f32.mrf.mxu0
      %v821 = vadd.f32 0.0, %v820
      %v822 = vpop.f32.mrf.mxu0
      %v823 = vpop.f32.mrf.mxu0
      %v824 = vpop.f32.mrf.mxu0
      %825 = vdwg.mxu0
      %v826 = vpack.c.bf16 %v821, %v821
      %v828 = vunpack.c.l.b16 %v826
      %v829 = vpack.c.b16 %v828, %v828
      %830 = vrot.lane.b32.xlu0 %v829, 16
      %v831 = vpop.permute.xlu0 %830
      %vm833 = vcmask 191616
      %834 = vst.msk [vmem:[#allocation3] sm:$0xf] %vm833, %v831
      %v835 = vld [vmem:[#allocation2] sm:$0xf]
      %v837 = vunpack.c.l.b16 %v835
      %v838 = vpack.c.b16 %v837, %v837
      %839 = vrot.lane.b32.xlu0 %v838, 104
      %v840 = vpop.permute.xlu0 %839
      %841 = vrot.lane.b32.xlu0 %v838, 72
      %v842 = vpop.permute.xlu0 %841
      %v844 = vsel %vm478, %v840, 0
      %v847 = vsel %vm478, %v842, 0
      %849 = vmatprep.subr.bf16.mxu0 0
      %850 = vmatpush1.bf16.xpose.msra.mxu0 0
      %851 = vmatprep.subr.bf16.mxu0 0
      %852 = vmatpush1.bf16.xpose.msra.mxu0 0
      %853 = vmatprep.subr.bf16.mxu0 0
      %854 = vmatpush1.bf16.xpose.msra.mxu0 0
      %855 = vmatprep.subr.bf16.mxu0 0
      %856 = vmatpush1.bf16.xpose.msra.mxu0 0
      %857 = vmatprep.subr.bf16.mxu0 0
      %858 = vmatpush1.bf16.xpose.msra.mxu0 0
      %859 = vmatprep.subr.bf16.mxu0 0
      %860 = vmatpush1.bf16.xpose.msra.mxu0 0
      %861 = vmatprep.subr.bf16.mxu0 0
      %862 = vmatpush1.bf16.xpose.msra.mxu0 0
      %863 = vmatprep.subr.bf16.mxu0 0
      %864 = vmatpush1.bf16.xpose.msra.mxu0 %v847
      %865 = vmatprep.subr.bf16.mxu0 0
      %866 = vmatpush2.bf16.xpose.msra.mxu0 0
      %867 = vmatprep.subr.bf16.mxu0 0
      %868 = vmatpush2.bf16.xpose.msra.mxu0 0
      %869 = vmatprep.subr.bf16.mxu0 0
      %870 = vmatpush2.bf16.xpose.msra.mxu0 0
      %871 = vmatprep.subr.bf16.mxu0 0
      %872 = vmatpush2.bf16.xpose.msra.mxu0 0
      %873 = vmatprep.subr.bf16.mxu0 0
      %874 = vmatpush2.bf16.xpose.msra.mxu0 0
      %875 = vmatprep.subr.bf16.mxu0 0
      %876 = vmatpush2.bf16.xpose.msra.mxu0 0
      %877 = vmatprep.subr.bf16.mxu0 0
      %878 = vmatpush2.bf16.xpose.msra.mxu0 0
      %879 = vmatprep.subr.bf16.mxu0 0
      %880 = vmatpush2.bf16.xpose.msra.mxu0 0
      %881 = vmatprep.mubr.bf16.mxu0 0
      %882 = vmatmul.mubr.bf16.gmra.mxu0 %v844
      %v883 = vpop.f32.mrf.mxu0
      %v884 = vadd.f32 %v471, %v883
      %v885 = vpop.f32.mrf.mxu0
      %v886 = vpop.f32.mrf.mxu0
      %v887 = vpop.f32.mrf.mxu0
      %888 = vdwg.mxu0
      %v889 = vsel %vm478, %v884, -inf
      %890 = vmax.xlane.f32.xlu0 %v889
      %v891 = vpop.xlane.xlu0 %890
      %v892 = vsub.f32 %v884, %v891
      %v893 = vmul.f32 %v892, 1.442695
      %v894 = vpow.pop %v893
      %v895 = vsel %vm478, %v894, 0.0
      %896 = vadd.xlane.f32.xlu0 %v895
      %v897 = vpop.xlane.xlu0 %896
      %v898 = vrcp.pop %v897
      %v899 = vmul.f32 %v894, %v898
      %v900 = vpack.c.bf16 %v899, %v899
      %901 = vrot.lane.b32.xlu0 %v838, 40
      %v902 = vpop.permute.xlu0 %901
      %v904 = vsel %vm478, %v900, 0
      %v907 = vsel %vm542, %v902, 0
      %909 = vmatprep.subr.bf16.mxu0 0
      %910 = vmatpush1.bf16.msra.mxu0 0
      %911 = vmatprep.subr.bf16.mxu0 0
      %912 = vmatpush1.bf16.msra.mxu0 0
      %913 = vmatprep.subr.bf16.mxu0 0
      %914 = vmatpush1.bf16.msra.mxu0 0
      %915 = vmatprep.subr.bf16.mxu0 0
      %916 = vmatpush1.bf16.msra.mxu0 0
      %917 = vmatprep.subr.bf16.mxu0 0
      %918 = vmatpush1.bf16.msra.mxu0 0
      %919 = vmatprep.subr.bf16.mxu0 0
      %920 = vmatpush1.bf16.msra.mxu0 0
      %921 = vmatprep.subr.bf16.mxu0 0
      %922 = vmatpush1.bf16.msra.mxu0 0
      %923 = vmatprep.subr.bf16.mxu0 0
      %924 = vmatpush1.bf16.msra.mxu0 %v907
      %925 = vmatprep.subr.bf16.mxu0 0
      %926 = vmatpush2.bf16.msra.mxu0 0
      %927 = vmatprep.subr.bf16.mxu0 0
      %928 = vmatpush2.bf16.msra.mxu0 0
      %929 = vmatprep.subr.bf16.mxu0 0
      %930 = vmatpush2.bf16.msra.mxu0 0
      %931 = vmatprep.subr.bf16.mxu0 0
      %932 = vmatpush2.bf16.msra.mxu0 0
      %933 = vmatprep.subr.bf16.mxu0 0
      %934 = vmatpush2.bf16.msra.mxu0 0
      %935 = vmatprep.subr.bf16.mxu0 0
      %936 = vmatpush2.bf16.msra.mxu0 0
      %937 = vmatprep.subr.bf16.mxu0 0
      %938 = vmatpush2.bf16.msra.mxu0 0
      %939 = vmatprep.subr.bf16.mxu0 0
      %940 = vmatpush2.bf16.msra.mxu0 0
      %941 = vmatprep.mubr.bf16.mxu0 0
      %942 = vmatmul.mubr.bf16.gmra.mxu0 %v904
      %v943 = vpop.f32.mrf.mxu0
      %v944 = vadd.f32 0.0, %v943
      %v945 = vpop.f32.mrf.mxu0
      %v946 = vpop.f32.mrf.mxu0
      %v947 = vpop.f32.mrf.mxu0
      %948 = vdwg.mxu0
      %v949 = vpack.c.bf16 %v944, %v944
      %v951 = vunpack.c.l.b16 %v949
      %v952 = vpack.c.b16 %v951, %v951
      %953 = vrot.lane.b32.xlu0 %v952, 24
      %v954 = vpop.permute.xlu0 %953
      %vm956 = vcmask 257216
      %957 = vst.msk [vmem:[#allocation3] sm:$0xf] %vm956, %v954
      %s958 = scalar_lea.vmem [#allocation2], 4
      %v959 = vld [vmem:[%s958] sm:$0xf]
      %v961 = vunpack.c.l.b16 %v959
      %v962 = vpack.c.b16 %v961, %v961
      %963 = vrot.lane.b32.xlu0 %v962, 96
      %v964 = vpop.permute.xlu0 %963
      %v966 = vsel %vm478, %v959, 0
      %v969 = vsel %vm478, %v964, 0
      %971 = vmatprep.subr.bf16.mxu0 0
      %972 = vmatpush1.bf16.xpose.msra.mxu0 0
      %973 = vmatprep.subr.bf16.mxu0 0
      %974 = vmatpush1.bf16.xpose.msra.mxu0 0
      %975 = vmatprep.subr.bf16.mxu0 0
      %976 = vmatpush1.bf16.xpose.msra.mxu0 0
      %977 = vmatprep.subr.bf16.mxu0 0
      %978 = vmatpush1.bf16.xpose.msra.mxu0 0
      %979 = vmatprep.subr.bf16.mxu0 0
      %980 = vmatpush1.bf16.xpose.msra.mxu0 0
      %981 = vmatprep.subr.bf16.mxu0 0
      %982 = vmatpush1.bf16.xpose.msra.mxu0 0
      %983 = vmatprep.subr.bf16.mxu0 0
      %984 = vmatpush1.bf16.xpose.msra.mxu0 0
      %985 = vmatprep.subr.bf16.mxu0 0
      %986 = vmatpush1.bf16.xpose.msra.mxu0 %v969
      %987 = vmatprep.subr.bf16.mxu0 0
      %988 = vmatpush2.bf16.xpose.msra.mxu0 0
      %989 = vmatprep.subr.bf16.mxu0 0
      %990 = vmatpush2.bf16.xpose.msra.mxu0 0
      %991 = vmatprep.subr.bf16.mxu0 0
      %992 = vmatpush2.bf16.xpose.msra.mxu0 0
      %993 = vmatprep.subr.bf16.mxu0 0
      %994 = vmatpush2.bf16.xpose.msra.mxu0 0
      %995 = vmatprep.subr.bf16.mxu0 0
      %996 = vmatpush2.bf16.xpose.msra.mxu0 0
      %997 = vmatprep.subr.bf16.mxu0 0
      %998 = vmatpush2.bf16.xpose.msra.mxu0 0
      %999 = vmatprep.subr.bf16.mxu0 0
      %1000 = vmatpush2.bf16.xpose.msra.mxu0 0
      %1001 = vmatprep.subr.bf16.mxu0 0
      %1002 = vmatpush2.bf16.xpose.msra.mxu0 0
      %1003 = vmatprep.mubr.bf16.mxu0 0
      %1004 = vmatmul.mubr.bf16.gmra.mxu0 %v966
      %v1005 = vpop.f32.mrf.mxu0
      %v1006 = vadd.f32 %v471, %v1005
      %v1007 = vpop.f32.mrf.mxu0
      %v1008 = vpop.f32.mrf.mxu0
      %v1009 = vpop.f32.mrf.mxu0
      %1010 = vdwg.mxu0
      %v1011 = vsel %vm478, %v1006, -inf
      %1012 = vmax.xlane.f32.xlu0 %v1011
      %v1013 = vpop.xlane.xlu0 %1012
      %v1014 = vsub.f32 %v1006, %v1013
      %v1015 = vmul.f32 %v1014, 1.442695
      %v1016 = vpow.pop %v1015
      %v1017 = vsel %vm478, %v1016, 0.0
      %1018 = vadd.xlane.f32.xlu0 %v1017
      %v1019 = vpop.xlane.xlu0 %1018
      %v1020 = vrcp.pop %v1019
      %v1021 = vmul.f32 %v1016, %v1020
      %v1022 = vpack.c.bf16 %v1021, %v1021
      %1023 = vrot.lane.b32.xlu0 %v962, 64
      %v1024 = vpop.permute.xlu0 %1023
      %v1026 = vsel %vm478, %v1022, 0
      %v1029 = vsel %vm542, %v1024, 0
      %1031 = vmatprep.subr.bf16.mxu0 0
      %1032 = vmatpush1.bf16.msra.mxu0 0
      %1033 = vmatprep.subr.bf16.mxu0 0
      %1034 = vmatpush1.bf16.msra.mxu0 0
      %1035 = vmatprep.subr.bf16.mxu0 0
      %1036 = vmatpush1.bf16.msra.mxu0 0
      %1037 = vmatprep.subr.bf16.mxu0 0
      %1038 = vmatpush1.bf16.msra.mxu0 0
      %1039 = vmatprep.subr.bf16.mxu0 0
      %1040 = vmatpush1.bf16.msra.mxu0 0
      %1041 = vmatprep.subr.bf16.mxu0 0
      %1042 = vmatpush1.bf16.msra.mxu0 0
      %1043 = vmatprep.subr.bf16.mxu0 0
      %1044 = vmatpush1.bf16.msra.mxu0 0
      %1045 = vmatprep.subr.bf16.mxu0 0
      %1046 = vmatpush1.bf16.msra.mxu0 %v1029
      %1047 = vmatprep.subr.bf16.mxu0 0
      %1048 = vmatpush2.bf16.msra.mxu0 0
      %1049 = vmatprep.subr.bf16.mxu0 0
      %1050 = vmatpush2.bf16.msra.mxu0 0
      %1051 = vmatprep.subr.bf16.mxu0 0
      %1052 = vmatpush2.bf16.msra.mxu0 0
      %1053 = vmatprep.subr.bf16.mxu0 0
      %1054 = vmatpush2.bf16.msra.mxu0 0
      %1055 = vmatprep.subr.bf16.mxu0 0
      %1056 = vmatpush2.bf16.msra.mxu0 0
      %1057 = vmatprep.subr.bf16.mxu0 0
      %1058 = vmatpush2.bf16.msra.mxu0 0
      %1059 = vmatprep.subr.bf16.mxu0 0
      %1060 = vmatpush2.bf16.msra.mxu0 0
      %1061 = vmatprep.subr.bf16.mxu0 0
      %1062 = vmatpush2.bf16.msra.mxu0 0
      %1063 = vmatprep.mubr.bf16.mxu0 0
      %1064 = vmatmul.mubr.bf16.gmra.mxu0 %v1026
      %v1065 = vpop.f32.mrf.mxu0
      %v1066 = vadd.f32 0.0, %v1065
      %v1067 = vpop.f32.mrf.mxu0
      %v1068 = vpop.f32.mrf.mxu0
      %v1069 = vpop.f32.mrf.mxu0
      %1070 = vdwg.mxu0
      %v1071 = vpack.c.bf16 %v1066, %v1066
      %s1072 = scalar_lea.vmem [#allocation3], 4
      %1073 = vst.msk [vmem:[%s1072] sm:$0xf] %vm587, %v1071
      %v1074 = vld [vmem:[%s958] sm:$0xf]
      %v1076 = vunpack.c.l.b16 %v1074
      %v1077 = vpack.c.b16 %v1076, %v1076
      %1078 = vrot.lane.b32.xlu0 %v1077, 120
      %v1079 = vpop.permute.xlu0 %1078
      %1080 = vrot.lane.b32.xlu0 %v1077, 88
      %v1081 = vpop.permute.xlu0 %1080
      %v1083 = vsel %vm478, %v1079, 0
      %v1086 = vsel %vm478, %v1081, 0
      %1088 = vmatprep.subr.bf16.mxu0 0
      %1089 = vmatpush1.bf16.xpose.msra.mxu0 0
      %1090 = vmatprep.subr.bf16.mxu0 0
      %1091 = vmatpush1.bf16.xpose.msra.mxu0 0
      %1092 = vmatprep.subr.bf16.mxu0 0
      %1093 = vmatpush1.bf16.xpose.msra.mxu0 0
      %1094 = vmatprep.subr.bf16.mxu0 0
      %1095 = vmatpush1.bf16.xpose.msra.mxu0 0
      %1096 = vmatprep.subr.bf16.mxu0 0
      %1097 = vmatpush1.bf16.xpose.msra.mxu0 0
      %1098 = vmatprep.subr.bf16.mxu0 0
      %1099 = vmatpush1.bf16.xpose.msra.mxu0 0
      %1100 = vmatprep.subr.bf16.mxu0 0
      %1101 = vmatpush1.bf16.xpose.msra.mxu0 0
      %1102 = vmatprep.subr.bf16.mxu0 0
      %1103 = vmatpush1.bf16.xpose.msra.mxu0 %v1086
      %1104 = vmatprep.subr.bf16.mxu0 0
      %1105 = vmatpush2.bf16.xpose.msra.mxu0 0
      %1106 = vmatprep.subr.bf16.mxu0 0
      %1107 = vmatpush2.bf16.xpose.msra.mxu0 0
      %1108 = vmatprep.subr.bf16.mxu0 0
      %1109 = vmatpush2.bf16.xpose.msra.mxu0 0
      %1110 = vmatprep.subr.bf16.mxu0 0
      %1111 = vmatpush2.bf16.xpose.msra.mxu0 0
      %1112 = vmatprep.subr.bf16.mxu0 0
      %1113 = vmatpush2.bf16.xpose.msra.mxu0 0
      %1114 = vmatprep.subr.bf16.mxu0 0
      %1115 = vmatpush2.bf16.xpose.msra.mxu0 0
      %1116 = vmatprep.subr.bf16.mxu0 0
      %1117 = vmatpush2.bf16.xpose.msra.mxu0 0
      %1118 = vmatprep.subr.bf16.mxu0 0
      %1119 = vmatpush2.bf16.xpose.msra.mxu0 0
      %1120 = vmatprep.mubr.bf16.mxu0 0
      %1121 = vmatmul.mubr.bf16.gmra.mxu0 %v1083
      %v1122 = vpop.f32.mrf.mxu0
      %v1123 = vadd.f32 %v471, %v1122
      %v1124 = vpop.f32.mrf.mxu0
      %v1125 = vpop.f32.mrf.mxu0
      %v1126 = vpop.f32.mrf.mxu0
      %1127 = vdwg.mxu0
      %v1128 = vsel %vm478, %v1123, -inf
      %1129 = vmax.xlane.f32.xlu0 %v1128
      %v1130 = vpop.xlane.xlu0 %1129
      %v1131 = vsub.f32 %v1123, %v1130
      %v1132 = vmul.f32 %v1131, 1.442695
      %v1133 = vpow.pop %v1132
      %v1134 = vsel %vm478, %v1133, 0.0
      %1135 = vadd.xlane.f32.xlu0 %v1134
      %v1136 = vpop.xlane.xlu0 %1135
      %v1137 = vrcp.pop %v1136
      %v1138 = vmul.f32 %v1133, %v1137
      %v1139 = vpack.c.bf16 %v1138, %v1138
      %1140 = vrot.lane.b32.xlu0 %v1077, 56
      %v1141 = vpop.permute.xlu0 %1140
      %v1143 = vsel %vm478, %v1139, 0
      %v1146 = vsel %vm542, %v1141, 0
      %1148 = vmatprep.subr.bf16.mxu0 0
      %1149 = vmatpush1.bf16.msra.mxu0 0
      %1150 = vmatprep.subr.bf16.mxu0 0
      %1151 = vmatpush1.bf16.msra.mxu0 0
      %1152 = vmatprep.subr.bf16.mxu0 0
      %1153 = vmatpush1.bf16.msra.mxu0 0
      %1154 = vmatprep.subr.bf16.mxu0 0
      %1155 = vmatpush1.bf16.msra.mxu0 0
      %1156 = vmatprep.subr.bf16.mxu0 0
      %1157 = vmatpush1.bf16.msra.mxu0 0
      %1158 = vmatprep.subr.bf16.mxu0 0
      %1159 = vmatpush1.bf16.msra.mxu0 0
      %1160 = vmatprep.subr.bf16.mxu0 0
      %1161 = vmatpush1.bf16.msra.mxu0 0
      %1162 = vmatprep.subr.bf16.mxu0 0
      %1163 = vmatpush1.bf16.msra.mxu0 %v1146
      %1164 = vmatprep.subr.bf16.mxu0 0
      %1165 = vmatpush2.bf16.msra.mxu0 0
      %1166 = vmatprep.subr.bf16.mxu0 0
      %1167 = vmatpush2.bf16.msra.mxu0 0
      %1168 = vmatprep.subr.bf16.mxu0 0
      %1169 = vmatpush2.bf16.msra.mxu0 0
      %1170 = vmatprep.subr.bf16.mxu0 0
      %1171 = vmatpush2.bf16.msra.mxu0 0
      %1172 = vmatprep.subr.bf16.mxu0 0
      %1173 = vmatpush2.bf16.msra.mxu0 0
      %1174 = vmatprep.subr.bf16.mxu0 0
      %1175 = vmatpush2.bf16.msra.mxu0 0
      %1176 = vmatprep.subr.bf16.mxu0 0
      %1177 = vmatpush2.bf16.msra.mxu0 0
      %1178 = vmatprep.subr.bf16.mxu0 0
      %1179 = vmatpush2.bf16.msra.mxu0 0
      %1180 = vmatprep.mubr.bf16.mxu0 0
      %1181 = vmatmul.mubr.bf16.gmra.mxu0 %v1143
      %v1182 = vpop.f32.mrf.mxu0
      %v1183 = vadd.f32 0.0, %v1182
      %v1184 = vpop.f32.mrf.mxu0
      %v1185 = vpop.f32.mrf.mxu0
      %v1186 = vpop.f32.mrf.mxu0
      %1187 = vdwg.mxu0
      %v1188 = vpack.c.bf16 %v1183, %v1183
      %v1190 = vunpack.c.l.b16 %v1188
      %v1191 = vpack.c.b16 %v1190, %v1190
      %1192 = vrot.lane.b32.xlu0 %v1191, 8
      %v1193 = vpop.permute.xlu0 %1192
      %1195 = vst.msk [vmem:[%s1072] sm:$0xf] %vm710, %v1193
      %v1196 = vld [vmem:[%s958] sm:$0xf]
      %v1198 = vunpack.c.l.b16 %v1196
      %v1199 = vpack.c.b16 %v1198, %v1198
      %1200 = vrot.lane.b32.xlu0 %v1199, 112
      %v1201 = vpop.permute.xlu0 %1200
      %1202 = vrot.lane.b32.xlu0 %v1199, 80
      %v1203 = vpop.permute.xlu0 %1202
      %v1205 = vsel %vm478, %v1201, 0
      %v1208 = vsel %vm478, %v1203, 0
      %1210 = vmatprep.subr.bf16.mxu0 0
      %1211 = vmatpush1.bf16.xpose.msra.mxu0 0
      %1212 = vmatprep.subr.bf16.mxu0 0
      %1213 = vmatpush1.bf16.xpose.msra.mxu0 0
      %1214 = vmatprep.subr.bf16.mxu0 0
      %1215 = vmatpush1.bf16.xpose.msra.mxu0 0
      %1216 = vmatprep.subr.bf16.mxu0 0
      %1217 = vmatpush1.bf16.xpose.msra.mxu0 0
      %1218 = vmatprep.subr.bf16.mxu0 0
      %1219 = vmatpush1.bf16.xpose.msra.mxu0 0
      %1220 = vmatprep.subr.bf16.mxu0 0
      %1221 = vmatpush1.bf16.xpose.msra.mxu0 0
      %1222 = vmatprep.subr.bf16.mxu0 0
      %1223 = vmatpush1.bf16.xpose.msra.mxu0 0
      %1224 = vmatprep.subr.bf16.mxu0 0
      %1225 = vmatpush1.bf16.xpose.msra.mxu0 %v1208
      %1226 = vmatprep.subr.bf16.mxu0 0
      %1227 = vmatpush2.bf16.xpose.msra.mxu0 0
      %1228 = vmatprep.subr.bf16.mxu0 0
      %1229 = vmatpush2.bf16.xpose.msra.mxu0 0
      %1230 = vmatprep.subr.bf16.mxu0 0
      %1231 = vmatpush2.bf16.xpose.msra.mxu0 0
      %1232 = vmatprep.subr.bf16.mxu0 0
      %1233 = vmatpush2.bf16.xpose.msra.mxu0 0
      %1234 = vmatprep.subr.bf16.mxu0 0
      %1235 = vmatpush2.bf16.xpose.msra.mxu0 0
      %1236 = vmatprep.subr.bf16.mxu0 0
      %1237 = vmatpush2.bf16.xpose.msra.mxu0 0
      %1238 = vmatprep.subr.bf16.mxu0 0
      %1239 = vmatpush2.bf16.xpose.msra.mxu0 0
      %1240 = vmatprep.subr.bf16.mxu0 0
      %1241 = vmatpush2.bf16.xpose.msra.mxu0 0
      %1242 = vmatprep.mubr.bf16.mxu0 0
      %1243 = vmatmul.mubr.bf16.gmra.mxu0 %v1205
      %v1244 = vpop.f32.mrf.mxu0
      %v1245 = vadd.f32 %v471, %v1244
      %v1246 = vpop.f32.mrf.mxu0
      %v1247 = vpop.f32.mrf.mxu0
      %v1248 = vpop.f32.mrf.mxu0
      %1249 = vdwg.mxu0
      %v1250 = vsel %vm478, %v1245, -inf
      %1251 = vmax.xlane.f32.xlu0 %v1250
      %v1252 = vpop.xlane.xlu0 %1251
      %v1253 = vsub.f32 %v1245, %v1252
      %v1254 = vmul.f32 %v1253, 1.442695
      %v1255 = vpow.pop %v1254
      %v1256 = vsel %vm478, %v1255, 0.0
      %1257 = vadd.xlane.f32.xlu0 %v1256
      %v1258 = vpop.xlane.xlu0 %1257
      %v1259 = vrcp.pop %v1258
      %v1260 = vmul.f32 %v1255, %v1259
      %v1261 = vpack.c.bf16 %v1260, %v1260
      %1262 = vrot.lane.b32.xlu0 %v1199, 48
      %v1263 = vpop.permute.xlu0 %1262
      %v1265 = vsel %vm478, %v1261, 0
      %v1268 = vsel %vm542, %v1263, 0
      %1270 = vmatprep.subr.bf16.mxu0 0
      %1271 = vmatpush1.bf16.msra.mxu0 0
      %1272 = vmatprep.subr.bf16.mxu0 0
      %1273 = vmatpush1.bf16.msra.mxu0 0
      %1274 = vmatprep.subr.bf16.mxu0 0
      %1275 = vmatpush1.bf16.msra.mxu0 0
      %1276 = vmatprep.subr.bf16.mxu0 0
      %1277 = vmatpush1.bf16.msra.mxu0 0
      %1278 = vmatprep.subr.bf16.mxu0 0
      %1279 = vmatpush1.bf16.msra.mxu0 0
      %1280 = vmatprep.subr.bf16.mxu0 0
      %1281 = vmatpush1.bf16.msra.mxu0 0
      %1282 = vmatprep.subr.bf16.mxu0 0
      %1283 = vmatpush1.bf16.msra.mxu0 0
      %1284 = vmatprep.subr.bf16.mxu0 0
      %1285 = vmatpush1.bf16.msra.mxu0 %v1268
      %1286 = vmatprep.subr.bf16.mxu0 0
      %1287 = vmatpush2.bf16.msra.mxu0 0
      %1288 = vmatprep.subr.bf16.mxu0 0
      %1289 = vmatpush2.bf16.msra.mxu0 0
      %1290 = vmatprep.subr.bf16.mxu0 0
      %1291 = vmatpush2.bf16.msra.mxu0 0
      %1292 = vmatprep.subr.bf16.mxu0 0
      %1293 = vmatpush2.bf16.msra.mxu0 0
      %1294 = vmatprep.subr.bf16.mxu0 0
      %1295 = vmatpush2.bf16.msra.mxu0 0
      %1296 = vmatprep.subr.bf16.mxu0 0
      %1297 = vmatpush2.bf16.msra.mxu0 0
      %1298 = vmatprep.subr.bf16.mxu0 0
      %1299 = vmatpush2.bf16.msra.mxu0 0
      %1300 = vmatprep.subr.bf16.mxu0 0
      %1301 = vmatpush2.bf16.msra.mxu0 0
      %1302 = vmatprep.mubr.bf16.mxu0 0
      %1303 = vmatmul.mubr.bf16.gmra.mxu0 %v1265
      %v1304 = vpop.f32.mrf.mxu0
      %v1305 = vadd.f32 0.0, %v1304
      %v1306 = vpop.f32.mrf.mxu0
      %v1307 = vpop.f32.mrf.mxu0
      %v1308 = vpop.f32.mrf.mxu0
      %1309 = vdwg.mxu0
      %v1310 = vpack.c.bf16 %v1305, %v1305
      %v1312 = vunpack.c.l.b16 %v1310
      %v1313 = vpack.c.b16 %v1312, %v1312
      %1314 = vrot.lane.b32.xlu0 %v1313, 16
      %v1315 = vpop.permute.xlu0 %1314
      %1317 = vst.msk [vmem:[%s1072] sm:$0xf] %vm833, %v1315
      %v1318 = vld [vmem:[%s958] sm:$0xf]
      %v1320 = vunpack.c.l.b16 %v1318
      %v1321 = vpack.c.b16 %v1320, %v1320
      %1322 = vrot.lane.b32.xlu0 %v1321, 104
      %v1323 = vpop.permute.xlu0 %1322
      %1324 = vrot.lane.b32.xlu0 %v1321, 72
      %v1325 = vpop.permute.xlu0 %1324
      %v1327 = vsel %vm478, %v1323, 0
      %v1330 = vsel %vm478, %v1325, 0
      %1332 = vmatprep.subr.bf16.mxu0 0
      %1333 = vmatpush1.bf16.xpose.msra.mxu0 0
      %1334 = vmatprep.subr.bf16.mxu0 0
      %1335 = vmatpush1.bf16.xpose.msra.mxu0 0
      %1336 = vmatprep.subr.bf16.mxu0 0
      %1337 = vmatpush1.bf16.xpose.msra.mxu0 0
      %1338 = vmatprep.subr.bf16.mxu0 0
      %1339 = vmatpush1.bf16.xpose.msra.mxu0 0
      %1340 = vmatprep.subr.bf16.mxu0 0
      %1341 = vmatpush1.bf16.xpose.msra.mxu0 0
      %1342 = vmatprep.subr.bf16.mxu0 0
      %1343 = vmatpush1.bf16.xpose.msra.mxu0 0
      %1344 = vmatprep.subr.bf16.mxu0 0
      %1345 = vmatpush1.bf16.xpose.msra.mxu0 0
      %1346 = vmatprep.subr.bf16.mxu0 0
      %1347 = vmatpush1.bf16.xpose.msra.mxu0 %v1330
      %1348 = vmatprep.subr.bf16.mxu0 0
      %1349 = vmatpush2.bf16.xpose.msra.mxu0 0
      %1350 = vmatprep.subr.bf16.mxu0 0
      %1351 = vmatpush2.bf16.xpose.msra.mxu0 0
      %1352 = vmatprep.subr.bf16.mxu0 0
      %1353 = vmatpush2.bf16.xpose.msra.mxu0 0
      %1354 = vmatprep.subr.bf16.mxu0 0
      %1355 = vmatpush2.bf16.xpose.msra.mxu0 0
      %1356 = vmatprep.subr.bf16.mxu0 0
      %1357 = vmatpush2.bf16.xpose.msra.mxu0 0
      %1358 = vmatprep.subr.bf16.mxu0 0
      %1359 = vmatpush2.bf16.xpose.msra.mxu0 0
      %1360 = vmatprep.subr.bf16.mxu0 0
      %1361 = vmatpush2.bf16.xpose.msra.mxu0 0
      %1362 = vmatprep.subr.bf16.mxu0 0
      %1363 = vmatpush2.bf16.xpose.msra.mxu0 0
      %1364 = vmatprep.mubr.bf16.mxu0 0
      %1365 = vmatmul.mubr.bf16.gmra.mxu0 %v1327
      %v1366 = vpop.f32.mrf.mxu0
      %v1367 = vadd.f32 %v471, %v1366
      %v1368 = vpop.f32.mrf.mxu0
      %v1369 = vpop.f32.mrf.mxu0
      %v1370 = vpop.f32.mrf.mxu0
      %1371 = vdwg.mxu0
      %v1372 = vsel %vm478, %v1367, -inf
      %1373 = vmax.xlane.f32.xlu0 %v1372
      %v1374 = vpop.xlane.xlu0 %1373
      %v1375 = vsub.f32 %v1367, %v1374
      %v1376 = vmul.f32 %v1375, 1.442695
      %v1377 = vpow.pop %v1376
      %v1378 = vsel %vm478, %v1377, 0.0
      %1379 = vadd.xlane.f32.xlu0 %v1378
      %v1380 = vpop.xlane.xlu0 %1379
      %v1381 = vrcp.pop %v1380
      %v1382 = vmul.f32 %v1377, %v1381
      %v1383 = vpack.c.bf16 %v1382, %v1382
      %1384 = vrot.lane.b32.xlu0 %v1321, 40
      %v1385 = vpop.permute.xlu0 %1384
      %v1387 = vsel %vm478, %v1383, 0
      %v1390 = vsel %vm542, %v1385, 0
      %1392 = vmatprep.subr.bf16.mxu0 0
      %1393 = vmatpush1.bf16.msra.mxu0 0
      %1394 = vmatprep.subr.bf16.mxu0 0
      %1395 = vmatpush1.bf16.msra.mxu0 0
      %1396 = vmatprep.subr.bf16.mxu0 0
      %1397 = vmatpush1.bf16.msra.mxu0 0
      %1398 = vmatprep.subr.bf16.mxu0 0
      %1399 = vmatpush1.bf16.msra.mxu0 0
      %1400 = vmatprep.subr.bf16.mxu0 0
      %1401 = vmatpush1.bf16.msra.mxu0 0
      %1402 = vmatprep.subr.bf16.mxu0 0
      %1403 = vmatpush1.bf16.msra.mxu0 0
      %1404 = vmatprep.subr.bf16.mxu0 0
      %1405 = vmatpush1.bf16.msra.mxu0 0
      %1406 = vmatprep.subr.bf16.mxu0 0
      %1407 = vmatpush1.bf16.msra.mxu0 %v1390
      %1408 = vmatprep.subr.bf16.mxu0 0
      %1409 = vmatpush2.bf16.msra.mxu0 0
      %1410 = vmatprep.subr.bf16.mxu0 0
      %1411 = vmatpush2.bf16.msra.mxu0 0
      %1412 = vmatprep.subr.bf16.mxu0 0
      %1413 = vmatpush2.bf16.msra.mxu0 0
      %1414 = vmatprep.subr.bf16.mxu0 0
      %1415 = vmatpush2.bf16.msra.mxu0 0
      %1416 = vmatprep.subr.bf16.mxu0 0
      %1417 = vmatpush2.bf16.msra.mxu0 0
      %1418 = vmatprep.subr.bf16.mxu0 0
      %1419 = vmatpush2.bf16.msra.mxu0 0
      %1420 = vmatprep.subr.bf16.mxu0 0
      %1421 = vmatpush2.bf16.msra.mxu0 0
      %1422 = vmatprep.subr.bf16.mxu0 0
      %1423 = vmatpush2.bf16.msra.mxu0 0
      %1424 = vmatprep.mubr.bf16.mxu0 0
      %1425 = vmatmul.mubr.bf16.gmra.mxu0 %v1387
      %v1426 = vpop.f32.mrf.mxu0
      %v1427 = vadd.f32 0.0, %v1426
      %v1428 = vpop.f32.mrf.mxu0
      %v1429 = vpop.f32.mrf.mxu0
      %v1430 = vpop.f32.mrf.mxu0
      %1431 = vdwg.mxu0
      %v1432 = vpack.c.bf16 %v1427, %v1427
      %v1434 = vunpack.c.l.b16 %v1432
      %v1435 = vpack.c.b16 %v1434, %v1434
      %1436 = vrot.lane.b32.xlu0 %v1435, 24
      %v1437 = vpop.permute.xlu0 %1436
      %1439 = vst.msk [vmem:[%s1072] sm:$0xf] %vm956, %v1437
      %v1440 = vld [vmem:[#allocation3] sm:$0xf]
      %v1441 = vld [vmem:[#allocation3 + $0x4] sm:$0xf]
      %v1442 = vld [vmem:[%s333] sm:$0xf]
      %v1443 = vld [vmem:[%s333 + $0x4] sm:$0xf]
      %v1444 = vld [vmem:[%s333 + $0x8] sm:$0xf]
      %v1445 = vld [vmem:[%s333 + $0xc] sm:$0xf]
      %v1446 = vld [vmem:[%s322] sm:$0xf]
      %v1447 = vld [vmem:[%s322 + $0x4] sm:$0xf]
      %v1448 = vld [vmem:[%s6] sm:$0x1]
      %v1450 = vlaneseq
      %v1451 = vshrl.u32 %v1450, 7
      %v1452 = vsub.s32 0, %v1451
      %v1453 = vrot.slane %v1448, %v1452
      %v1457 = vunpack.c.l.b16 %v1440
      %v1458 = vunpack.c.l.b16 %v1441
      %v1459 = vpack.c.b16 %v1458, %v1457
      %v1464 = vunpack.c.l.b16 %v1442
      %v1465 = vunpack.c.l.b16 %v1443
      %v1466 = vunpack.c.l.b16 %v1444
      %v1467 = vunpack.c.l.b16 %v1445
      %v1468 = vpack.c.b16 %v1465, %v1464
      %v1469 = vpack.c.b16 %v1467, %v1466
      %v1473 = vsel %vm351, %v1459, 0
      %1475 = vmatprep.subr.bf16.mxu0 0
      %1476 = vmatpush1.bf16.msra.mxu0 0
      %1477 = vmatprep.subr.bf16.mxu0 0
      %1478 = vmatpush1.bf16.msra.mxu0 0
      %1479 = vmatprep.subr.bf16.mxu0 0
      %1480 = vmatpush1.bf16.msra.mxu0 0
      %1481 = vmatprep.subr.bf16.mxu0 0
      %1482 = vmatpush1.bf16.msra.mxu0 0
      %1483 = vmatprep.subr.bf16.mxu0 0
      %1484 = vmatpush1.bf16.msra.mxu0 0
      %1485 = vmatprep.subr.bf16.mxu0 0
      %1486 = vmatpush1.bf16.msra.mxu0 0
      %1487 = vmatprep.subr.bf16.mxu0 0
      %1488 = vmatpush1.bf16.msra.mxu0 %v1469
      %1489 = vmatprep.subr.bf16.mxu0 0
      %1490 = vmatpush1.bf16.msra.mxu0 %v1468
      %1491 = vmatprep.subr.bf16.mxu0 0
      %1492 = vmatpush2.bf16.msra.mxu0 0
      %1493 = vmatprep.subr.bf16.mxu0 0
      %1494 = vmatpush2.bf16.msra.mxu0 0
      %1495 = vmatprep.subr.bf16.mxu0 0
      %1496 = vmatpush2.bf16.msra.mxu0 0
      %1497 = vmatprep.subr.bf16.mxu0 0
      %1498 = vmatpush2.bf16.msra.mxu0 0
      %1499 = vmatprep.subr.bf16.mxu0 0
      %1500 = vmatpush2.bf16.msra.mxu0 0
      %1501 = vmatprep.subr.bf16.mxu0 0
      %1502 = vmatpush2.bf16.msra.mxu0 0
      %1503 = vmatprep.subr.bf16.mxu0 0
      %1504 = vmatpush2.bf16.msra.mxu0 0
      %1505 = vmatprep.subr.bf16.mxu0 0
      %1506 = vmatpush2.bf16.msra.mxu0 0
      %1507 = vmatprep.mubr.bf16.mxu0 0
      %1508 = vmatmul.mubr.bf16.gmra.mxu0 %v1473
      %v1509 = vpop.f32.mrf.mxu0
      %v1510 = vadd.f32 %v1453, %v1509
      %v1511 = vpop.f32.mrf.mxu0
      %v1512 = vpop.f32.mrf.mxu0
      %v1513 = vadd.f32 %v1453, %v1512
      %v1514 = vpop.f32.mrf.mxu0
      %1515 = vdwg.mxu0
      %v1516 = vunpack.c.l.bf16 %v1446
      %v1517 = vunpack.c.l.bf16 %v1447
      %v1518 = vadd.f32 %v1510, %v1516
      %v1519 = vadd.f32 %v1513, %v1517
      %v1520 = vpack.c.bf16 %v1518, %v1518
      %v1521 = vpack.c.bf16 %v1519, %v1519
      %vm1522 = vcmask 257024
      %1523 = vst.msk [vmem:[%s342] sm:$0xf] %vm1522, %v1520
      %1524 = vst.msk [vmem:[%s342 + $0x4] sm:$0xf] %vm1522, %v1521
      %s1525 = smul.u32 2, %s23
      %p1526 = scmp.lt.s32.totalorder %s22, 1
      %s1527 = scalar_select %p1526, %s22, 1
      %p1528 = scmp.lt.s32.totalorder %s1525, 1
      %s1529 = scalar_select %p1528, %s1525, 1
      %s1530 = smul.addr %s1527, 2
      %s1531 = sadd.s32 %s1529, %s1530
      %s1532 = smul.addr %s1531, 4
      %s1533 = scalar_lea.vmem %s7, %s1532
      // Predicated region
      $region49: #{lora_ensemble_forward.7} parent=47 // pred_check
        %p1534 = pneg %p212
      $region50: #{lora_ensemble_forward.7} parent=47 // pred_check_branch
        %1536 = sbr.rel (%p1534) target = $region52
      $region51: #{lora_ensemble_forward.7} parent=47 // pred_region
        %s1537 = smul.u32 2, %s23
      $region52: #{lora_ensemble_forward.7} parent=47 // pred_fallthru
        _
    $region48: #{lora_ensemble_forward.7} parent=5 // pred_fallthru
      _
    %p1538 = scmp.le.s32.totalorder 2, %s13
    // Predicated region
    $region53: #{lora_ensemble_forward.7} parent=5 // pred_check
      %p1539 = pneg %p1538
    $region54: #{lora_ensemble_forward.7} parent=5 // pred_check_branch
      %1541 = sbr.rel (%p1539) target = $region56
    $region55: #{lora_ensemble_forward.7} parent=5 // pred_region
      %s1542 = ssub.s32 %s13, 2
      // Predicated region
      $region57: #{lora_ensemble_forward.7} parent=55 // pred_check
        %p1543 = pneg %p218
      $region58: #{lora_ensemble_forward.7} parent=55 // pred_check_branch
        %1545 = sbr.rel (%p1543) target = $region60
      $region59: #{lora_ensemble_forward.7} parent=55 // pred_region
        %s1546 = smul.u32 2, %s25
        %p1547 = scmp.lt.s32.totalorder %s24, 1
        %s1548 = scalar_select %p1547, %s24, 1
        %p1549 = scmp.lt.s32.totalorder %s1546, 1
        %s1550 = scalar_select %p1549, %s1546, 1
        %s1551 = smul.addr %s1548, 2
        %s1552 = sadd.s32 %s1550, %s1551
        %s1553 = smul.addr %s1552, 4
        %s1554 = scalar_lea.vmem %s7, %s1553
      $region60: #{lora_ensemble_forward.7} parent=55 // pred_fallthru
        _
    $region56: #{lora_ensemble_forward.7} parent=5 // pred_fallthru
      _
  $region6: #{lora_ensemble_forward.7} parent=0 // loop_footer
    %s17 = sadd.s32 1, %s13
  $region7: #{lora_ensemble_forward.7} parent=0 // loop_footer_branch
    %12 = sbr.rel target = $region3
  $region8: #{lora_ensemble_forward.7} parent=0 // loop_exit
    _

// kernel: lora_ensemble_forward.9
$region0: #{lora_ensemble_forward.9}
  #allocation0 [shape = 'u32[]', space=smem, size = 0x4, offset = 0x4, fixed_abs, tag = 'smem constant byte address 0x4 - core index']
  #allocation1 [shape = 'u32[144,128]{1,0:T(1,128)}', space=vmem, size = 0x12000, scoped, tag = 'internal scratch']
  #allocation2 [shape = 'bf16[2,8,96]{2,1,0:T(8,128)(2,1)}', space=vmem, size = 0x1000, scoped, tag = 'scratch operand']
  #allocation3 [shape = 'bf16[2,8,32]{2,1,0:T(8,128)(2,1)}', space=vmem, size = 0x1000, scoped, tag = 'scratch operand']
  %s0 = inlined_call_operand.vmem [shape: bf16[2,2,8,32], index: 0, kind: input, shape index: {}]
  %s1 = inlined_call_operand.vmem [shape: f32[1,32], index: 1, kind: input, shape index: {}]
  %s2 = inlined_call_operand.vmem [shape: f32[1,32], index: 2, kind: input, shape index: {}]
  %s3 = inlined_call_operand.vmem [shape: bf16[2,32,96], index: 3, kind: input, shape index: {}]
  %s4 = inlined_call_operand.vmem [shape: f32[1,96], index: 4, kind: input, shape index: {}]
  %s5 = inlined_call_operand.vmem [shape: bf16[2,32,32], index: 5, kind: input, shape index: {}]
  %s6 = inlined_call_operand.vmem [shape: f32[1,32], index: 6, kind: input, shape index: {}]
  %s7 = inlined_call_operand.vmem [shape: bf16[2,2,8,32], index: 7, kind: output, shape index: {}]
  %s8 = sld [smem:[#allocation0]]
  $region61: #{lora_ensemble_forward.9} parent=0
    _
  %s10 = ssub.s32 1, %s8
  %s11 = scalar_select 0, %s10, %s8
  loop: start=0, step=1, limit=4
  $region2: #{lora_ensemble_forward.9} parent=0 // loop_pre_header
    _
  $region3: #{lora_ensemble_forward.9} parent=0 // loop_header
    %s13 = sphi 0, %s17
    %p14 = scmp.ge.s32.totalorder %s13, 4
    %s20 = sphi 0, %s32
    %s21 = sphi 0, %s28
    %s22 = sphi 0, %s20
    %s23 = sphi 0, %s21
    %s24 = sphi 0, %s22
    %s25 = sphi 0, %s23
    %s37 = sphi 0, %s39
    %s40 = sphi 0, %s37
    %s41 = sphi 0, %s40
    %s57 = sphi 0, %s41
    %s61 = sphi 0, %s61
    %s63 = sphi 0, %s61
    %s64 = sphi 0, %s63
    %s78 = sphi 0, %s64
    %s82 = sphi 0, %s82
    %s84 = sphi 0, %s82
    %s85 = sphi 0, %s84
    %s99 = sphi 0, %s85
    %s105 = sphi 0, %s107
    %s108 = sphi 0, %s105
    %s109 = sphi 0, %s108
    %s125 = sphi 0, %s109
    %s129 = sphi 0, %s129
    %s131 = sphi 0, %s129
    %s132 = sphi 0, %s131
    %s146 = sphi 0, %s132
    %s152 = sphi 0, %s154
    %s155 = sphi 0, %s152
    %s156 = sphi 0, %s155
    %s172 = sphi 0, %s156
    %s176 = sphi 0, %s176
    %s178 = sphi 0, %s176
    %s179 = sphi 0, %s178
    %s193 = sphi 0, %s179
    %s201 = sphi 0, %s203
    %s204 = sphi 0, %s201
    %s205 = sphi 0, %s204
    %s221 = sphi 0, %s205
  $region4: #{lora_ensemble_forward.9} parent=0 // loop_header_branch
    %16 = sbr.rel (%p14) target = $region8
  $region5: #{lora_ensemble_forward.9} parent=0 // loop_body
    %s18 = ssub.s32 %s13, 1
    %s19 = ssub.s32 %s13, 2
    %s26 = sadd.s32 1, %s21
    %p27 = scmp.ge.s32.totalorder %s26, 1
    %s28 = scalar_select %p27, 0, %s26
    %s29 = sadd.s32 1, %s20
    %s30 = scalar_select %p27, %s29, %s20
    %p31 = scmp.ge.s32.totalorder %s30, 2
    %s32 = scalar_select %p31, 0, %s30
    %s33 = ssub.s32 %s20, %s32
    %s34 = ssub.s32 %s21, %s28
    %s35 = sor.u32 %s33, %s34
    %p36 = scmp.eq.s32.totalorder %s35, 0
    %s38 = sadd.s32 %s37, 1
    %s39 = scalar_select %p36, %s37, %s38
    %p42 = pneg %p36
    %p43 = scmp.eq.s32.totalorder %s13, 1
    %p44 = por %p42, %p43
    %p45 = scmp.ne.s32.totalorder %s37, %s40
    %p46 = scmp.eq.s32.totalorder %s13, 0
    %p47 = por %p45, %p46
    %p48 = scmp.ne.s32.totalorder %s37, %s40
    %p49 = scmp.eq.s32.totalorder %s18, 1
    %p50 = por %p48, %p49
    %p51 = scmp.ne.s32.totalorder %s40, %s41
    %p52 = scmp.eq.s32.totalorder %s18, 0
    %p53 = por %p51, %p52
    %p54 = scmp.ne.s32.totalorder %s40, %s41
    %p55 = scmp.eq.s32.totalorder %s19, 1
    %p56 = por %p54, %p55
    %p58 = scmp.ne.s32.totalorder %s41, %s57
    %p59 = scmp.eq.s32.totalorder %s19, 0
    %p60 = por %p58, %p59
    %s62 = sadd.s32 %s61, 1
    %p65 = scmp.eq.s32.totalorder %s13, 1
    %p66 = scmp.ne.s32.totalorder %s61, %s63
    %p67 = scmp.eq.s32.totalorder %s13, 0
    %p68 = por %p66, %p67
    %p69 = scmp.ne.s32.totalorder %s61, %s63
    %p70 = scmp.eq.s32.totalorder %s18, 1
    %p71 = por %p69, %p70
    %p72 = scmp.ne.s32.totalorder %s63, %s64
    %p73 = scmp.eq.s32.totalorder %s18, 0
    %p74 = por %p72, %p73
    %p75 = scmp.ne.s32.totalorder %s63, %s64
    %p76 = scmp.eq.s32.totalorder %s19, 1
    %p77 = por %p75, %p76
    %p79 = scmp.ne.s32.totalorder %s64, %s78
    %p80 = scmp.eq.s32.totalorder %s19, 0
    %p81 = por %p79, %p80
    %s83 = sadd.s32 %s82, 1
    %p86 = scmp.eq.s32.totalorder %s13, 1
    %p87 = scmp.ne.s32.totalorder %s82, %s84
    %p88 = scmp.eq.s32.totalorder %s13, 0
    %p89 = por %p87, %p88
    %p90 = scmp.ne.s32.totalorder %s82, %s84
    %p91 = scmp.eq.s32.totalorder %s18, 1
    %p92 = por %p90, %p91
    %p93 = scmp.ne.s32.totalorder %s84, %s85
    %p94 = scmp.eq.s32.totalorder %s18, 0
    %p95 = por %p93, %p94
    %p96 = scmp.ne.s32.totalorder %s84, %s85
    %p97 = scmp.eq.s32.totalorder %s19, 1
    %p98 = por %p96, %p97
    %p100 = scmp.ne.s32.totalorder %s85, %s99
    %p101 = scmp.eq.s32.totalorder %s19, 0
    %p102 = por %p100, %p101
    %s103 = ssub.s32 %s20, %s32
    %p104 = scmp.eq.s32.totalorder %s103, 0
    %s106 = sadd.s32 %s105, 1
    %s107 = scalar_select %p104, %s105, %s106
    %p110 = pneg %p104
    %p111 = scmp.eq.s32.totalorder %s13, 1
    %p112 = por %p110, %p111
    %p113 = scmp.ne.s32.totalorder %s105, %s108
    %p114 = scmp.eq.s32.totalorder %s13, 0
    %p115 = por %p113, %p114
    %p116 = scmp.ne.s32.totalorder %s105, %s108
    %p117 = scmp.eq.s32.totalorder %s18, 1
    %p118 = por %p116, %p117
    %p119 = scmp.ne.s32.totalorder %s108, %s109
    %p120 = scmp.eq.s32.totalorder %s18, 0
    %p121 = por %p119, %p120
    %p122 = scmp.ne.s32.totalorder %s108, %s109
    %p123 = scmp.eq.s32.totalorder %s19, 1
    %p124 = por %p122, %p123
    %p126 = scmp.ne.s32.totalorder %s109, %s125
    %p127 = scmp.eq.s32.totalorder %s19, 0
    %p128 = por %p126, %p127
    %s130 = sadd.s32 %s129, 1
    %p133 = scmp.eq.s32.totalorder %s13, 1
    %p134 = scmp.ne.s32.totalorder %s129, %s131
    %p135 = scmp.eq.s32.totalorder %s13, 0
    %p136 = por %p134, %p135
    %p137 = scmp.ne.s32.totalorder %s129, %s131
    %p138 = scmp.eq.s32.totalorder %s18, 1
    %p139 = por %p137, %p138
    %p140 = scmp.ne.s32.totalorder %s131, %s132
    %p141 = scmp.eq.s32.totalorder %s18, 0
    %p142 = por %p140, %p141
    %p143 = scmp.ne.s32.totalorder %s131, %s132
    %p144 = scmp.eq.s32.totalorder %s19, 1
    %p145 = por %p143, %p144
    %p147 = scmp.ne.s32.totalorder %s132, %s146
    %p148 = scmp.eq.s32.totalorder %s19, 0
    %p149 = por %p147, %p148
    %s150 = ssub.s32 %s20, %s32
    %p151 = scmp.eq.s32.totalorder %s150, 0
    %s153 = sadd.s32 %s152, 1
    %s154 = scalar_select %p151, %s152, %s153
    %p157 = pneg %p151
    %p158 = scmp.eq.s32.totalorder %s13, 1
    %p159 = por %p157, %p158
    %p160 = scmp.ne.s32.totalorder %s152, %s155
    %p161 = scmp.eq.s32.totalorder %s13, 0
    %p162 = por %p160, %p161
    %p163 = scmp.ne.s32.totalorder %s152, %s155
    %p164 = scmp.eq.s32.totalorder %s18, 1
    %p165 = por %p163, %p164
    %p166 = scmp.ne.s32.totalorder %s155, %s156
    %p167 = scmp.eq.s32.totalorder %s18, 0
    %p168 = por %p166, %p167
    %p169 = scmp.ne.s32.totalorder %s155, %s156
    %p170 = scmp.eq.s32.totalorder %s19, 1
    %p171 = por %p169, %p170
    %p173 = scmp.ne.s32.totalorder %s156, %s172
    %p174 = scmp.eq.s32.totalorder %s19, 0
    %p175 = por %p173, %p174
    %s177 = sadd.s32 %s176, 1
    %p180 = scmp.eq.s32.totalorder %s13, 1
    %p181 = scmp.ne.s32.totalorder %s176, %s178
    %p182 = scmp.eq.s32.totalorder %s13, 0
    %p183 = por %p181, %p182
    %p184 = scmp.ne.s32.totalorder %s176, %s178
    %p185 = scmp.eq.s32.totalorder %s18, 1
    %p186 = por %p184, %p185
    %p187 = scmp.ne.s32.totalorder %s178, %s179
    %p188 = scmp.eq.s32.totalorder %s18, 0
    %p189 = por %p187, %p188
    %p190 = scmp.ne.s32.totalorder %s178, %s179
    %p191 = scmp.eq.s32.totalorder %s19, 1
    %p192 = por %p190, %p191
    %p194 = scmp.ne.s32.totalorder %s179, %s193
    %p195 = scmp.eq.s32.totalorder %s19, 0
    %p196 = por %p194, %p195
    %s197 = ssub.s32 %s20, %s32
    %s198 = ssub.s32 %s21, %s28
    %s199 = sor.u32 %s197, %s198
    %p200 = scmp.eq.s32.totalorder %s199, 0
    %s202 = sadd.s32 %s201, 1
    %s203 = scalar_select %p200, %s201, %s202
    %p206 = pneg %p200
    %p207 = scmp.eq.s32.totalorder %s13, 1
    %p208 = por %p206, %p207
    %p209 = scmp.ne.s32.totalorder %s201, %s204
    %p210 = scmp.eq.s32.totalorder %s13, 0
    %p211 = por %p209, %p210
    %p212 = scmp.ne.s32.totalorder %s201, %s204
    %p213 = scmp.eq.s32.totalorder %s18, 1
    %p214 = por %p212, %p213
    %p215 = scmp.ne.s32.totalorder %s204, %s205
    %p216 = scmp.eq.s32.totalorder %s18, 0
    %p217 = por %p215, %p216
    %p218 = scmp.ne.s32.totalorder %s204, %s205
    %p219 = scmp.eq.s32.totalorder %s19, 1
    %p220 = por %p218, %p219
    %p222 = scmp.ne.s32.totalorder %s205, %s221
    %p223 = scmp.eq.s32.totalorder %s19, 0
    %p224 = por %p222, %p223
    %p225 = scmp.le.s32.totalorder 1, %s13
    %p226 = scmp.lt.s32.totalorder %s13, 3
    %p227 = pnand %p225, %p226
    %p228 = pneg %p227
    // Predicated region
    $region9: #{lora_ensemble_forward.9} parent=5 // pred_check
      _
    $region10: #{lora_ensemble_forward.9} parent=5 // pred_check_branch
      %230 = sbr.rel (%p227) target = $region12
    $region11: #{lora_ensemble_forward.9} parent=5 // pred_region
      %s231 = ssub.s32 %s13, 1
      // Predicated region
      $region13: #{lora_ensemble_forward.9} parent=11 // pred_check
        %p232 = pneg %p74
      $region14: #{lora_ensemble_forward.9} parent=11 // pred_check_branch
        %234 = sbr.rel (%p232) target = $region16
      $region15: #{lora_ensemble_forward.9} parent=11 // pred_region
        _
      $region16: #{lora_ensemble_forward.9} parent=11 // pred_fallthru
        _
      // Predicated region
      $region17: #{lora_ensemble_forward.9} parent=11 // pred_check
        %p235 = pneg %p95
      $region18: #{lora_ensemble_forward.9} parent=11 // pred_check_branch
        %237 = sbr.rel (%p235) target = $region20
      $region19: #{lora_ensemble_forward.9} parent=11 // pred_region
        _
      $region20: #{lora_ensemble_forward.9} parent=11 // pred_fallthru
        _
      // Predicated region
      $region21: #{lora_ensemble_forward.9} parent=11 // pred_check
        %p238 = pneg %p142
      $region22: #{lora_ensemble_forward.9} parent=11 // pred_check_branch
        %240 = sbr.rel (%p238) target = $region24
      $region23: #{lora_ensemble_forward.9} parent=11 // pred_region
        _
      $region24: #{lora_ensemble_forward.9} parent=11 // pred_fallthru
        _
      // Predicated region
      $region25: #{lora_ensemble_forward.9} parent=11 // pred_check
        %p241 = pneg %p189
      $region26: #{lora_ensemble_forward.9} parent=11 // pred_check_branch
        %243 = sbr.rel (%p241) target = $region28
      $region27: #{lora_ensemble_forward.9} parent=11 // pred_region
        _
      $region28: #{lora_ensemble_forward.9} parent=11 // pred_fallthru
        _
    $region12: #{lora_ensemble_forward.9} parent=5 // pred_fallthru
      _
    %p244 = scmp.lt.s32.totalorder %s13, 2
    // Predicated region
    $region29: #{lora_ensemble_forward.9} parent=5 // pred_check
      %p245 = pneg %p244
    $region30: #{lora_ensemble_forward.9} parent=5 // pred_check_branch
      %247 = sbr.rel (%p245) target = $region32
    $region31: #{lora_ensemble_forward.9} parent=5 // pred_region
      // Predicated region
      $region33: #{lora_ensemble_forward.9} parent=31 // pred_check
        %p248 = pneg %p47
      $region34: #{lora_ensemble_forward.9} parent=31 // pred_check_branch
        %250 = sbr.rel (%p248) target = $region36
      $region35: #{lora_ensemble_forward.9} parent=31 // pred_region
        %s251 = smul.u32 2, %s21
        %p252 = scmp.lt.s32.totalorder %s20, 1
        %s253 = scalar_select %p252, %s20, 1
        %p254 = scmp.lt.s32.totalorder %s251, 1
        %s255 = scalar_select %p254, %s251, 1
        %s256 = smul.addr %s253, 2
        %s257 = sadd.s32 %s255, %s256
        %s258 = smul.addr %s257, 4
        %s259 = scalar_lea.vmem %s0, %s258
        %s260 = smul.u32 2, %s21
      $region36: #{lora_ensemble_forward.9} parent=31 // pred_fallthru
        _
      // Predicated region
      $region37: #{lora_ensemble_forward.9} parent=31 // pred_check
        %p261 = pneg %p115
      $region38: #{lora_ensemble_forward.9} parent=31 // pred_check_branch
        %263 = sbr.rel (%p261) target = $region40
      $region39: #{lora_ensemble_forward.9} parent=31 // pred_region
        %p264 = scmp.lt.s32.totalorder %s20, 1
        %s265 = scalar_select %p264, %s20, 1
        %s266 = smul.addr %s265, 4
        %s267 = smul.addr %s266, 4
        %s268 = scalar_lea.vmem %s3, %s267
      $region40: #{lora_ensemble_forward.9} parent=31 // pred_fallthru
        _
      // Predicated region
      $region41: #{lora_ensemble_forward.9} parent=31 // pred_check
        %p269 = pneg %p162
      $region42: #{lora_ensemble_forward.9} parent=31 // pred_check_branch
        %271 = sbr.rel (%p269) target = $region44
      $region43: #{lora_ensemble_forward.9} parent=31 // pred_region
        %p272 = scmp.lt.s32.totalorder %s20, 1
        %s273 = scalar_select %p272, %s20, 1
        %s274 = smul.addr %s273, 4
        %s275 = smul.addr %s274, 4
        %s276 = scalar_lea.vmem %s5, %s275
      $region44: #{lora_ensemble_forward.9} parent=31 // pred_fallthru
        _
    $region32: #{lora_ensemble_forward.9} parent=5 // pred_fallthru
      _
    %p277 = scmp.le.s32.totalorder 1, %s13
    %p278 = scmp.lt.s32.totalorder %s13, 3
    %p279 = pnand %p277, %p278
    %p280 = pneg %p279
    // Predicated region
    $region45: #{lora_ensemble_forward.9} parent=5 // pred_check
      _
    $region46: #{lora_ensemble_forward.9} parent=5 // pred_check_branch
      %282 = sbr.rel (%p279) target = $region48
    $region47: #{lora_ensemble_forward.9} parent=5 // pred_region
      %s283 = ssub.s32 %s13, 1
      %s284 = smul.u32 2, %s23
      %p285 = scmp.lt.s32.totalorder %s22, 1
      %s286 = scalar_select %p285, %s22, 1
      %p287 = scmp.lt.s32.totalorder %s284, 1
      %s288 = scalar_select %p287, %s284, 1
      %s289 = smul.addr %s286, 2
      %s290 = sadd.s32 %s288, %s289
      %s291 = smul.addr %s290, 4
      %s292 = scalar_lea.vmem %s0, %s291
      %p293 = pneg %p53
      %p294 = pneg %p50
      %p295 = pneg %p74
      %p296 = pneg %p71
      %p297 = pneg %p95
      %p298 = pneg %p92
      %p299 = scmp.lt.s32.totalorder %s22, 1
      %s300 = scalar_select %p299, %s22, 1
      %s301 = smul.addr %s300, 4
      %s302 = smul.addr %s301, 4
      %s303 = scalar_lea.vmem %s3, %s302
      %p304 = pneg %p121
      %p305 = pneg %p118
      %p306 = pneg %p142
      %p307 = pneg %p139
      %p308 = scmp.lt.s32.totalorder %s22, 1
      %s309 = scalar_select %p308, %s22, 1
      %s310 = smul.addr %s309, 4
      %s311 = smul.addr %s310, 4
      %s312 = scalar_lea.vmem %s5, %s311
      %p313 = pneg %p168
      %p314 = pneg %p165
      %p315 = pneg %p189
      %p316 = pneg %p186
      %p317 = pneg %p217
      %p318 = pneg %p214
      %s319 = smul.u32 2, %s23
      %p320 = scmp.lt.s32.totalorder %s22, 1
      %s321 = scalar_select %p320, %s22, 1
      %p322 = scmp.lt.s32.totalorder %s319, 1
      %s323 = scalar_select %p322, %s319, 1
      %s324 = smul.addr %s321, 2
      %s325 = sadd.s32 %s323, %s324
      %s326 = smul.addr %s325, 4
      %s327 = scalar_lea.vmem %s7, %s326
      %s328 = smul.u32 2, %s23
      %p329 = scmp.lt.s32.totalorder %s22, 1
      %s330 = scalar_select %p329, %s22, 1
      %p331 = scmp.lt.s32.totalorder %s328, 1
      %s332 = scalar_select %p331, %s328, 1
      %s333 = smul.addr %s330, 2
      %s334 = sadd.s32 %s332, %s333
      %s335 = smul.addr %s334, 4
      %s336 = scalar_lea.vmem %s0, %s335
      %s337 = smul.u32 2, %s23
      %p338 = scmp.lt.s32.totalorder %s22, 1
      %s339 = scalar_select %p338, %s22, 1
      %s340 = smul.addr %s339, 4
      %s341 = smul.addr %s340, 4
      %s342 = scalar_lea.vmem %s3, %s341
      %p343 = scmp.lt.s32.totalorder %s22, 1
      %s344 = scalar_select %p343, %s22, 1
      %s345 = smul.addr %s344, 4
      %s346 = smul.addr %s345, 4
      %s347 = scalar_lea.vmem %s5, %s346
      %s348 = smul.u32 2, %s23
      %p349 = scmp.lt.s32.totalorder %s22, 1
      %s350 = scalar_select %p349, %s22, 1
      %p351 = scmp.lt.s32.totalorder %s348, 1
      %s352 = scalar_select %p351, %s348, 1
      %s353 = smul.addr %s350, 2
      %s354 = sadd.s32 %s352, %s353
      %s355 = smul.addr %s354, 4
      %s356 = scalar_lea.vmem %s7, %s355
      %s357 = smul.u32 2, %s23
      %v359 = vld [vmem:[%s336] sm:$0xf]
      %v360 = vld [vmem:[%s336 + $0x4] sm:$0xf]
      %v361 = vunpack.c.l.bf16 %v359
      %v362 = vunpack.c.l.bf16 %v360
      %v363 = vld [vmem:[%s1] sm:$0x1]
      %v364 = vld [vmem:[%s2] sm:$0x1]
      %vm365 = vcmask 261120
      %v366 = vsel %vm365, %v361, 0.0
      %367 = vadd.xlane.f32.xlu0 %v366
      %v368 = vpop.xlane.xlu0 %367
      %v369 = vsel %vm365, %v362, 0.0
      %370 = vadd.xlane.f32.xlu0 %v369
      %v371 = vpop.xlane.xlu0 %370
      %v372 = vrcp.pop 32.0
      %v373 = vmul.f32 %v368, %v372
      %v374 = vmul.f32 %v371, %v372
      %v375 = vsub.f32 %v361, %v373
      %v376 = vsub.f32 %v362, %v374
      %v377 = vmul.f32 %v375, %v375
      %v378 = vmul.f32 %v376, %v376
      %v379 = vsel %vm365, %v377, 0.0
      %380 = vadd.xlane.f32.xlu0 %v379
      %v381 = vpop.xlane.xlu0 %380
      %v382 = vsel %vm365, %v378, 0.0
      %383 = vadd.xlane.f32.xlu0 %v382
      %v384 = vpop.xlane.xlu0 %383
      %v385 = vmul.f32 %v381, %v372
      %v386 = vmul.f32 %v384, %v372
      %v387 = vadd.f32 %v385, 1e-06
      %v388 = vadd.f32 %v386, 1e-06
      %v389 = vrsqrt.pop %v387
      %v390 = vrsqrt.pop %v388
      %v391 = vmul.f32 %v375, %v389
      %v392 = vmul.f32 %v376, %v390
      %v394 = vlaneseq
      %v395 = vshrl.u32 %v394, 7
      %v396 = vsub.s32 0, %v395
      %v397 = vrot.slane %v363, %v396
      %v399 = vmul.f32 %v391, %v397
      %v400 = vmul.f32 %v392, %v397
      %v402 = vlaneseq
      %v403 = vshrl.u32 %v402, 7
      %v404 = vsub.s32 0, %v403
      %v405 = vrot.slane %v364, %v404
      %v407 = vadd.f32 %v399, %v405
      %v408 = vadd.f32 %v400, %v405
      %v409 = vpack.c.bf16 %v408, %v407
      %v410 = vld [vmem:[%s342] sm:$0xf]
      %v411 = vld [vmem:[%s342 + $0x4] sm:$0xf]
      %v412 = vld [vmem:[%s342 + $0x8] sm:$0xf]
      %v413 = vld [vmem:[%s342 + $0xc] sm:$0xf]
      %v414 = vld [vmem:[%s4] sm:$0x1]
      %v416 = vlaneseq
      %v417 = vshrl.u32 %v416, 7
      %v418 = vsub.s32 0, %v417
      %v419 = vrot.slane %v414, %v418
      %v425 = vunpack.c.l.b16 %v410
      %v426 = vunpack.c.l.b16 %v411
      %v427 = vunpack.c.l.b16 %v412
      %v428 = vunpack.c.l.b16 %v413
      %v429 = vpack.c.b16 %v426, %v425
      %v430 = vpack.c.b16 %v428, %v427
      %v434 = vsel %vm365, %v409, 0
      %436 = vmatprep.subr.bf16.mxu0 0
      %437 = vmatpush1.bf16.msra.mxu0 0
      %438 = vmatprep.subr.bf16.mxu0 0
      %439 = vmatpush1.bf16.msra.mxu0 0
      %440 = vmatprep.subr.bf16.mxu0 0
      %441 = vmatpush1.bf16.msra.mxu0 0
      %442 = vmatprep.subr.bf16.mxu0 0
      %443 = vmatpush1.bf16.msra.mxu0 0
      %444 = vmatprep.subr.bf16.mxu0 0
      %445 = vmatpush1.bf16.msra.mxu0 0
      %446 = vmatprep.subr.bf16.mxu0 0
      %447 = vmatpush1.bf16.msra.mxu0 0
      %448 = vmatprep.subr.bf16.mxu0 0
      %449 = vmatpush1.bf16.msra.mxu0 %v430
      %450 = vmatprep.subr.bf16.mxu0 0
      %451 = vmatpush1.bf16.msra.mxu0 %v429
      %452 = vmatprep.subr.bf16.mxu0 0
      %453 = vmatpush2.bf16.msra.mxu0 0
      %454 = vmatprep.subr.bf16.mxu0 0
      %455 = vmatpush2.bf16.msra.mxu0 0
      %456 = vmatprep.subr.bf16.mxu0 0
      %457 = vmatpush2.bf16.msra.mxu0 0
      %458 = vmatprep.subr.bf16.mxu0 0
      %459 = vmatpush2.bf16.msra.mxu0 0
      %460 = vmatprep.subr.bf16.mxu0 0
      %461 = vmatpush2.bf16.msra.mxu0 0
      %462 = vmatprep.subr.bf16.mxu0 0
      %463 = vmatpush2.bf16.msra.mxu0 0
      %464 = vmatprep.subr.bf16.mxu0 0
      %465 = vmatpush2.bf16.msra.mxu0 0
      %466 = vmatprep.subr.bf16.mxu0 0
      %467 = vmatpush2.bf16.msra.mxu0 0
      %468 = vmatprep.mubr.bf16.mxu0 0
      %469 = vmatmul.mubr.bf16.gmra.mxu0 %v434
      %v470 = vpop.f32.mrf.mxu0
      %v471 = vadd.f32 %v419, %v470
      %v472 = vpop.f32.mrf.mxu0
      %v473 = vpop.f32.mrf.mxu0
      %v474 = vadd.f32 %v419, %v473
      %v475 = vpop.f32.mrf.mxu0
      %476 = vdwg.mxu0
      %v477 = vpack.c.bf16 %v471, %v471
      %v478 = vpack.c.bf16 %v474, %v474
      %vm479 = vcmask 781312
      %480 = vst.msk [vmem:[#allocation2] sm:$0xf] %vm479, %v477
      %481 = vst.msk [vmem:[#allocation2 + $0x4] sm:$0xf] %vm479, %v478
      %v482 = vlaneseq
      %v483 = vand.u32 %v482, 127
      %vm484 = vcmp.lt.s32.totalorder %v483, 5
      %v485 = vsel %vm484, 0.0, -1e+30
      %v486 = vld [vmem:[#allocation2] sm:$0xf]
      %v488 = vunpack.c.l.b16 %v486
      %v489 = vpack.c.b16 %v488, %v488
      %490 = vrot.lane.b32.xlu0 %v489, 96
      %v491 = vpop.permute.xlu0 %490
      %vm492 = vcmask 64512
      %v494 = vsel %vm492, %v486, 0
      %v497 = vsel %vm492, %v491, 0
      %499 = vmatprep.subr.bf16.mxu0 0
      %500 = vmatpush1.bf16.xpose.msra.mxu0 0
      %501 = vmatprep.subr.bf16.mxu0 0
      %502 = vmatpush1.bf16.xpose.msra.mxu0 0
      %503 = vmatprep.subr.bf16.mxu0 0
      %504 = vmatpush1.bf16.xpose.msra.mxu0 0
      %505 = vmatprep.subr.bf16.mxu0 0
      %506 = vmatpush1.bf16.xpose.msra.mxu0 0
      %507 = vmatprep.subr.bf16.mxu0 0
      %508 = vmatpush1.bf16.xpose.msra.mxu0 0
      %509 = vmatprep.subr.bf16.mxu0 0
      %510 = vmatpush1.bf16.xpose.msra.mxu0 0
      %511 = vmatprep.subr.bf16.mxu0 0
      %512 = vmatpush1.bf16.xpose.msra.mxu0 0
      %513 = vmatprep.subr.bf16.mxu0 0
      %514 = vmatpush1.bf16.xpose.msra.mxu0 %v497
      %515 = vmatprep.subr.bf16.mxu0 0
      %516 = vmatpush2.bf16.xpose.msra.mxu0 0
      %517 = vmatprep.subr.bf16.mxu0 0
      %518 = vmatpush2.bf16.xpose.msra.mxu0 0
      %519 = vmatprep.subr.bf16.mxu0 0
      %520 = vmatpush2.bf16.xpose.msra.mxu0 0
      %521 = vmatprep.subr.bf16.mxu0 0
      %522 = vmatpush2.bf16.xpose.msra.mxu0 0
      %523 = vmatprep.subr.bf16.mxu0 0
      %524 = vmatpush2.bf16.xpose.msra.mxu0 0
      %525 = vmatprep.subr.bf16.mxu0 0
      %526 = vmatpush2.bf16.xpose.msra.mxu0 0
      %527 = vmatprep.subr.bf16.mxu0 0
      %528 = vmatpush2.bf16.xpose.msra.mxu0 0
      %529 = vmatprep.subr.bf16.mxu0 0
      %530 = vmatpush2.bf16.xpose.msra.mxu0 0
      %531 = vmatprep.mubr.bf16.mxu0 0
      %532 = vmatmul.mubr.bf16.gmra.mxu0 %v494
      %v533 = vpop.f32.mrf.mxu0
      %v534 = vadd.f32 %v485, %v533
      %v535 = vpop.f32.mrf.mxu0
      %v536 = vpop.f32.mrf.mxu0
      %v537 = vpop.f32.mrf.mxu0
      %538 = vdwg.mxu0
      %v539 = vsel %vm492, %v534, -inf
      %540 = vmax.xlane.f32.xlu0 %v539
      %v541 = vpop.xlane.xlu0 %540
      %v542 = vsub.f32 %v534, %v541
      %v543 = vmul.f32 %v542, 1.442695
      %v544 = vpow.pop %v543
      %v545 = vsel %vm492, %v544, 0.0
      %546 = vadd.xlane.f32.xlu0 %v545
      %v547 = vpop.xlane.xlu0 %546
      %v548 = vrcp.pop %v547
      %v549 = vmul.f32 %v544, %v548
      %v550 = vpack.c.bf16 %v549, %v549
      %551 = vrot.lane.b32.xlu0 %v489, 64
      %v552 = vpop.permute.xlu0 %551
      %v554 = vsel %vm492, %v550, 0
      %vm556 = vcmask 1043456
      %v558 = vsel %vm556, %v552, 0
      %560 = vmatprep.subr.bf16.mxu0 0
      %561 = vmatpush1.bf16.msra.mxu0 0
      %562 = vmatprep.subr.bf16.mxu0 0
      %563 = vmatpush1.bf16.msra.mxu0 0
      %564 = vmatprep.subr.bf16.mxu0 0
      %565 = vmatpush1.bf16.msra.mxu0 0
      %566 = vmatprep.subr.bf16.mxu0 0
      %567 = vmatpush1.bf16.msra.mxu0 0
      %568 = vmatprep.subr.bf16.mxu0 0
      %569 = vmatpush1.bf16.msra.mxu0 0
      %570 = vmatprep.subr.bf16.mxu0 0
      %571 = vmatpush1.bf16.msra.mxu0 0
      %572 = vmatprep.subr.bf16.mxu0 0
      %573 = vmatpush1.bf16.msra.mxu0 0
      %574 = vmatprep.subr.bf16.mxu0 0
      %575 = vmatpush1.bf16.msra.mxu0 %v558
      %576 = vmatprep.subr.bf16.mxu0 0
      %577 = vmatpush2.bf16.msra.mxu0 0
      %578 = vmatprep.subr.bf16.mxu0 0
      %579 = vmatpush2.bf16.msra.mxu0 0
      %580 = vmatprep.subr.bf16.mxu0 0
      %581 = vmatpush2.bf16.msra.mxu0 0
      %582 = vmatprep.subr.bf16.mxu0 0
      %583 = vmatpush2.bf16.msra.mxu0 0
      %584 = vmatprep.subr.bf16.mxu0 0
      %585 = vmatpush2.bf16.msra.mxu0 0
      %586 = vmatprep.subr.bf16.mxu0 0
      %587 = vmatpush2.bf16.msra.mxu0 0
      %588 = vmatprep.subr.bf16.mxu0 0
      %589 = vmatpush2.bf16.msra.mxu0 0
      %590 = vmatprep.subr.bf16.mxu0 0
      %591 = vmatpush2.bf16.msra.mxu0 0
      %592 = vmatprep.mubr.bf16.mxu0 0
      %593 = vmatmul.mubr.bf16.gmra.mxu0 %v554
      %v594 = vpop.f32.mrf.mxu0
      %v595 = vadd.f32 0.0, %v594
      %v596 = vpop.f32.mrf.mxu0
      %v597 = vpop.f32.mrf.mxu0
      %v598 = vpop.f32.mrf.mxu0
      %599 = vdwg.mxu0
      %v600 = vpack.c.bf16 %v595, %v595
      %vm601 = vcmask 60416
      %602 = vst.msk [vmem:[#allocation3] sm:$0xf] %vm601, %v600
      %v603 = vld [vmem:[#allocation2] sm:$0xf]
      %v605 = vunpack.c.l.b16 %v603
      %v606 = vpack.c.b16 %v605, %v605
      %607 = vrot.lane.b32.xlu0 %v606, 120
      %v608 = vpop.permute.xlu0 %607
      %609 = vrot.lane.b32.xlu0 %v606, 88
      %v610 = vpop.permute.xlu0 %609
      %v612 = vsel %vm492, %v608, 0
      %v615 = vsel %vm492, %v610, 0
      %617 = vmatprep.subr.bf16.mxu0 0
      %618 = vmatpush1.bf16.xpose.msra.mxu0 0
      %619 = vmatprep.subr.bf16.mxu0 0
      %620 = vmatpush1.bf16.xpose.msra.mxu0 0
      %621 = vmatprep.subr.bf16.mxu0 0
      %622 = vmatpush1.bf16.xpose.msra.mxu0 0
      %623 = vmatprep.subr.bf16.mxu0 0
      %624 = vmatpush1.bf16.xpose.msra.mxu0 0
      %625 = vmatprep.subr.bf16.mxu0 0
      %626 = vmatpush1.bf16.xpose.msra.mxu0 0
      %627 = vmatprep.subr.bf16.mxu0 0
      %628 = vmatpush1.bf16.xpose.msra.mxu0 0
      %629 = vmatprep.subr.bf16.mxu0 0
      %630 = vmatpush1.bf16.xpose.msra.mxu0 0
      %631 = vmatprep.subr.bf16.mxu0 0
      %632 = vmatpush1.bf16.xpose.msra.mxu0 %v615
      %633 = vmatprep.subr.bf16.mxu0 0
      %634 = vmatpush2.bf16.xpose.msra.mxu0 0
      %635 = vmatprep.subr.bf16.mxu0 0
      %636 = vmatpush2.bf16.xpose.msra.mxu0 0
      %637 = vmatprep.subr.bf16.mxu0 0
      %638 = vmatpush2.bf16.xpose.msra.mxu0 0
      %639 = vmatprep.subr.bf16.mxu0 0
      %640 = vmatpush2.bf16.xpose.msra.mxu0 0
      %641 = vmatprep.subr.bf16.mxu0 0
      %642 = vmatpush2.bf16.xpose.msra.mxu0 0
      %643 = vmatprep.subr.bf16.mxu0 0
      %644 = vmatpush2.bf16.xpose.msra.mxu0 0
      %645 = vmatprep.subr.bf16.mxu0 0
      %646 = vmatpush2.bf16.xpose.msra.mxu0 0
      %647 = vmatprep.subr.bf16.mxu0 0
      %648 = vmatpush2.bf16.xpose.msra.mxu0 0
      %649 = vmatprep.mubr.bf16.mxu0 0
      %650 = vmatmul.mubr.bf16.gmra.mxu0 %v612
      %v651 = vpop.f32.mrf.mxu0
      %v652 = vadd.f32 %v485, %v651
      %v653 = vpop.f32.mrf.mxu0
      %v654 = vpop.f32.mrf.mxu0
      %v655 = vpop.f32.mrf.mxu0
      %656 = vdwg.mxu0
      %v657 = vsel %vm492, %v652, -inf
      %658 = vmax.xlane.f32.xlu0 %v657
      %v659 = vpop.xlane.xlu0 %658
      %v660 = vsub.f32 %v652, %v659
      %v661 = vmul.f32 %v660, 1.442695
      %v662 = vpow.pop %v661
      %v663 = vsel %vm492, %v662, 0.0
      %664 = vadd.xlane.f32.xlu0 %v663
      %v665 = vpop.xlane.xlu0 %664
      %v666 = vrcp.pop %v665
      %v667 = vmul.f32 %v662, %v666
      %v668 = vpack.c.bf16 %v667, %v667
      %669 = vrot.lane.b32.xlu0 %v606, 56
      %v670 = vpop.permute.xlu0 %669
      %v672 = vsel %vm492, %v668, 0
      %v675 = vsel %vm556, %v670, 0
      %677 = vmatprep.subr.bf16.mxu0 0
      %678 = vmatpush1.bf16.msra.mxu0 0
      %679 = vmatprep.subr.bf16.mxu0 0
      %680 = vmatpush1.bf16.msra.mxu0 0
      %681 = vmatprep.subr.bf16.mxu0 0
      %682 = vmatpush1.bf16.msra.mxu0 0
      %683 = vmatprep.subr.bf16.mxu0 0
      %684 = vmatpush1.bf16.msra.mxu0 0
      %685 = vmatprep.subr.bf16.mxu0 0
      %686 = vmatpush1.bf16.msra.mxu0 0
      %687 = vmatprep.subr.bf16.mxu0 0
      %688 = vmatpush1.bf16.msra.mxu0 0
      %689 = vmatprep.subr.bf16.mxu0 0
      %690 = vmatpush1.bf16.msra.mxu0 0
      %691 = vmatprep.subr.bf16.mxu0 0
      %692 = vmatpush1.bf16.msra.mxu0 %v675
      %693 = vmatprep.subr.bf16.mxu0 0
      %694 = vmatpush2.bf16.msra.mxu0 0
      %695 = vmatprep.subr.bf16.mxu0 0
      %696 = vmatpush2.bf16.msra.mxu0 0
      %697 = vmatprep.subr.bf16.mxu0 0
      %698 = vmatpush2.bf16.msra.mxu0 0
      %699 = vmatprep.subr.bf16.mxu0 0
      %700 = vmatpush2.bf16.msra.mxu0 0
      %701 = vmatprep.subr.bf16.mxu0 0
      %702 = vmatpush2.bf16.msra.mxu0 0
      %703 = vmatprep.subr.bf16.mxu0 0
      %704 = vmatpush2.bf16.msra.mxu0 0
      %705 = vmatprep.subr.bf16.mxu0 0
      %706 = vmatpush2.bf16.msra.mxu0 0
      %707 = vmatprep.subr.bf16.mxu0 0
      %708 = vmatpush2.bf16.msra.mxu0 0
      %709 = vmatprep.mubr.bf16.mxu0 0
      %710 = vmatmul.mubr.bf16.gmra.mxu0 %v672
      %v711 = vpop.f32.mrf.mxu0
      %v712 = vadd.f32 0.0, %v711
      %v713 = vpop.f32.mrf.mxu0
      %v714 = vpop.f32.mrf.mxu0
      %v715 = vpop.f32.mrf.mxu0
      %716 = vdwg.mxu0
      %v717 = vpack.c.bf16 %v712, %v712
      %v719 = vunpack.c.l.b16 %v717
      %v720 = vpack.c.b16 %v719, %v719
      %721 = vrot.lane.b32.xlu0 %v720, 8
      %v722 = vpop.permute.xlu0 %721
      %vm724 = vcmask 126016
      %725 = vst.msk [vmem:[#allocation3] sm:$0xf] %vm724, %v722
      %v726 = vld [vmem:[#allocation2] sm:$0xf]
      %v728 = vunpack.c.l.b16 %v726
      %v729 = vpack.c.b16 %v728, %v728
      %730 = vrot.lane.b32.xlu0 %v729, 112
      %v731 = vpop.permute.xlu0 %730
      %732 = vrot.lane.b32.xlu0 %v729, 80
      %v733 = vpop.permute.xlu0 %732
      %v735 = vsel %vm492, %v731, 0
      %v738 = vsel %vm492, %v733, 0
      %740 = vmatprep.subr.bf16.mxu0 0
      %741 = vmatpush1.bf16.xpose.msra.mxu0 0
      %742 = vmatprep.subr.bf16.mxu0 0
      %743 = vmatpush1.bf16.xpose.msra.mxu0 0
      %744 = vmatprep.subr.bf16.mxu0 0
      %745 = vmatpush1.bf16.xpose.msra.mxu0 0
      %746 = vmatprep.subr.bf16.mxu0 0
      %747 = vmatpush1.bf16.xpose.msra.mxu0 0
      %748 = vmatprep.subr.bf16.mxu0 0
      %749 = vmatpush1.bf16.xpose.msra.mxu0 0
      %750 = vmatprep.subr.bf16.mxu0 0
      %751 = vmatpush1.bf16.xpose.msra.mxu0 0
      %752 = vmatprep.subr.bf16.mxu0 0
      %753 = vmatpush1.bf16.xpose.msra.mxu0 0
      %754 = vmatprep.subr.bf16.mxu0 0
      %755 = vmatpush1.bf16.xpose.msra.mxu0 %v738
      %756 = vmatprep.subr.bf16.mxu0 0
      %757 = vmatpush2.bf16.xpose.msra.mxu0 0
      %758 = vmatprep.subr.bf16.mxu0 0
      %759 = vmatpush2.bf16.xpose.msra.mxu0 0
      %760 = vmatprep.subr.bf16.mxu0 0
      %761 = vmatpush2.bf16.xpose.msra.mxu0 0
      %762 = vmatprep.subr.bf16.mxu0 0
      %763 = vmatpush2.bf16.xpose.msra.mxu0 0
      %764 = vmatprep.subr.bf16.mxu0 0
      %765 = vmatpush2.bf16.xpose.msra.mxu0 0
      %766 = vmatprep.subr.bf16.mxu0 0
      %767 = vmatpush2.bf16.xpose.msra.mxu0 0
      %768 = vmatprep.subr.bf16.mxu0 0
      %769 = vmatpush2.bf16.xpose.msra.mxu0 0
      %770 = vmatprep.subr.bf16.mxu0 0
      %771 = vmatpush2.bf16.xpose.msra.mxu0 0
      %772 = vmatprep.mubr.bf16.mxu0 0
      %773 = vmatmul.mubr.bf16.gmra.mxu0 %v735
      %v774 = vpop.f32.mrf.mxu0
      %v775 = vadd.f32 %v485, %v774
      %v776 = vpop.f32.mrf.mxu0
      %v777 = vpop.f32.mrf.mxu0
      %v778 = vpop.f32.mrf.mxu0
      %779 = vdwg.mxu0
      %v780 = vsel %vm492, %v775, -inf
      %781 = vmax.xlane.f32.xlu0 %v780
      %v782 = vpop.xlane.xlu0 %781
      %v783 = vsub.f32 %v775, %v782
      %v784 = vmul.f32 %v783, 1.442695
      %v785 = vpow.pop %v784
      %v786 = vsel %vm492, %v785, 0.0
      %787 = vadd.xlane.f32.xlu0 %v786
      %v788 = vpop.xlane.xlu0 %787
      %v789 = vrcp.pop %v788
      %v790 = vmul.f32 %v785, %v789
      %v791 = vpack.c.bf16 %v790, %v790
      %792 = vrot.lane.b32.xlu0 %v729, 48
      %v793 = vpop.permute.xlu0 %792
      %v795 = vsel %vm492, %v791, 0
      %v798 = vsel %vm556, %v793, 0
      %800 = vmatprep.subr.bf16.mxu0 0
      %801 = vmatpush1.bf16.msra.mxu0 0
      %802 = vmatprep.subr.bf16.mxu0 0
      %803 = vmatpush1.bf16.msra.mxu0 0
      %804 = vmatprep.subr.bf16.mxu0 0
      %805 = vmatpush1.bf16.msra.mxu0 0
      %806 = vmatprep.subr.bf16.mxu0 0
      %807 = vmatpush1.bf16.msra.mxu0 0
      %808 = vmatprep.subr.bf16.mxu0 0
      %809 = vmatpush1.bf16.msra.mxu0 0
      %810 = vmatprep.subr.bf16.mxu0 0
      %811 = vmatpush1.bf16.msra.mxu0 0
      %812 = vmatprep.subr.bf16.mxu0 0
      %813 = vmatpush1.bf16.msra.mxu0 0
      %814 = vmatprep.subr.bf16.mxu0 0
      %815 = vmatpush1.bf16.msra.mxu0 %v798
      %816 = vmatprep.subr.bf16.mxu0 0
      %817 = vmatpush2.bf16.msra.mxu0 0
      %818 = vmatprep.subr.bf16.mxu0 0
      %819 = vmatpush2.bf16.msra.mxu0 0
      %820 = vmatprep.subr.bf16.mxu0 0
      %821 = vmatpush2.bf16.msra.mxu0 0
      %822 = vmatprep.subr.bf16.mxu0 0
      %823 = vmatpush2.bf16.msra.mxu0 0
      %824 = vmatprep.subr.bf16.mxu0 0
      %825 = vmatpush2.bf16.msra.mxu0 0
      %826 = vmatprep.subr.bf16.mxu0 0
      %827 = vmatpush2.bf16.msra.mxu0 0
      %828 = vmatprep.subr.bf16.mxu0 0
      %829 = vmatpush2.bf16.msra.mxu0 0
      %830 = vmatprep.subr.bf16.mxu0 0
      %831 = vmatpush2.bf16.msra.mxu0 0
      %832 = vmatprep.mubr.bf16.mxu0 0
      %833 = vmatmul.mubr.bf16.gmra.mxu0 %v795
      %v834 = vpop.f32.mrf.mxu0
      %v835 = vadd.f32 0.0, %v834
      %v836 = vpop.f32.mrf.mxu0
      %v837 = vpop.f32.mrf.mxu0
      %v838 = vpop.f32.mrf.mxu0
      %839 = vdwg.mxu0
      %v840 = vpack.c.bf16 %v835, %v835
      %v842 = vunpack.c.l.b16 %v840
      %v843 = vpack.c.b16 %v842, %v842
      %844 = vrot.lane.b32.xlu0 %v843, 16
      %v845 = vpop.permute.xlu0 %844
      %vm847 = vcmask 191616
      %848 = vst.msk [vmem:[#allocation3] sm:$0xf] %vm847, %v845
      %v849 = vld [vmem:[#allocation2] sm:$0xf]
      %v851 = vunpack.c.l.b16 %v849
      %v852 = vpack.c.b16 %v851, %v851
      %853 = vrot.lane.b32.xlu0 %v852, 104
      %v854 = vpop.permute.xlu0 %853
      %855 = vrot.lane.b32.xlu0 %v852, 72
      %v856 = vpop.permute.xlu0 %855
      %v858 = vsel %vm492, %v854, 0
      %v861 = vsel %vm492, %v856, 0
      %863 = vmatprep.subr.bf16.mxu0 0
      %864 = vmatpush1.bf16.xpose.msra.mxu0 0
      %865 = vmatprep.subr.bf16.mxu0 0
      %866 = vmatpush1.bf16.xpose.msra.mxu0 0
      %867 = vmatprep.subr.bf16.mxu0 0
      %868 = vmatpush1.bf16.xpose.msra.mxu0 0
      %869 = vmatprep.subr.bf16.mxu0 0
      %870 = vmatpush1.bf16.xpose.msra.mxu0 0
      %871 = vmatprep.subr.bf16.mxu0 0
      %872 = vmatpush1.bf16.xpose.msra.mxu0 0
      %873 = vmatprep.subr.bf16.mxu0 0
      %874 = vmatpush1.bf16.xpose.msra.mxu0 0
      %875 = vmatprep.subr.bf16.mxu0 0
      %876 = vmatpush1.bf16.xpose.msra.mxu0 0
      %877 = vmatprep.subr.bf16.mxu0 0
      %878 = vmatpush1.bf16.xpose.msra.mxu0 %v861
      %879 = vmatprep.subr.bf16.mxu0 0
      %880 = vmatpush2.bf16.xpose.msra.mxu0 0
      %881 = vmatprep.subr.bf16.mxu0 0
      %882 = vmatpush2.bf16.xpose.msra.mxu0 0
      %883 = vmatprep.subr.bf16.mxu0 0
      %884 = vmatpush2.bf16.xpose.msra.mxu0 0
      %885 = vmatprep.subr.bf16.mxu0 0
      %886 = vmatpush2.bf16.xpose.msra.mxu0 0
      %887 = vmatprep.subr.bf16.mxu0 0
      %888 = vmatpush2.bf16.xpose.msra.mxu0 0
      %889 = vmatprep.subr.bf16.mxu0 0
      %890 = vmatpush2.bf16.xpose.msra.mxu0 0
      %891 = vmatprep.subr.bf16.mxu0 0
      %892 = vmatpush2.bf16.xpose.msra.mxu0 0
      %893 = vmatprep.subr.bf16.mxu0 0
      %894 = vmatpush2.bf16.xpose.msra.mxu0 0
      %895 = vmatprep.mubr.bf16.mxu0 0
      %896 = vmatmul.mubr.bf16.gmra.mxu0 %v858
      %v897 = vpop.f32.mrf.mxu0
      %v898 = vadd.f32 %v485, %v897
      %v899 = vpop.f32.mrf.mxu0
      %v900 = vpop.f32.mrf.mxu0
      %v901 = vpop.f32.mrf.mxu0
      %902 = vdwg.mxu0
      %v903 = vsel %vm492, %v898, -inf
      %904 = vmax.xlane.f32.xlu0 %v903
      %v905 = vpop.xlane.xlu0 %904
      %v906 = vsub.f32 %v898, %v905
      %v907 = vmul.f32 %v906, 1.442695
      %v908 = vpow.pop %v907
      %v909 = vsel %vm492, %v908, 0.0
      %910 = vadd.xlane.f32.xlu0 %v909
      %v911 = vpop.xlane.xlu0 %910
      %v912 = vrcp.pop %v911
      %v913 = vmul.f32 %v908, %v912
      %v914 = vpack.c.bf16 %v913, %v913
      %915 = vrot.lane.b32.xlu0 %v852, 40
      %v916 = vpop.permute.xlu0 %915
      %v918 = vsel %vm492, %v914, 0
      %v921 = vsel %vm556, %v916, 0
      %923 = vmatprep.subr.bf16.mxu0 0
      %924 = vmatpush1.bf16.msra.mxu0 0
      %925 = vmatprep.subr.bf16.mxu0 0
      %926 = vmatpush1.bf16.msra.mxu0 0
      %927 = vmatprep.subr.bf16.mxu0 0
      %928 = vmatpush1.bf16.msra.mxu0 0
      %929 = vmatprep.subr.bf16.mxu0 0
      %930 = vmatpush1.bf16.msra.mxu0 0
      %931 = vmatprep.subr.bf16.mxu0 0
      %932 = vmatpush1.bf16.msra.mxu0 0
      %933 = vmatprep.subr.bf16.mxu0 0
      %934 = vmatpush1.bf16.msra.mxu0 0
      %935 = vmatprep.subr.bf16.mxu0 0
      %936 = vmatpush1.bf16.msra.mxu0 0
      %937 = vmatprep.subr.bf16.mxu0 0
      %938 = vmatpush1.bf16.msra.mxu0 %v921
      %939 = vmatprep.subr.bf16.mxu0 0
      %940 = vmatpush2.bf16.msra.mxu0 0
      %941 = vmatprep.subr.bf16.mxu0 0
      %942 = vmatpush2.bf16.msra.mxu0 0
      %943 = vmatprep.subr.bf16.mxu0 0
      %944 = vmatpush2.bf16.msra.mxu0 0
      %945 = vmatprep.subr.bf16.mxu0 0
      %946 = vmatpush2.bf16.msra.mxu0 0
      %947 = vmatprep.subr.bf16.mxu0 0
      %948 = vmatpush2.bf16.msra.mxu0 0
      %949 = vmatprep.subr.bf16.mxu0 0
      %950 = vmatpush2.bf16.msra.mxu0 0
      %951 = vmatprep.subr.bf16.mxu0 0
      %952 = vmatpush2.bf16.msra.mxu0 0
      %953 = vmatprep.subr.bf16.mxu0 0
      %954 = vmatpush2.bf16.msra.mxu0 0
      %955 = vmatprep.mubr.bf16.mxu0 0
      %956 = vmatmul.mubr.bf16.gmra.mxu0 %v918
      %v957 = vpop.f32.mrf.mxu0
      %v958 = vadd.f32 0.0, %v957
      %v959 = vpop.f32.mrf.mxu0
      %v960 = vpop.f32.mrf.mxu0
      %v961 = vpop.f32.mrf.mxu0
      %962 = vdwg.mxu0
      %v963 = vpack.c.bf16 %v958, %v958
      %v965 = vunpack.c.l.b16 %v963
      %v966 = vpack.c.b16 %v965, %v965
      %967 = vrot.lane.b32.xlu0 %v966, 24
      %v968 = vpop.permute.xlu0 %967
      %vm970 = vcmask 257216
      %971 = vst.msk [vmem:[#allocation3] sm:$0xf] %vm970, %v968
      %s972 = scalar_lea.vmem [#allocation2], 4
      %v973 = vld [vmem:[%s972] sm:$0xf]
      %v975 = vunpack.c.l.b16 %v973
      %v976 = vpack.c.b16 %v975, %v975
      %977 = vrot.lane.b32.xlu0 %v976, 96
      %v978 = vpop.permute.xlu0 %977
      %v980 = vsel %vm492, %v973, 0
      %v983 = vsel %vm492, %v978, 0
      %985 = vmatprep.subr.bf16.mxu0 0
      %986 = vmatpush1.bf16.xpose.msra.mxu0 0
      %987 = vmatprep.subr.bf16.mxu0 0
      %988 = vmatpush1.bf16.xpose.msra.mxu0 0
      %989 = vmatprep.subr.bf16.mxu0 0
      %990 = vmatpush1.bf16.xpose.msra.mxu0 0
      %991 = vmatprep.subr.bf16.mxu0 0
      %992 = vmatpush1.bf16.xpose.msra.mxu0 0
      %993 = vmatprep.subr.bf16.mxu0 0
      %994 = vmatpush1.bf16.xpose.msra.mxu0 0
      %995 = vmatprep.subr.bf16.mxu0 0
      %996 = vmatpush1.bf16.xpose.msra.mxu0 0
      %997 = vmatprep.subr.bf16.mxu0 0
      %998 = vmatpush1.bf16.xpose.msra.mxu0 0
      %999 = vmatprep.subr.bf16.mxu0 0
      %1000 = vmatpush1.bf16.xpose.msra.mxu0 %v983
      %1001 = vmatprep.subr.bf16.mxu0 0
      %1002 = vmatpush2.bf16.xpose.msra.mxu0 0
      %1003 = vmatprep.subr.bf16.mxu0 0
      %1004 = vmatpush2.bf16.xpose.msra.mxu0 0
      %1005 = vmatprep.subr.bf16.mxu0 0
      %1006 = vmatpush2.bf16.xpose.msra.mxu0 0
      %1007 = vmatprep.subr.bf16.mxu0 0
      %1008 = vmatpush2.bf16.xpose.msra.mxu0 0
      %1009 = vmatprep.subr.bf16.mxu0 0
      %1010 = vmatpush2.bf16.xpose.msra.mxu0 0
      %1011 = vmatprep.subr.bf16.mxu0 0
      %1012 = vmatpush2.bf16.xpose.msra.mxu0 0
      %1013 = vmatprep.subr.bf16.mxu0 0
      %1014 = vmatpush2.bf16.xpose.msra.mxu0 0
      %1015 = vmatprep.subr.bf16.mxu0 0
      %1016 = vmatpush2.bf16.xpose.msra.mxu0 0
      %1017 = vmatprep.mubr.bf16.mxu0 0
      %1018 = vmatmul.mubr.bf16.gmra.mxu0 %v980
      %v1019 = vpop.f32.mrf.mxu0
      %v1020 = vadd.f32 %v485, %v1019
      %v1021 = vpop.f32.mrf.mxu0
      %v1022 = vpop.f32.mrf.mxu0
      %v1023 = vpop.f32.mrf.mxu0
      %1024 = vdwg.mxu0
      %v1025 = vsel %vm492, %v1020, -inf
      %1026 = vmax.xlane.f32.xlu0 %v1025
      %v1027 = vpop.xlane.xlu0 %1026
      %v1028 = vsub.f32 %v1020, %v1027
      %v1029 = vmul.f32 %v1028, 1.442695
      %v1030 = vpow.pop %v1029
      %v1031 = vsel %vm492, %v1030, 0.0
      %1032 = vadd.xlane.f32.xlu0 %v1031
      %v1033 = vpop.xlane.xlu0 %1032
      %v1034 = vrcp.pop %v1033
      %v1035 = vmul.f32 %v1030, %v1034
      %v1036 = vpack.c.bf16 %v1035, %v1035
      %1037 = vrot.lane.b32.xlu0 %v976, 64
      %v1038 = vpop.permute.xlu0 %1037
      %v1040 = vsel %vm492, %v1036, 0
      %v1043 = vsel %vm556, %v1038, 0
      %1045 = vmatprep.subr.bf16.mxu0 0
      %1046 = vmatpush1.bf16.msra.mxu0 0
      %1047 = vmatprep.subr.bf16.mxu0 0
      %1048 = vmatpush1.bf16.msra.mxu0 0
      %1049 = vmatprep.subr.bf16.mxu0 0
      %1050 = vmatpush1.bf16.msra.mxu0 0
      %1051 = vmatprep.subr.bf16.mxu0 0
      %1052 = vmatpush1.bf16.msra.mxu0 0
      %1053 = vmatprep.subr.bf16.mxu0 0
      %1054 = vmatpush1.bf16.msra.mxu0 0
      %1055 = vmatprep.subr.bf16.mxu0 0
      %1056 = vmatpush1.bf16.msra.mxu0 0
      %1057 = vmatprep.subr.bf16.mxu0 0
      %1058 = vmatpush1.bf16.msra.mxu0 0
      %1059 = vmatprep.subr.bf16.mxu0 0
      %1060 = vmatpush1.bf16.msra.mxu0 %v1043
      %1061 = vmatprep.subr.bf16.mxu0 0
      %1062 = vmatpush2.bf16.msra.mxu0 0
      %1063 = vmatprep.subr.bf16.mxu0 0
      %1064 = vmatpush2.bf16.msra.mxu0 0
      %1065 = vmatprep.subr.bf16.mxu0 0
      %1066 = vmatpush2.bf16.msra.mxu0 0
      %1067 = vmatprep.subr.bf16.mxu0 0
      %1068 = vmatpush2.bf16.msra.mxu0 0
      %1069 = vmatprep.subr.bf16.mxu0 0
      %1070 = vmatpush2.bf16.msra.mxu0 0
      %1071 = vmatprep.subr.bf16.mxu0 0
      %1072 = vmatpush2.bf16.msra.mxu0 0
      %1073 = vmatprep.subr.bf16.mxu0 0
      %1074 = vmatpush2.bf16.msra.mxu0 0
      %1075 = vmatprep.subr.bf16.mxu0 0
      %1076 = vmatpush2.bf16.msra.mxu0 0
      %1077 = vmatprep.mubr.bf16.mxu0 0
      %1078 = vmatmul.mubr.bf16.gmra.mxu0 %v1040
      %v1079 = vpop.f32.mrf.mxu0
      %v1080 = vadd.f32 0.0, %v1079
      %v1081 = vpop.f32.mrf.mxu0
      %v1082 = vpop.f32.mrf.mxu0
      %v1083 = vpop.f32.mrf.mxu0
      %1084 = vdwg.mxu0
      %v1085 = vpack.c.bf16 %v1080, %v1080
      %s1086 = scalar_lea.vmem [#allocation3], 4
      %1087 = vst.msk [vmem:[%s1086] sm:$0xf] %vm601, %v1085
      %v1088 = vld [vmem:[%s972] sm:$0xf]
      %v1090 = vunpack.c.l.b16 %v1088
      %v1091 = vpack.c.b16 %v1090, %v1090
      %1092 = vrot.lane.b32.xlu0 %v1091, 120
      %v1093 = vpop.permute.xlu0 %1092
      %1094 = vrot.lane.b32.xlu0 %v1091, 88
      %v1095 = vpop.permute.xlu0 %1094
      %v1097 = vsel %vm492, %v1093, 0
      %v1100 = vsel %vm492, %v1095, 0
      %1102 = vmatprep.subr.bf16.mxu0 0
      %1103 = vmatpush1.bf16.xpose.msra.mxu0 0
      %1104 = vmatprep.subr.bf16.mxu0 0
      %1105 = vmatpush1.bf16.xpose.msra.mxu0 0
      %1106 = vmatprep.subr.bf16.mxu0 0
      %1107 = vmatpush1.bf16.xpose.msra.mxu0 0
      %1108 = vmatprep.subr.bf16.mxu0 0
      %1109 = vmatpush1.bf16.xpose.msra.mxu0 0
      %1110 = vmatprep.subr.bf16.mxu0 0
      %1111 = vmatpush1.bf16.xpose.msra.mxu0 0
      %1112 = vmatprep.subr.bf16.mxu0 0
      %1113 = vmatpush1.bf16.xpose.msra.mxu0 0
      %1114 = vmatprep.subr.bf16.mxu0 0
      %1115 = vmatpush1.bf16.xpose.msra.mxu0 0
      %1116 = vmatprep.subr.bf16.mxu0 0
      %1117 = vmatpush1.bf16.xpose.msra.mxu0 %v1100
      %1118 = vmatprep.subr.bf16.mxu0 0
      %1119 = vmatpush2.bf16.xpose.msra.mxu0 0
      %1120 = vmatprep.subr.bf16.mxu0 0
      %1121 = vmatpush2.bf16.xpose.msra.mxu0 0
      %1122 = vmatprep.subr.bf16.mxu0 0
      %1123 = vmatpush2.bf16.xpose.msra.mxu0 0
      %1124 = vmatprep.subr.bf16.mxu0 0
      %1125 = vmatpush2.bf16.xpose.msra.mxu0 0
      %1126 = vmatprep.subr.bf16.mxu0 0
      %1127 = vmatpush2.bf16.xpose.msra.mxu0 0
      %1128 = vmatprep.subr.bf16.mxu0 0
      %1129 = vmatpush2.bf16.xpose.msra.mxu0 0
      %1130 = vmatprep.subr.bf16.mxu0 0
      %1131 = vmatpush2.bf16.xpose.msra.mxu0 0
      %1132 = vmatprep.subr.bf16.mxu0 0
      %1133 = vmatpush2.bf16.xpose.msra.mxu0 0
      %1134 = vmatprep.mubr.bf16.mxu0 0
      %1135 = vmatmul.mubr.bf16.gmra.mxu0 %v1097
      %v1136 = vpop.f32.mrf.mxu0
      %v1137 = vadd.f32 %v485, %v1136
      %v1138 = vpop.f32.mrf.mxu0
      %v1139 = vpop.f32.mrf.mxu0
      %v1140 = vpop.f32.mrf.mxu0
      %1141 = vdwg.mxu0
      %v1142 = vsel %vm492, %v1137, -inf
      %1143 = vmax.xlane.f32.xlu0 %v1142
      %v1144 = vpop.xlane.xlu0 %1143
      %v1145 = vsub.f32 %v1137, %v1144
      %v1146 = vmul.f32 %v1145, 1.442695
      %v1147 = vpow.pop %v1146
      %v1148 = vsel %vm492, %v1147, 0.0
      %1149 = vadd.xlane.f32.xlu0 %v1148
      %v1150 = vpop.xlane.xlu0 %1149
      %v1151 = vrcp.pop %v1150
      %v1152 = vmul.f32 %v1147, %v1151
      %v1153 = vpack.c.bf16 %v1152, %v1152
      %1154 = vrot.lane.b32.xlu0 %v1091, 56
      %v1155 = vpop.permute.xlu0 %1154
      %v1157 = vsel %vm492, %v1153, 0
      %v1160 = vsel %vm556, %v1155, 0
      %1162 = vmatprep.subr.bf16.mxu0 0
      %1163 = vmatpush1.bf16.msra.mxu0 0
      %1164 = vmatprep.subr.bf16.mxu0 0
      %1165 = vmatpush1.bf16.msra.mxu0 0
      %1166 = vmatprep.subr.bf16.mxu0 0
      %1167 = vmatpush1.bf16.msra.mxu0 0
      %1168 = vmatprep.subr.bf16.mxu0 0
      %1169 = vmatpush1.bf16.msra.mxu0 0
      %1170 = vmatprep.subr.bf16.mxu0 0
      %1171 = vmatpush1.bf16.msra.mxu0 0
      %1172 = vmatprep.subr.bf16.mxu0 0
      %1173 = vmatpush1.bf16.msra.mxu0 0
      %1174 = vmatprep.subr.bf16.mxu0 0
      %1175 = vmatpush1.bf16.msra.mxu0 0
      %1176 = vmatprep.subr.bf16.mxu0 0
      %1177 = vmatpush1.bf16.msra.mxu0 %v1160
      %1178 = vmatprep.subr.bf16.mxu0 0
      %1179 = vmatpush2.bf16.msra.mxu0 0
      %1180 = vmatprep.subr.bf16.mxu0 0
      %1181 = vmatpush2.bf16.msra.mxu0 0
      %1182 = vmatprep.subr.bf16.mxu0 0
      %1183 = vmatpush2.bf16.msra.mxu0 0
      %1184 = vmatprep.subr.bf16.mxu0 0
      %1185 = vmatpush2.bf16.msra.mxu0 0
      %1186 = vmatprep.subr.bf16.mxu0 0
      %1187 = vmatpush2.bf16.msra.mxu0 0
      %1188 = vmatprep.subr.bf16.mxu0 0
      %1189 = vmatpush2.bf16.msra.mxu0 0
      %1190 = vmatprep.subr.bf16.mxu0 0
      %1191 = vmatpush2.bf16.msra.mxu0 0
      %1192 = vmatprep.subr.bf16.mxu0 0
      %1193 = vmatpush2.bf16.msra.mxu0 0
      %1194 = vmatprep.mubr.bf16.mxu0 0
      %1195 = vmatmul.mubr.bf16.gmra.mxu0 %v1157
      %v1196 = vpop.f32.mrf.mxu0
      %v1197 = vadd.f32 0.0, %v1196
      %v1198 = vpop.f32.mrf.mxu0
      %v1199 = vpop.f32.mrf.mxu0
      %v1200 = vpop.f32.mrf.mxu0
      %1201 = vdwg.mxu0
      %v1202 = vpack.c.bf16 %v1197, %v1197
      %v1204 = vunpack.c.l.b16 %v1202
      %v1205 = vpack.c.b16 %v1204, %v1204
      %1206 = vrot.lane.b32.xlu0 %v1205, 8
      %v1207 = vpop.permute.xlu0 %1206
      %1209 = vst.msk [vmem:[%s1086] sm:$0xf] %vm724, %v1207
      %v1210 = vld [vmem:[%s972] sm:$0xf]
      %v1212 = vunpack.c.l.b16 %v1210
      %v1213 = vpack.c.b16 %v1212, %v1212
      %1214 = vrot.lane.b32.xlu0 %v1213, 112
      %v1215 = vpop.permute.xlu0 %1214
      %1216 = vrot.lane.b32.xlu0 %v1213, 80
      %v1217 = vpop.permute.xlu0 %1216
      %v1219 = vsel %vm492, %v1215, 0
      %v1222 = vsel %vm492, %v1217, 0
      %1224 = vmatprep.subr.bf16.mxu0 0
      %1225 = vmatpush1.bf16.xpose.msra.mxu0 0
      %1226 = vmatprep.subr.bf16.mxu0 0
      %1227 = vmatpush1.bf16.xpose.msra.mxu0 0
      %1228 = vmatprep.subr.bf16.mxu0 0
      %1229 = vmatpush1.bf16.xpose.msra.mxu0 0
      %1230 = vmatprep.subr.bf16.mxu0 0
      %1231 = vmatpush1.bf16.xpose.msra.mxu0 0
      %1232 = vmatprep.subr.bf16.mxu0 0
      %1233 = vmatpush1.bf16.xpose.msra.mxu0 0
      %1234 = vmatprep.subr.bf16.mxu0 0
      %1235 = vmatpush1.bf16.xpose.msra.mxu0 0
      %1236 = vmatprep.subr.bf16.mxu0 0
      %1237 = vmatpush1.bf16.xpose.msra.mxu0 0
      %1238 = vmatprep.subr.bf16.mxu0 0
      %1239 = vmatpush1.bf16.xpose.msra.mxu0 %v1222
      %1240 = vmatprep.subr.bf16.mxu0 0
      %1241 = vmatpush2.bf16.xpose.msra.mxu0 0
      %1242 = vmatprep.subr.bf16.mxu0 0
      %1243 = vmatpush2.bf16.xpose.msra.mxu0 0
      %1244 = vmatprep.subr.bf16.mxu0 0
      %1245 = vmatpush2.bf16.xpose.msra.mxu0 0
      %1246 = vmatprep.subr.bf16.mxu0 0
      %1247 = vmatpush2.bf16.xpose.msra.mxu0 0
      %1248 = vmatprep.subr.bf16.mxu0 0
      %1249 = vmatpush2.bf16.xpose.msra.mxu0 0
      %1250 = vmatprep.subr.bf16.mxu0 0
      %1251 = vmatpush2.bf16.xpose.msra.mxu0 0
      %1252 = vmatprep.subr.bf16.mxu0 0
      %1253 = vmatpush2.bf16.xpose.msra.mxu0 0
      %1254 = vmatprep.subr.bf16.mxu0 0
      %1255 = vmatpush2.bf16.xpose.msra.mxu0 0
      %1256 = vmatprep.mubr.bf16.mxu0 0
      %1257 = vmatmul.mubr.bf16.gmra.mxu0 %v1219
      %v1258 = vpop.f32.mrf.mxu0
      %v1259 = vadd.f32 %v485, %v1258
      %v1260 = vpop.f32.mrf.mxu0
      %v1261 = vpop.f32.mrf.mxu0
      %v1262 = vpop.f32.mrf.mxu0
      %1263 = vdwg.mxu0
      %v1264 = vsel %vm492, %v1259, -inf
      %1265 = vmax.xlane.f32.xlu0 %v1264
      %v1266 = vpop.xlane.xlu0 %1265
      %v1267 = vsub.f32 %v1259, %v1266
      %v1268 = vmul.f32 %v1267, 1.442695
      %v1269 = vpow.pop %v1268
      %v1270 = vsel %vm492, %v1269, 0.0
      %1271 = vadd.xlane.f32.xlu0 %v1270
      %v1272 = vpop.xlane.xlu0 %1271
      %v1273 = vrcp.pop %v1272
      %v1274 = vmul.f32 %v1269, %v1273
      %v1275 = vpack.c.bf16 %v1274, %v1274
      %1276 = vrot.lane.b32.xlu0 %v1213, 48
      %v1277 = vpop.permute.xlu0 %1276
      %v1279 = vsel %vm492, %v1275, 0
      %v1282 = vsel %vm556, %v1277, 0
      %1284 = vmatprep.subr.bf16.mxu0 0
      %1285 = vmatpush1.bf16.msra.mxu0 0
      %1286 = vmatprep.subr.bf16.mxu0 0
      %1287 = vmatpush1.bf16.msra.mxu0 0
      %1288 = vmatprep.subr.bf16.mxu0 0
      %1289 = vmatpush1.bf16.msra.mxu0 0
      %1290 = vmatprep.subr.bf16.mxu0 0
      %1291 = vmatpush1.bf16.msra.mxu0 0
      %1292 = vmatprep.subr.bf16.mxu0 0
      %1293 = vmatpush1.bf16.msra.mxu0 0
      %1294 = vmatprep.subr.bf16.mxu0 0
      %1295 = vmatpush1.bf16.msra.mxu0 0
      %1296 = vmatprep.subr.bf16.mxu0 0
      %1297 = vmatpush1.bf16.msra.mxu0 0
      %1298 = vmatprep.subr.bf16.mxu0 0
      %1299 = vmatpush1.bf16.msra.mxu0 %v1282
      %1300 = vmatprep.subr.bf16.mxu0 0
      %1301 = vmatpush2.bf16.msra.mxu0 0
      %1302 = vmatprep.subr.bf16.mxu0 0
      %1303 = vmatpush2.bf16.msra.mxu0 0
      %1304 = vmatprep.subr.bf16.mxu0 0
      %1305 = vmatpush2.bf16.msra.mxu0 0
      %1306 = vmatprep.subr.bf16.mxu0 0
      %1307 = vmatpush2.bf16.msra.mxu0 0
      %1308 = vmatprep.subr.bf16.mxu0 0
      %1309 = vmatpush2.bf16.msra.mxu0 0
      %1310 = vmatprep.subr.bf16.mxu0 0
      %1311 = vmatpush2.bf16.msra.mxu0 0
      %1312 = vmatprep.subr.bf16.mxu0 0
      %1313 = vmatpush2.bf16.msra.mxu0 0
      %1314 = vmatprep.subr.bf16.mxu0 0
      %1315 = vmatpush2.bf16.msra.mxu0 0
      %1316 = vmatprep.mubr.bf16.mxu0 0
      %1317 = vmatmul.mubr.bf16.gmra.mxu0 %v1279
      %v1318 = vpop.f32.mrf.mxu0
      %v1319 = vadd.f32 0.0, %v1318
      %v1320 = vpop.f32.mrf.mxu0
      %v1321 = vpop.f32.mrf.mxu0
      %v1322 = vpop.f32.mrf.mxu0
      %1323 = vdwg.mxu0
      %v1324 = vpack.c.bf16 %v1319, %v1319
      %v1326 = vunpack.c.l.b16 %v1324
      %v1327 = vpack.c.b16 %v1326, %v1326
      %1328 = vrot.lane.b32.xlu0 %v1327, 16
      %v1329 = vpop.permute.xlu0 %1328
      %1331 = vst.msk [vmem:[%s1086] sm:$0xf] %vm847, %v1329
      %v1332 = vld [vmem:[%s972] sm:$0xf]
      %v1334 = vunpack.c.l.b16 %v1332
      %v1335 = vpack.c.b16 %v1334, %v1334
      %1336 = vrot.lane.b32.xlu0 %v1335, 104
      %v1337 = vpop.permute.xlu0 %1336
      %1338 = vrot.lane.b32.xlu0 %v1335, 72
      %v1339 = vpop.permute.xlu0 %1338
      %v1341 = vsel %vm492, %v1337, 0
      %v1344 = vsel %vm492, %v1339, 0
      %1346 = vmatprep.subr.bf16.mxu0 0
      %1347 = vmatpush1.bf16.xpose.msra.mxu0 0
      %1348 = vmatprep.subr.bf16.mxu0 0
      %1349 = vmatpush1.bf16.xpose.msra.mxu0 0
      %1350 = vmatprep.subr.bf16.mxu0 0
      %1351 = vmatpush1.bf16.xpose.msra.mxu0 0
      %1352 = vmatprep.subr.bf16.mxu0 0
      %1353 = vmatpush1.bf16.xpose.msra.mxu0 0
      %1354 = vmatprep.subr.bf16.mxu0 0
      %1355 = vmatpush1.bf16.xpose.msra.mxu0 0
      %1356 = vmatprep.subr.bf16.mxu0 0
      %1357 = vmatpush1.bf16.xpose.msra.mxu0 0
      %1358 = vmatprep.subr.bf16.mxu0 0
      %1359 = vmatpush1.bf16.xpose.msra.mxu0 0
      %1360 = vmatprep.subr.bf16.mxu0 0
      %1361 = vmatpush1.bf16.xpose.msra.mxu0 %v1344
      %1362 = vmatprep.subr.bf16.mxu0 0
      %1363 = vmatpush2.bf16.xpose.msra.mxu0 0
      %1364 = vmatprep.subr.bf16.mxu0 0
      %1365 = vmatpush2.bf16.xpose.msra.mxu0 0
      %1366 = vmatprep.subr.bf16.mxu0 0
      %1367 = vmatpush2.bf16.xpose.msra.mxu0 0
      %1368 = vmatprep.subr.bf16.mxu0 0
      %1369 = vmatpush2.bf16.xpose.msra.mxu0 0
      %1370 = vmatprep.subr.bf16.mxu0 0
      %1371 = vmatpush2.bf16.xpose.msra.mxu0 0
      %1372 = vmatprep.subr.bf16.mxu0 0
      %1373 = vmatpush2.bf16.xpose.msra.mxu0 0
      %1374 = vmatprep.subr.bf16.mxu0 0
      %1375 = vmatpush2.bf16.xpose.msra.mxu0 0
      %1376 = vmatprep.subr.bf16.mxu0 0
      %1377 = vmatpush2.bf16.xpose.msra.mxu0 0
      %1378 = vmatprep.mubr.bf16.mxu0 0
      %1379 = vmatmul.mubr.bf16.gmra.mxu0 %v1341
      %v1380 = vpop.f32.mrf.mxu0
      %v1381 = vadd.f32 %v485, %v1380
      %v1382 = vpop.f32.mrf.mxu0
      %v1383 = vpop.f32.mrf.mxu0
      %v1384 = vpop.f32.mrf.mxu0
      %1385 = vdwg.mxu0
      %v1386 = vsel %vm492, %v1381, -inf
      %1387 = vmax.xlane.f32.xlu0 %v1386
      %v1388 = vpop.xlane.xlu0 %1387
      %v1389 = vsub.f32 %v1381, %v1388
      %v1390 = vmul.f32 %v1389, 1.442695
      %v1391 = vpow.pop %v1390
      %v1392 = vsel %vm492, %v1391, 0.0
      %1393 = vadd.xlane.f32.xlu0 %v1392
      %v1394 = vpop.xlane.xlu0 %1393
      %v1395 = vrcp.pop %v1394
      %v1396 = vmul.f32 %v1391, %v1395
      %v1397 = vpack.c.bf16 %v1396, %v1396
      %1398 = vrot.lane.b32.xlu0 %v1335, 40
      %v1399 = vpop.permute.xlu0 %1398
      %v1401 = vsel %vm492, %v1397, 0
      %v1404 = vsel %vm556, %v1399, 0
      %1406 = vmatprep.subr.bf16.mxu0 0
      %1407 = vmatpush1.bf16.msra.mxu0 0
      %1408 = vmatprep.subr.bf16.mxu0 0
      %1409 = vmatpush1.bf16.msra.mxu0 0
      %1410 = vmatprep.subr.bf16.mxu0 0
      %1411 = vmatpush1.bf16.msra.mxu0 0
      %1412 = vmatprep.subr.bf16.mxu0 0
      %1413 = vmatpush1.bf16.msra.mxu0 0
      %1414 = vmatprep.subr.bf16.mxu0 0
      %1415 = vmatpush1.bf16.msra.mxu0 0
      %1416 = vmatprep.subr.bf16.mxu0 0
      %1417 = vmatpush1.bf16.msra.mxu0 0
      %1418 = vmatprep.subr.bf16.mxu0 0
      %1419 = vmatpush1.bf16.msra.mxu0 0
      %1420 = vmatprep.subr.bf16.mxu0 0
      %1421 = vmatpush1.bf16.msra.mxu0 %v1404
      %1422 = vmatprep.subr.bf16.mxu0 0
      %1423 = vmatpush2.bf16.msra.mxu0 0
      %1424 = vmatprep.subr.bf16.mxu0 0
      %1425 = vmatpush2.bf16.msra.mxu0 0
      %1426 = vmatprep.subr.bf16.mxu0 0
      %1427 = vmatpush2.bf16.msra.mxu0 0
      %1428 = vmatprep.subr.bf16.mxu0 0
      %1429 = vmatpush2.bf16.msra.mxu0 0
      %1430 = vmatprep.subr.bf16.mxu0 0
      %1431 = vmatpush2.bf16.msra.mxu0 0
      %1432 = vmatprep.subr.bf16.mxu0 0
      %1433 = vmatpush2.bf16.msra.mxu0 0
      %1434 = vmatprep.subr.bf16.mxu0 0
      %1435 = vmatpush2.bf16.msra.mxu0 0
      %1436 = vmatprep.subr.bf16.mxu0 0
      %1437 = vmatpush2.bf16.msra.mxu0 0
      %1438 = vmatprep.mubr.bf16.mxu0 0
      %1439 = vmatmul.mubr.bf16.gmra.mxu0 %v1401
      %v1440 = vpop.f32.mrf.mxu0
      %v1441 = vadd.f32 0.0, %v1440
      %v1442 = vpop.f32.mrf.mxu0
      %v1443 = vpop.f32.mrf.mxu0
      %v1444 = vpop.f32.mrf.mxu0
      %1445 = vdwg.mxu0
      %v1446 = vpack.c.bf16 %v1441, %v1441
      %v1448 = vunpack.c.l.b16 %v1446
      %v1449 = vpack.c.b16 %v1448, %v1448
      %1450 = vrot.lane.b32.xlu0 %v1449, 24
      %v1451 = vpop.permute.xlu0 %1450
      %1453 = vst.msk [vmem:[%s1086] sm:$0xf] %vm970, %v1451
      %v1454 = vld [vmem:[#allocation3] sm:$0xf]
      %v1455 = vld [vmem:[#allocation3 + $0x4] sm:$0xf]
      %v1456 = vld [vmem:[%s347] sm:$0xf]
      %v1457 = vld [vmem:[%s347 + $0x4] sm:$0xf]
      %v1458 = vld [vmem:[%s347 + $0x8] sm:$0xf]
      %v1459 = vld [vmem:[%s347 + $0xc] sm:$0xf]
      %v1460 = vld [vmem:[%s336] sm:$0xf]
      %v1461 = vld [vmem:[%s336 + $0x4] sm:$0xf]
      %v1462 = vld [vmem:[%s6] sm:$0x1]
      %v1464 = vlaneseq
      %v1465 = vshrl.u32 %v1464, 7
      %v1466 = vsub.s32 0, %v1465
      %v1467 = vrot.slane %v1462, %v1466
      %v1471 = vunpack.c.l.b16 %v1454
      %v1472 = vunpack.c.l.b16 %v1455
      %v1473 = vpack.c.b16 %v1472, %v1471
      %v1478 = vunpack.c.l.b16 %v1456
      %v1479 = vunpack.c.l.b16 %v1457
      %v1480 = vunpack.c.l.b16 %v1458
      %v1481 = vunpack.c.l.b16 %v1459
      %v1482 = vpack.c.b16 %v1479, %v1478
      %v1483 = vpack.c.b16 %v1481, %v1480
      %v1487 = vsel %vm365, %v1473, 0
      %1489 = vmatprep.subr.bf16.mxu0 0
      %1490 = vmatpush1.bf16.msra.mxu0 0
      %1491 = vmatprep.subr.bf16.mxu0 0
      %1492 = vmatpush1.bf16.msra.mxu0 0
      %1493 = vmatprep.subr.bf16.mxu0 0
      %1494 = vmatpush1.bf16.msra.mxu0 0
      %1495 = vmatprep.subr.bf16.mxu0 0
      %1496 = vmatpush1.bf16.msra.mxu0 0
      %1497 = vmatprep.subr.bf16.mxu0 0
      %1498 = vmatpush1.bf16.msra.mxu0 0
      %1499 = vmatprep.subr.bf16.mxu0 0
      %1500 = vmatpush1.bf16.msra.mxu0 0
      %1501 = vmatprep.subr.bf16.mxu0 0
      %1502 = vmatpush1.bf16.msra.mxu0 %v1483
      %1503 = vmatprep.subr.bf16.mxu0 0
      %1504 = vmatpush1.bf16.msra.mxu0 %v1482
      %1505 = vmatprep.subr.bf16.mxu0 0
      %1506 = vmatpush2.bf16.msra.mxu0 0
      %1507 = vmatprep.subr.bf16.mxu0 0
      %1508 = vmatpush2.bf16.msra.mxu0 0
      %1509 = vmatprep.subr.bf16.mxu0 0
      %1510 = vmatpush2.bf16.msra.mxu0 0
      %1511 = vmatprep.subr.bf16.mxu0 0
      %1512 = vmatpush2.bf16.msra.mxu0 0
      %1513 = vmatprep.subr.bf16.mxu0 0
      %1514 = vmatpush2.bf16.msra.mxu0 0
      %1515 = vmatprep.subr.bf16.mxu0 0
      %1516 = vmatpush2.bf16.msra.mxu0 0
      %1517 = vmatprep.subr.bf16.mxu0 0
      %1518 = vmatpush2.bf16.msra.mxu0 0
      %1519 = vmatprep.subr.bf16.mxu0 0
      %1520 = vmatpush2.bf16.msra.mxu0 0
      %1521 = vmatprep.mubr.bf16.mxu0 0
      %1522 = vmatmul.mubr.bf16.gmra.mxu0 %v1487
      %v1523 = vpop.f32.mrf.mxu0
      %v1524 = vadd.f32 %v1467, %v1523
      %v1525 = vpop.f32.mrf.mxu0
      %v1526 = vpop.f32.mrf.mxu0
      %v1527 = vadd.f32 %v1467, %v1526
      %v1528 = vpop.f32.mrf.mxu0
      %1529 = vdwg.mxu0
      %v1530 = vunpack.c.l.bf16 %v1460
      %v1531 = vunpack.c.l.bf16 %v1461
      %v1532 = vadd.f32 %v1524, %v1530
      %v1533 = vadd.f32 %v1527, %v1531
      %v1534 = vpack.c.bf16 %v1532, %v1532
      %v1535 = vpack.c.bf16 %v1533, %v1533
      %vm1536 = vcmask 257024
      %1537 = vst.msk [vmem:[%s356] sm:$0xf] %vm1536, %v1534
      %1538 = vst.msk [vmem:[%s356 + $0x4] sm:$0xf] %vm1536, %v1535
      %s1539 = smul.u32 2, %s23
      %p1540 = scmp.lt.s32.totalorder %s22, 1
      %s1541 = scalar_select %p1540, %s22, 1
      %p1542 = scmp.lt.s32.totalorder %s1539, 1
      %s1543 = scalar_select %p1542, %s1539, 1
      %s1544 = smul.addr %s1541, 2
      %s1545 = sadd.s32 %s1543, %s1544
      %s1546 = smul.addr %s1545, 4
      %s1547 = scalar_lea.vmem %s7, %s1546
      // Predicated region
      $region49: #{lora_ensemble_forward.9} parent=47 // pred_check
        %p1548 = pneg %p214
      $region50: #{lora_ensemble_forward.9} parent=47 // pred_check_branch
        %1550 = sbr.rel (%p1548) target = $region52
      $region51: #{lora_ensemble_forward.9} parent=47 // pred_region
        %s1551 = smul.u32 2, %s23
      $region52: #{lora_ensemble_forward.9} parent=47 // pred_fallthru
        _
    $region48: #{lora_ensemble_forward.9} parent=5 // pred_fallthru
      _
    %p1552 = scmp.le.s32.totalorder 2, %s13
    // Predicated region
    $region53: #{lora_ensemble_forward.9} parent=5 // pred_check
      %p1553 = pneg %p1552
    $region54: #{lora_ensemble_forward.9} parent=5 // pred_check_branch
      %1555 = sbr.rel (%p1553) target = $region56
    $region55: #{lora_ensemble_forward.9} parent=5 // pred_region
      %s1556 = ssub.s32 %s13, 2
      // Predicated region
      $region57: #{lora_ensemble_forward.9} parent=55 // pred_check
        %p1557 = pneg %p220
      $region58: #{lora_ensemble_forward.9} parent=55 // pred_check_branch
        %1559 = sbr.rel (%p1557) target = $region60
      $region59: #{lora_ensemble_forward.9} parent=55 // pred_region
        %s1560 = smul.u32 2, %s25
        %p1561 = scmp.lt.s32.totalorder %s24, 1
        %s1562 = scalar_select %p1561, %s24, 1
        %p1563 = scmp.lt.s32.totalorder %s1560, 1
        %s1564 = scalar_select %p1563, %s1560, 1
        %s1565 = smul.addr %s1562, 2
        %s1566 = sadd.s32 %s1564, %s1565
        %s1567 = smul.addr %s1566, 4
        %s1568 = scalar_lea.vmem %s7, %s1567
      $region60: #{lora_ensemble_forward.9} parent=55 // pred_fallthru
        _
    $region56: #{lora_ensemble_forward.9} parent=5 // pred_fallthru
      _
  $region6: #{lora_ensemble_forward.9} parent=0 // loop_footer
    %s17 = sadd.s32 1, %s13
  $region7: #{lora_ensemble_forward.9} parent=0 // loop_footer_branch
    %12 = sbr.rel target = $region3
  $region8: #{lora_ensemble_forward.9} parent=0 // loop_exit
    _

// kernel: lora_ensemble_forward.11
$region0: #{lora_ensemble_forward.11}
  #allocation0 [shape = 'u32[]', space=smem, size = 0x4, offset = 0x4, fixed_abs, tag = 'smem constant byte address 0x4 - core index']
  #allocation1 [shape = 'u32[144,128]{1,0:T(1,128)}', space=vmem, size = 0x12000, scoped, tag = 'internal scratch']
  %s0 = inlined_call_operand.vmem [shape: bf16[2,2,32], index: 0, kind: input, shape index: {}]
  %s1 = inlined_call_operand.vmem [shape: f32[1,32], index: 1, kind: input, shape index: {}]
  %s2 = inlined_call_operand.vmem [shape: f32[1,32], index: 2, kind: input, shape index: {}]
  %s3 = inlined_call_operand.vmem [shape: bf16[2,32,10], index: 3, kind: input, shape index: {}]
  %s4 = inlined_call_operand.vmem [shape: f32[2,1,10], index: 4, kind: input, shape index: {}]
  %s5 = inlined_call_operand.hbm [shape: f32[2,2,10], index: 5, kind: output, shape index: {}]
  %s6 = sld [smem:[#allocation0]]
  $region53: #{lora_ensemble_forward.11} parent=0
    _
  %s8 = ssub.s32 1, %s6
  %s9 = scalar_select 0, %s8, %s6
  $region1: #{lora_ensemble_forward.11} parent=0
    #allocation2 [shape = 'u8[2048]{0}', space=vmem, size = 0x800, scoped, tag = 'output window, operand 0']
    #allocation3 [shape = 's32[2]{0}', space=sflag, size = 0x8, scoped, tag = 'scoped memory for lora_ensemble_forward.11']
    %10 = vsyncpa [#allocation3], 0
    %s11 = scalar_lea.sflag [#allocation3], 1
    %12 = vsyncpa %s11, 0
    loop: start=0, step=1, limit=4
    $region2: #{lora_ensemble_forward.11} parent=1 // loop_pre_header
      _
    $region3: #{lora_ensemble_forward.11} parent=1 // loop_header
      %s14 = sphi 0, %s18
      %p15 = scmp.ge.s32.totalorder %s14, 4
      %s24 = sphi 0, %s26
      %s27 = sphi 0, %s24
      %s28 = sphi 0, %s27
      %s44 = sphi 0, %s28
      %s48 = sphi 0, %s48
      %s50 = sphi 0, %s48
      %s51 = sphi 0, %s50
      %s65 = sphi 0, %s51
      %s69 = sphi 0, %s69
      %s71 = sphi 0, %s69
      %s72 = sphi 0, %s71
      %s86 = sphi 0, %s72
      %s92 = sphi 0, %s94
      %s95 = sphi 0, %s92
      %s96 = sphi 0, %s95
      %s112 = sphi 0, %s96
      %s118 = sphi 0, %s120
      %s121 = sphi 0, %s118
      %s122 = sphi 0, %s121
      %s138 = sphi 0, %s122
      %s144 = sphi 0, %s146
      %s147 = sphi 0, %s144
      %s148 = sphi 0, %s147
      %s164 = sphi 0, %s148
    $region4: #{lora_ensemble_forward.11} parent=1 // loop_header_branch
      %17 = sbr.rel (%p15) target = $region8
    $region5: #{lora_ensemble_forward.11} parent=1 // loop_body
      %s19 = ssub.s32 %s14, 1
      %s20 = ssub.s32 %s14, 2
      %s21 = sadd.s32 %s14, 1
      %s22 = ssub.s32 %s14, %s21
      %p23 = scmp.eq.s32.totalorder %s22, 0
      %s25 = sadd.s32 %s24, 1
      %s26 = scalar_select %p23, %s24, %s25
      %p29 = pneg %p23
      %p30 = scmp.eq.s32.totalorder %s14, 1
      %p31 = por %p29, %p30
      %p32 = scmp.ne.s32.totalorder %s24, %s27
      %p33 = scmp.eq.s32.totalorder %s14, 0
      %p34 = por %p32, %p33
      %p35 = scmp.ne.s32.totalorder %s24, %s27
      %p36 = scmp.eq.s32.totalorder %s19, 1
      %p37 = por %p35, %p36
      %p38 = scmp.ne.s32.totalorder %s27, %s28
      %p39 = scmp.eq.s32.totalorder %s19, 0
      %p40 = por %p38, %p39
      %p41 = scmp.ne.s32.totalorder %s27, %s28
      %p42 = scmp.eq.s32.totalorder %s20, 1
      %p43 = por %p41, %p42
      %p45 = scmp.ne.s32.totalorder %s28, %s44
      %p46 = scmp.eq.s32.totalorder %s20, 0
      %p47 = por %p45, %p46
      %s49 = sadd.s32 %s48, 1
      %p52 = scmp.eq.s32.totalorder %s14, 1
      %p53 = scmp.ne.s32.totalorder %s48, %s50
      %p54 = scmp.eq.s32.totalorder %s14, 0
      %p55 = por %p53, %p54
      %p56 = scmp.ne.s32.totalorder %s48, %s50
      %p57 = scmp.eq.s32.totalorder %s19, 1
      %p58 = por %p56, %p57
      %p59 = scmp.ne.s32.totalorder %s50, %s51
      %p60 = scmp.eq.s32.totalorder %s19, 0
      %p61 = por %p59, %p60
      %p62 = scmp.ne.s32.totalorder %s50, %s51
      %p63 = scmp.eq.s32.totalorder %s20, 1
      %p64 = por %p62, %p63
      %p66 = scmp.ne.s32.totalorder %s51, %s65
      %p67 = scmp.eq.s32.totalorder %s20, 0
      %p68 = por %p66, %p67
      %s70 = sadd.s32 %s69, 1
      %p73 = scmp.eq.s32.totalorder %s14, 1
      %p74 = scmp.ne.s32.totalorder %s69, %s71
      %p75 = scmp.eq.s32.totalorder %s14, 0
      %p76 = por %p74, %p75
      %p77 = scmp.ne.s32.totalorder %s69, %s71
      %p78 = scmp.eq.s32.totalorder %s19, 1
      %p79 = por %p77, %p78
      %p80 = scmp.ne.s32.totalorder %s71, %s72
      %p81 = scmp.eq.s32.totalorder %s19, 0
      %p82 = por %p80, %p81
      %p83 = scmp.ne.s32.totalorder %s71, %s72
      %p84 = scmp.eq.s32.totalorder %s20, 1
      %p85 = por %p83, %p84
      %p87 = scmp.ne.s32.totalorder %s72, %s86
      %p88 = scmp.eq.s32.totalorder %s20, 0
      %p89 = por %p87, %p88
      %s90 = ssub.s32 %s14, %s21
      %p91 = scmp.eq.s32.totalorder %s90, 0
      %s93 = sadd.s32 %s92, 1
      %s94 = scalar_select %p91, %s92, %s93
      %p97 = pneg %p91
      %p98 = scmp.eq.s32.totalorder %s14, 1
      %p99 = por %p97, %p98
      %p100 = scmp.ne.s32.totalorder %s92, %s95
      %p101 = scmp.eq.s32.totalorder %s14, 0
      %p102 = por %p100, %p101
      %p103 = scmp.ne.s32.totalorder %s92, %s95
      %p104 = scmp.eq.s32.totalorder %s19, 1
      %p105 = por %p103, %p104
      %p106 = scmp.ne.s32.totalorder %s95, %s96
      %p107 = scmp.eq.s32.totalorder %s19, 0
      %p108 = por %p106, %p107
      %p109 = scmp.ne.s32.totalorder %s95, %s96
      %p110 = scmp.eq.s32.totalorder %s20, 1
      %p111 = por %p109, %p110
      %p113 = scmp.ne.s32.totalorder %s96, %s112
      %p114 = scmp.eq.s32.totalorder %s20, 0
      %p115 = por %p113, %p114
      %s116 = ssub.s32 %s14, %s21
      %p117 = scmp.eq.s32.totalorder %s116, 0
      %s119 = sadd.s32 %s118, 1
      %s120 = scalar_select %p117, %s118, %s119
      %p123 = pneg %p117
      %p124 = scmp.eq.s32.totalorder %s14, 1
      %p125 = por %p123, %p124
      %p126 = scmp.ne.s32.totalorder %s118, %s121
      %p127 = scmp.eq.s32.totalorder %s14, 0
      %p128 = por %p126, %p127
      %p129 = scmp.ne.s32.totalorder %s118, %s121
      %p130 = scmp.eq.s32.totalorder %s19, 1
      %p131 = por %p129, %p130
      %p132 = scmp.ne.s32.totalorder %s121, %s122
      %p133 = scmp.eq.s32.totalorder %s19, 0
      %p134 = por %p132, %p133
      %p135 = scmp.ne.s32.totalorder %s121, %s122
      %p136 = scmp.eq.s32.totalorder %s20, 1
      %p137 = por %p135, %p136
      %p139 = scmp.ne.s32.totalorder %s122, %s138
      %p140 = scmp.eq.s32.totalorder %s20, 0
      %p141 = por %p139, %p140
      %s142 = ssub.s32 %s14, %s21
      %p143 = scmp.eq.s32.totalorder %s142, 0
      %s145 = sadd.s32 %s144, 1
      %s146 = scalar_select %p143, %s144, %s145
      %p149 = pneg %p143
      %p150 = scmp.eq.s32.totalorder %s14, 1
      %p151 = por %p149, %p150
      %p152 = scmp.ne.s32.totalorder %s144, %s147
      %p153 = scmp.eq.s32.totalorder %s14, 0
      %p154 = por %p152, %p153
      %p155 = scmp.ne.s32.totalorder %s144, %s147
      %p156 = scmp.eq.s32.totalorder %s19, 1
      %p157 = por %p155, %p156
      %p158 = scmp.ne.s32.totalorder %s147, %s148
      %p159 = scmp.eq.s32.totalorder %s19, 0
      %p160 = por %p158, %p159
      %p161 = scmp.ne.s32.totalorder %s147, %s148
      %p162 = scmp.eq.s32.totalorder %s20, 1
      %p163 = por %p161, %p162
      %p165 = scmp.ne.s32.totalorder %s148, %s164
      %p166 = scmp.eq.s32.totalorder %s20, 0
      %p167 = por %p165, %p166
      %p168 = scmp.le.s32.totalorder 1, %s14
      %p169 = scmp.lt.s32.totalorder %s14, 3
      %p170 = pnand %p168, %p169
      %p171 = pneg %p170
      // Predicated region
      $region9: #{lora_ensemble_forward.11} parent=5 // pred_check
        _
      $region10: #{lora_ensemble_forward.11} parent=5 // pred_check_branch
        %173 = sbr.rel (%p170) target = $region12
      $region11: #{lora_ensemble_forward.11} parent=5 // pred_region
        %s174 = ssub.s32 %s14, 1
        // Predicated region
        $region13: #{lora_ensemble_forward.11} parent=11 // pred_check
          %p175 = pneg %p61
        $region14: #{lora_ensemble_forward.11} parent=11 // pred_check_branch
          %177 = sbr.rel (%p175) target = $region16
        $region15: #{lora_ensemble_forward.11} parent=11 // pred_region
          _
        $region16: #{lora_ensemble_forward.11} parent=11 // pred_fallthru
          _
        // Predicated region
        $region17: #{lora_ensemble_forward.11} parent=11 // pred_check
          %p178 = pneg %p82
        $region18: #{lora_ensemble_forward.11} parent=11 // pred_check_branch
          %180 = sbr.rel (%p178) target = $region20
        $region19: #{lora_ensemble_forward.11} parent=11 // pred_region
          _
        $region20: #{lora_ensemble_forward.11} parent=11 // pred_fallthru
          _
      $region12: #{lora_ensemble_forward.11} parent=5 // pred_fallthru
        _
      %p181 = scmp.lt.s32.totalorder %s14, 2
      // Predicated region
      $region21: #{lora_ensemble_forward.11} parent=5 // pred_check
        %p182 = pneg %p181
      $region22: #{lora_ensemble_forward.11} parent=5 // pred_check_branch
        %184 = sbr.rel (%p182) target = $region24
      $region23: #{lora_ensemble_forward.11} parent=5 // pred_region
        // Predicated region
        $region25: #{lora_ensemble_forward.11} parent=23 // pred_check
          %p185 = pneg %p34
        $region26: #{lora_ensemble_forward.11} parent=23 // pred_check_branch
          %187 = sbr.rel (%p185) target = $region28
        $region27: #{lora_ensemble_forward.11} parent=23 // pred_region
          %p188 = scmp.lt.s32.totalorder %s14, 1
          %s189 = scalar_select %p188, %s14, 1
          %s190 = scalar_lea.vmem %s0, %s189
        $region28: #{lora_ensemble_forward.11} parent=23 // pred_fallthru
          _
        // Predicated region
        $region29: #{lora_ensemble_forward.11} parent=23 // pred_check
          %p191 = pneg %p102
        $region30: #{lora_ensemble_forward.11} parent=23 // pred_check_branch
          %193 = sbr.rel (%p191) target = $region32
        $region31: #{lora_ensemble_forward.11} parent=23 // pred_region
          %p194 = scmp.lt.s32.totalorder %s14, 1
          %s195 = scalar_select %p194, %s14, 1
          %s196 = smul.addr %s195, 4
          %s197 = smul.addr %s196, 4
          %s198 = scalar_lea.vmem %s3, %s197
        $region32: #{lora_ensemble_forward.11} parent=23 // pred_fallthru
          _
        // Predicated region
        $region33: #{lora_ensemble_forward.11} parent=23 // pred_check
          %p199 = pneg %p128
        $region34: #{lora_ensemble_forward.11} parent=23 // pred_check_branch
          %201 = sbr.rel (%p199) target = $region36
        $region35: #{lora_ensemble_forward.11} parent=23 // pred_region
          %p202 = scmp.lt.s32.totalorder %s14, 1
          %s203 = scalar_select %p202, %s14, 1
          %s204 = scalar_lea.vmem %s4, %s203
        $region36: #{lora_ensemble_forward.11} parent=23 // pred_fallthru
          _
      $region24: #{lora_ensemble_forward.11} parent=5 // pred_fallthru
        _
      %p205 = scmp.le.s32.totalorder 1, %s14
      %p206 = scmp.lt.s32.totalorder %s14, 3
      %p207 = pnand %p205, %p206
      %p208 = pneg %p207
      // Predicated region
      $region37: #{lora_ensemble_forward.11} parent=5 // pred_check
        _
      $region38: #{lora_ensemble_forward.11} parent=5 // pred_check_branch
        %210 = sbr.rel (%p207) target = $region40
      $region39: #{lora_ensemble_forward.11} parent=5 // pred_region
        %s211 = ssub.s32 %s14, 1
        %p212 = scmp.lt.s32.totalorder %s19, 1
        %s213 = scalar_select %p212, %s19, 1
        %s214 = scalar_lea.vmem %s0, %s213
        %p215 = pneg %p40
        %p216 = pneg %p37
        %p217 = pneg %p61
        %p218 = pneg %p58
        %p219 = pneg %p82
        %p220 = pneg %p79
        %p221 = scmp.lt.s32.totalorder %s19, 1
        %s222 = scalar_select %p221, %s19, 1
        %s223 = smul.addr %s222, 4
        %s224 = smul.addr %s223, 4
        %s225 = scalar_lea.vmem %s3, %s224
        %p226 = pneg %p108
        %p227 = pneg %p105
        %p228 = scmp.lt.s32.totalorder %s19, 1
        %s229 = scalar_select %p228, %s19, 1
        %s230 = scalar_lea.vmem %s4, %s229
        %p231 = pneg %p134
        %p232 = pneg %p131
        %p233 = pneg %p160
        %p234 = pneg %p157
        %s235 = sand.u32 %s147, 1
        %s236 = scalar_lea.sflag [#allocation3], %s235
        %s237 = sand.u32 %s147, 1
        %s238 = smul.addr %s237, 2
        %s239 = scalar_lea.vmem [#allocation2], %s238
        %p240 = scmp.lt.s32.totalorder %s19, 1
        %s241 = scalar_select %p240, %s19, 1
        %s242 = scalar_lea.vmem %s0, %s241
        %p243 = scmp.lt.s32.totalorder %s19, 1
        %s244 = scalar_select %p243, %s19, 1
        %s245 = smul.addr %s244, 4
        %s246 = smul.addr %s245, 4
        %s247 = scalar_lea.vmem %s3, %s246
        %p248 = scmp.lt.s32.totalorder %s19, 1
        %s249 = scalar_select %p248, %s19, 1
        %s250 = scalar_lea.vmem %s4, %s249
        %v252 = vld [vmem:[%s242] sm:$0x1]
        %v253 = vunpack.c.l.bf16 %v252
        %v254 = vld [vmem:[%s1] sm:$0x1]
        %v255 = vld [vmem:[%s2] sm:$0x1]
        %vm256 = vcmask 254976
        %v257 = vsel %vm256, %v253, 0.0
        %258 = vadd.xlane.f32.xlu0 %v257
        %v259 = vpop.xlane.xlu0 %258
        %v260 = vrcp.pop 32.0
        %v261 = vmul.f32 %v259, %v260
        %v262 = vsub.f32 %v253, %v261
        %v263 = vmul.f32 %v262, %v262
        %v264 = vsel %vm256, %v263, 0.0
        %265 = vadd.xlane.f32.xlu0 %v264
        %v266 = vpop.xlane.xlu0 %265
        %v267 = vmul.f32 %v266, %v260
        %v268 = vadd.f32 %v267, 1e-06
        %v269 = vrsqrt.pop %v268
        %v270 = vmul.f32 %v262, %v269
        %v272 = vlaneseq
        %v273 = vshrl.u32 %v272, 7
        %v274 = vsub.s32 0, %v273
        %v275 = vrot.slane %v254, %v274
        %v277 = vmul.f32 %v270, %v275
        %v279 = vlaneseq
        %v280 = vshrl.u32 %v279, 7
        %v281 = vsub.s32 0, %v280
        %v282 = vrot.slane %v255, %v281
        %v284 = vadd.f32 %v277, %v282
        %v285 = vpack.c.bf16 %v284, %v284
        %v286 = vld [vmem:[%s247] sm:$0xf]
        %v287 = vld [vmem:[%s247 + $0x4] sm:$0xf]
        %v288 = vld [vmem:[%s247 + $0x8] sm:$0xf]
        %v289 = vld [vmem:[%s247 + $0xc] sm:$0xf]
        %v290 = vld [vmem:[%s250] sm:$0x1]
        %v292 = vlaneseq
        %v293 = vshrl.u32 %v292, 7
        %v294 = vsub.s32 0, %v293
        %v295 = vrot.slane %v290, %v294
        %v301 = vunpack.c.l.b16 %v286
        %v302 = vunpack.c.l.b16 %v287
        %v303 = vunpack.c.l.b16 %v288
        %v304 = vunpack.c.l.b16 %v289
        %v305 = vpack.c.b16 %v302, %v301
        %v306 = vpack.c.b16 %v304, %v303
        %vm309 = vcmask 261120
        %v311 = vsel %vm309, %v285, 0
        %313 = vmatprep.subr.bf16.mxu0 0
        %314 = vmatpush1.bf16.msra.mxu0 0
        %315 = vmatprep.subr.bf16.mxu0 0
        %316 = vmatpush1.bf16.msra.mxu0 0
        %317 = vmatprep.subr.bf16.mxu0 0
        %318 = vmatpush1.bf16.msra.mxu0 0
        %319 = vmatprep.subr.bf16.mxu0 0
        %320 = vmatpush1.bf16.msra.mxu0 0
        %321 = vmatprep.subr.bf16.mxu0 0
        %322 = vmatpush1.bf16.msra.mxu0 0
        %323 = vmatprep.subr.bf16.mxu0 0
        %324 = vmatpush1.bf16.msra.mxu0 0
        %325 = vmatprep.subr.bf16.mxu0 0
        %326 = vmatpush1.bf16.msra.mxu0 %v306
        %327 = vmatprep.subr.bf16.mxu0 0
        %328 = vmatpush1.bf16.msra.mxu0 %v305
        %329 = vmatprep.subr.bf16.mxu0 0
        %330 = vmatpush2.bf16.msra.mxu0 0
        %331 = vmatprep.subr.bf16.mxu0 0
        %332 = vmatpush2.bf16.msra.mxu0 0
        %333 = vmatprep.subr.bf16.mxu0 0
        %334 = vmatpush2.bf16.msra.mxu0 0
        %335 = vmatprep.subr.bf16.mxu0 0
        %336 = vmatpush2.bf16.msra.mxu0 0
        %337 = vmatprep.subr.bf16.mxu0 0
        %338 = vmatpush2.bf16.msra.mxu0 0
        %339 = vmatprep.subr.bf16.mxu0 0
        %340 = vmatpush2.bf16.msra.mxu0 0
        %341 = vmatprep.subr.bf16.mxu0 0
        %342 = vmatpush2.bf16.msra.mxu0 0
        %343 = vmatprep.subr.bf16.mxu0 0
        %344 = vmatpush2.bf16.msra.mxu0 0
        %345 = vmatprep.mubr.bf16.mxu0 0
        %346 = vmatmul.mubr.bf16.gmra.mxu0 %v311
        %v347 = vpop.f32.mrf.mxu0
        %v348 = vadd.f32 %v295, %v347
        %v349 = vpop.f32.mrf.mxu0
        %v350 = vpop.f32.mrf.mxu0
        %v351 = vpop.f32.mrf.mxu0
        %352 = vdwg.mxu0
        %vm353 = vcmask 74752
        %354 = vst.msk [vmem:[%s239] sm:$0x3] %vm353, %v348
        %s355 = sand.u32 %s147, 1
        %s356 = scalar_lea.sflag [#allocation3], %s355
        %s357 = sand.u32 %s147, 1
        %s358 = smul.addr %s357, 2
        %s359 = scalar_lea.vmem [#allocation2], %s358
        // Predicated region
        $region41: #{lora_ensemble_forward.11} parent=39 // pred_check
          %p360 = pneg %p157
        $region42: #{lora_ensemble_forward.11} parent=39 // pred_check_branch
          %362 = sbr.rel (%p360) target = $region44
        $region43: #{lora_ensemble_forward.11} parent=39 // pred_region
          %s364 = ssub.s32 32, 32
          %365 = vsyncadd %s356, %s364
          %s366 = smul.addr %s19, 32
          %s367 = scalar_lea.hbm %s5, %s366
          %s369 = sshll.u32 %s359, 4
          %s370 = int_to_ptr.vmem [resolvable:$true] %s369
          %372 = dma.vmem_to_hbm [thread:$0]  %s370, 32, %s367, %s356
        $region44: #{lora_ensemble_forward.11} parent=39 // pred_fallthru
          _
      $region40: #{lora_ensemble_forward.11} parent=5 // pred_fallthru
        _
      %p373 = scmp.le.s32.totalorder 2, %s14
      // Predicated region
      $region45: #{lora_ensemble_forward.11} parent=5 // pred_check
        %p374 = pneg %p373
      $region46: #{lora_ensemble_forward.11} parent=5 // pred_check_branch
        %376 = sbr.rel (%p374) target = $region48
      $region47: #{lora_ensemble_forward.11} parent=5 // pred_region
        %s377 = ssub.s32 %s14, 2
        // Predicated region
        $region49: #{lora_ensemble_forward.11} parent=47 // pred_check
          %p378 = pneg %p163
        $region50: #{lora_ensemble_forward.11} parent=47 // pred_check_branch
          %380 = sbr.rel (%p378) target = $region52
        $region51: #{lora_ensemble_forward.11} parent=47 // pred_region
          %s381 = sand.u32 %s148, 1
          %s382 = scalar_lea.sflag [#allocation3], %s381
          %s383 = sand.u32 %s148, 1
          %s384 = smul.addr %s383, 2
          %s385 = scalar_lea.vmem [#allocation2], %s384
          %386 = dma.done %s382, 32
        $region52: #{lora_ensemble_forward.11} parent=47 // pred_fallthru
          _
      $region48: #{lora_ensemble_forward.11} parent=5 // pred_fallthru
        _
    $region6: #{lora_ensemble_forward.11} parent=1 // loop_footer
      %s18 = sadd.s32 1, %s14
    $region7: #{lora_ensemble_forward.11} parent=1 // loop_footer_branch
      %13 = sbr.rel target = $region3
    $region8: #{lora_ensemble_forward.11} parent=1 // loop_exit
      _
    %387 = vsyncpa [#allocation3], 1
    %s388 = scalar_lea.sflag [#allocation3], 1
    %389 = vsyncpa %s388, 1

</llo_original>
